<compile_context>
chip_gen: v7x
topology: tpu7x:2x2x1
jax: 0.10.0
libtpu: 0.0.40
codegen_flags: <defaults>
</compile_context>

<pallas_src>
import functools

import jax
import jax.numpy as jnp
from jax import lax
from jax.experimental import pallas as pl
from jax.experimental.pallas import tpu as pltpu

EPS = 1e-5     # PyTorch BatchNorm1d default eps
LANE = 128     # TPU lane width; feature dims padded to this


def _round_up(x, m):
    return ((x + m - 1) // m) * m


def _softplus(x):
    # PyTorch Softplus(beta=1, threshold=20)
    return jnp.where(x > 20.0, x, jnp.log1p(jnp.exp(jnp.minimum(x, 20.0))))


# ------------------------------- fused kernel ---------------------------------

def _cgcnn_kernel(idx_ref, e_ref, x_ref, wemb_ref, bemb_ref,
                  ws_ref, wd_ref, we_ref, bc_ref, sc_ref, sh_ref,
                  *rest, n_fc, f_pad, n_real, feat_real, fuse_vw):
    """Whole CGCNN forward.  grid = (conv_layer, edge_tile), both sequential.

      l==0 & i==0      : v = SiLU(x @ W_emb + b)                       (masked)
      i==0 (per layer) : acc = 0;  v->bf16  (or vWs/vWd = v@W precompute)
      every edge tile  : one-hot gather -> fused [mlp|screen] matmul -> u
                         -> one-hot scatter-add into acc (MXU)
      i==last          : v = softplus(node_bn(acc) + v)                (masked)
      l==last & i==last: masked mean-pool + FC chain (SiLU) + regre heads
    """
    n_wb = 2 * n_fc + 2
    wb = rest[:n_wb]                       # fc (w, b) pairs + packed regre (w, b)
    o_ref = rest[n_wb]
    scr = rest[n_wb + 1:]
    if fuse_vw:
        v_ref, acc_ref, vws_ref, vwd_ref = scr
    else:
        v_ref, acc_ref, vb_ref = scr

    l = pl.program_id(0)
    i = pl.program_id(1)
    last_layer = pl.num_programs(0) - 1
    last_tile = pl.num_programs(1) - 1

    n_pad = v_ref.shape[0]
    te = idx_ref.shape[1]

    def padding_mask():
        # Explicitly zero padded node rows / feature columns so no garbage
        # (softplus(0), SiLU(bias)) can leak through residuals or pooling.
        r = lax.broadcasted_iota(jnp.int32, (n_pad, 1), 0) < n_real
        c = lax.broadcasted_iota(jnp.int32, (1, f_pad), 1) < feat_real
        return (r & c).astype(jnp.float32)

    # ---- node embedding MLPLayer: Linear(+folded BN) + SiLU — runs once ----
    @pl.when((l == 0) & (i == 0))
    def _():
        y = jnp.dot(x_ref[...].astype(jnp.bfloat16), wemb_ref[...],
                    preferred_element_type=jnp.float32) + bemb_ref[...]
        v_ref[...] = (y * jax.nn.sigmoid(y)) * padding_mask()

    # ---- per-layer init (first edge tile of every conv layer) ----
    @pl.when(i == 0)
    def _():
        acc_ref[...] = jnp.zeros_like(acc_ref)
        vb = v_ref[...].astype(jnp.bfloat16)          # cast v once per layer
        if fuse_vw:
            # small-graph form (n_pad < 2*f_pad): transform first, gather second
            # -> 256-wide MXU outputs, fewer flops per edge tile.
            vws_ref[...] = jnp.dot(vb, ws_ref[0],
                                   preferred_element_type=jnp.float32)
            vwd_ref[...] = jnp.dot(vb, wd_ref[0],
                                   preferred_element_type=jnp.float32)
        else:
            vb_ref[...] = vb

    # ---- per edge tile ----
    idx = idx_ref[...]                                # (2, te): row0=src, row1=dst
    rows = lax.broadcasted_iota(jnp.int32, (n_pad, te), 0)
    src_oh = rows == idx[0:1, :]                      # (n_pad, te); padded edges
    dst_oh = rows == idx[1:2, :]                      #   (index -1) match nothing
    dn = (((0,), (0,)), ((), ()))                     # contract dim 0 of both

    if fuse_vw:
        y = lax.dot_general(src_oh.astype(jnp.float32), vws_ref[...], dn,
                            preferred_element_type=jnp.float32)
        y = y + lax.dot_general(dst_oh.astype(jnp.float32), vwd_ref[...], dn,
                                preferred_element_type=jnp.float32)
    else:
        vb = vb_ref[...]
        v_src = lax.dot_general(src_oh.astype(jnp.bfloat16), vb, dn,
                                preferred_element_type=jnp.float32
                                ).astype(jnp.bfloat16)
        v_dst = lax.dot_general(dst_oh.astype(jnp.bfloat16), vb, dn,
                                preferred_element_type=jnp.float32
                                ).astype(jnp.bfloat16)
        y = jnp.dot(v_src, ws_ref[0], preferred_element_type=jnp.float32)
        y = y + jnp.dot(v_dst, wd_ref[0], preferred_element_type=jnp.float32)

    y = y + jnp.dot(e_ref[...].astype(jnp.bfloat16), we_ref[0],
                    preferred_element_type=jnp.float32)
    y = y + bc_ref[0]
    u = jax.nn.sigmoid(y[:, 0:f_pad]) * _softplus(y[:, f_pad:])     # (te, f_pad)

    # scatter-add edge messages into destination nodes (reuse dst one-hot)
    acc_ref[...] += jnp.dot(dst_oh.astype(jnp.bfloat16), u.astype(jnp.bfloat16),
                            preferred_element_type=jnp.float32)

    # ---- layer finalize: node_bn (affine) + residual + softplus ----
    @pl.when(i == last_tile)
    def _():
        s = acc_ref[...] * sc_ref[0] + sh_ref[0]
        v_ref[...] = _softplus(s + v_ref[...]) * padding_mask()

    # ---- graph tail: mean-pool + FC chain (SiLU) + packed regre heads ----
    @pl.when((l == last_layer) & (i == last_tile))
    def _():
        x = jnp.sum(v_ref[...], axis=0, keepdims=True) * (1.0 / n_real)
        for j in range(n_fc):
            w, b = wb[2 * j], wb[2 * j + 1]
            yy = jnp.dot(x.astype(jnp.bfloat16), w[...],
                         preferred_element_type=jnp.float32) + b[...]
            x = yy * jax.nn.sigmoid(yy)
        wr, br = wb[2 * n_fc], wb[2 * n_fc + 1]
        o_ref[...] = jnp.dot(x.astype(jnp.bfloat16), wr[...],
                             preferred_element_type=jnp.float32) + br[...]


# ------------------------------- JAX wrapper ----------------------------------

def _select_tiles(n_pad, n_edges, f_pad, e_pad, xk_pad, fuse_vw):
    """Edge-tile size + vmem_limit_bytes derived from the chip's VMEM capacity
    (v5e/v6e: 128 MiB, v7x: 64 MiB per TensorCore)."""
    try:
        cap = int(pltpu.get_tpu_info().vmem_capacity_bytes)
    except Exception:
        cap = 64 << 20                       # conservative default (v7x physical)
    budget = cap // 2                        # headroom: double buffers, scratch

    fixed = 2 * n_pad * f_pad * 4            # v + acc scratch (f32)
    if fuse_vw:
        fixed += 2 * n_pad * 2 * f_pad * 4   # vWs / vWd scratch (f32)
    else:
        fixed += n_pad * f_pad * 2           # bf16 copy of v
    fixed += n_pad * max(xk_pad, LANE) * 4   # resident x input (lane-padded)
    fixed += 4 << 20                         # weights, biases, misc slack

    def per_tile(t):
        one_hot = 2 * n_pad * t * (4 if fuse_vw else 2)
        y_u = 3 * t * 2 * f_pad * 4
        e_blk = 2 * t * max(e_pad, LANE) * 4
        idx_blk = 2 * 8 * t * 4
        return one_hot + y_u + e_blk + idx_blk

    te = LANE
    te_cap = min(max(_round_up(max(n_edges, 1), LANE), LANE), 2048)
    while te * 2 <= te_cap and fixed + per_tile(te * 2) <= budget:
        te *= 2

    vmem_limit = int(min(cap - (2 << 20), max(fixed + per_tile(te), 32 << 20)))
    return te, vmem_limit


def cgcnn_forward(node_feats, edge_feats, src, dst, params, single_buffer=True):
    n, node_feat = node_feats.shape
    m, edge_feat = edge_feats.shape
    f_pad, e_pad, xk_pad = params['f_pad'], params['e_pad'], params['xk_pad']
    embed_feat = params['embed_feat']
    n_layers = params['conv_ws'].shape[0]
    n_fc = len(params['fcs'])

    n_pad = _round_up(max(n, 8), 8)
    fuse_vw = n_pad < 2 * f_pad              # small-graph form (see kernel)
    te, vmem_limit = _select_tiles(n_pad, m, f_pad, e_pad, xk_pad, fuse_vw)
    m_pad = _round_up(max(m, 1), te)

    x = jnp.zeros((n_pad, xk_pad), jnp.float32).at[:n, :node_feat].set(node_feats)
    e = jnp.zeros((m_pad, e_pad), jnp.float32).at[:m, :edge_feat].set(edge_feats)
    idx = jnp.full((2, m_pad), -1, jnp.int32)             # -1: padded edge, drops
    idx = idx.at[0, :m].set(src.astype(jnp.int32))
    idx = idx.at[1, :m].set(dst.astype(jnp.int32))

    def inv(shape):
        # grid-invariant input -> single-buffered to reclaim VMEM
        nz = len(shape)
        if single_buffer:
            return pl.BlockSpec(shape, lambda l, i: (0,) * nz,
                                pipeline_mode=pl.Buffered(1))
        return pl.BlockSpec(shape, lambda l, i: (0,) * nz)

    wemb, bemb = params['embed']
    in_specs = [
        pl.BlockSpec((2, te), lambda l, i: (0, i)),             # src/dst indices
        pl.BlockSpec((te, e_pad), lambda l, i: (i, 0)),         # edge features
        inv((n_pad, xk_pad)),                                   # node features
        inv(wemb.shape), inv(bemb.shape),                       # embedding
        pl.BlockSpec((1, f_pad, 2 * f_pad), lambda l, i: (l, 0, 0)),  # W_src
        pl.BlockSpec((1, f_pad, 2 * f_pad), lambda l, i: (l, 0, 0)),  # W_dst
        pl.BlockSpec((1, e_pad, 2 * f_pad), lambda l, i: (l, 0, 0)),  # W_edge
        pl.BlockSpec((1, 1, 2 * f_pad), lambda l, i: (l, 0, 0)),      # bias
        pl.BlockSpec((1, 1, f_pad), lambda l, i: (l, 0, 0)),          # node_bn scale
        pl.BlockSpec((1, 1, f_pad), lambda l, i: (l, 0, 0)),          # node_bn shift
    ]
    args = [idx, e, x, wemb, bemb,
            params['conv_ws'], params['conv_wd'], params['conv_we'],
            params['conv_b'], params['bn_scale'], params['bn_shift']]
    for w, b in params['fcs']:
        in_specs += [inv(w.shape), inv(b.shape)]
        args += [w, b]
    wr, br = params['regre']
    in_specs += [inv(wr.shape), inv(br.shape)]
    args += [wr, br]

    if fuse_vw:
        scratch = [pltpu.VMEM((n_pad, f_pad), jnp.float32),       # v
                   pltpu.VMEM((n_pad, f_pad), jnp.float32),       # acc
                   pltpu.VMEM((n_pad, 2 * f_pad), jnp.float32),   # v @ W_src
                   pltpu.VMEM((n_pad, 2 * f_pad), jnp.float32)]   # v @ W_dst
    else:
        scratch = [pltpu.VMEM((n_pad, f_pad), jnp.float32),       # v
                   pltpu.VMEM((n_pad, f_pad), jnp.float32),       # acc
                   pltpu.VMEM((n_pad, f_pad), jnp.bfloat16)]      # v (bf16 copy)

    out_pad = br.shape[1]
    kernel = functools.partial(_cgcnn_kernel, n_fc=n_fc, f_pad=f_pad,
                               n_real=n, feat_real=embed_feat, fuse_vw=fuse_vw)

    out = pl.pallas_call(
        kernel,
        out_shape=jax.ShapeDtypeStruct((1, out_pad), jnp.float32),
        grid_spec=pltpu.PrefetchScalarGridSpec(
            num_scalar_prefetch=0,
            grid=(n_layers, m_pad // te),
            in_specs=in_specs,
            out_specs=pl.BlockSpec((1, out_pad), lambda l, i: (0, 0)),
            scratch_shapes=scratch),
        compiler_params=pltpu.CompilerParams(
            dimension_semantics=("arbitrary", "arbitrary"),
            vmem_limit_bytes=vmem_limit),
    )(*args)
    return out[:, :params['out_dim']]


# ------------------------------ parameter prep --------------------------------

def _init_linear(key, n_in, n_out):
    k1, k2 = jax.random.split(key)
    bound = 1.0 / (n_in ** 0.5)
    w = jax.random.uniform(k1, (n_in, n_out), jnp.float32, -bound, bound)
    b = jax.random.uniform(k2, (n_out,), jnp.float32, -bound, bound)
    return w, b


def _fold_fresh_bn(w, b):
    # eval-mode BatchNorm1d with fresh stats -> pure scale 1/sqrt(1+eps)
    s = 1.0 / jnp.sqrt(jnp.float32(1.0 + EPS))
    return w * s, b * s


def _pad2(a, rows, cols):
    return jnp.zeros((rows, cols), a.dtype).at[:a.shape[0], :a.shape[1]].set(a)


def init_cgcnn_params(key, node_feat, edge_feat, embed_feat, conv_number,
                      fc_lens, regre_dim):
    f_pad = _round_up(embed_feat, LANE)
    e_pad = _round_up(edge_feat, 8)
    xk_pad = _round_up(node_feat, 8)
    keys = iter(jax.random.split(
        key, 4 + 2 * conv_number + len(fc_lens) + len(regre_dim)))

    params = {'f_pad': f_pad, 'e_pad': e_pad, 'xk_pad': xk_pad,
              'embed_feat': embed_feat}

    # node embedding (BN folded, lane-padded)
    w, b = _fold_fresh_bn(*_init_linear(next(keys), node_feat, embed_feat))
    params['embed'] = (_pad2(w, xk_pad, f_pad).astype(jnp.bfloat16),
                       _pad2(b[None, :], 1, f_pad))

    # conv layers: fused [W_mlp | W_screen] split into (src, dst, edge) blocks,
    # stacked along a leading layer axis (one pallas input per role).
    k_in = 2 * embed_feat + edge_feat
    Ws = jnp.zeros((conv_number, f_pad, 2 * f_pad), jnp.float32)
    Wd = jnp.zeros((conv_number, f_pad, 2 * f_pad), jnp.float32)
    We = jnp.zeros((conv_number, e_pad, 2 * f_pad), jnp.float32)
    Bc = jnp.zeros((conv_number, 1, 2 * f_pad), jnp.float32)
    sc = jnp.zeros((conv_number, 1, f_pad), jnp.float32)
    bn_s = 1.0 / jnp.sqrt(jnp.float32(1.0 + EPS))
    for li in range(conv_number):
        for half in range(2):                 # 0 = 'mlp' (sigmoid), 1 = 'screen'
            wx, bx = _fold_fresh_bn(*_init_linear(next(keys), k_in, embed_feat))
            c0 = half * f_pad
            Ws = Ws.at[li, :embed_feat, c0:c0 + embed_feat].set(wx[:embed_feat])
            Wd = Wd.at[li, :embed_feat, c0:c0 + embed_feat].set(
                wx[embed_feat:2 * embed_feat])
            We = We.at[li, :edge_feat, c0:c0 + embed_feat].set(wx[2 * embed_feat:])
            Bc = Bc.at[li, 0, c0:c0 + embed_feat].set(bx)
        sc = sc.at[li, 0, :embed_feat].set(bn_s)       # standalone node_bn
    params['conv_ws'] = Ws.astype(jnp.bfloat16)
    params['conv_wd'] = Wd.astype(jnp.bfloat16)
    params['conv_we'] = We.astype(jnp.bfloat16)
    params['conv_b'] = Bc
    params['bn_scale'] = sc
    params['bn_shift'] = jnp.zeros((conv_number, 1, f_pad), jnp.float32)

    # FC tail (BN folded), lane-padded
    dims = [embed_feat] + list(fc_lens)
    fcs = []
    for i in range(len(dims) - 1):
        w, b = _fold_fresh_bn(*_init_linear(next(keys), dims[i], dims[i + 1]))
        fcs.append((_pad2(w, _round_up(dims[i], LANE),
                          _round_up(dims[i + 1], LANE)).astype(jnp.bfloat16),
                    _pad2(b[None, :], 1, _round_up(dims[i + 1], LANE))))
    params['fcs'] = fcs

    # regre heads (plain nn.Linear), packed column-wise into one matmul
    total = sum(regre_dim)
    in_p = _round_up(dims[-1], LANE)
    out_p = _round_up(max(total, 1), LANE)
    Wr = jnp.zeros((in_p, out_p), jnp.float32)
    Br = jnp.zeros((1, out_p), jnp.float32)
    off = 0
    for d in regre_dim:
        w, b = _init_linear(next(keys), dims[-1], d)
        Wr = Wr.at[:dims[-1], off:off + d].set(w)
        Br = Br.at[0, off:off + d].set(b)
        off += d
    params['regre'] = (Wr.astype(jnp.bfloat16), Br)
    params['out_dim'] = total
    return params


# ---------------------------- pure-JAX reference -------------------------------

def reference_forward(node_feats, edge_feats, src, dst, params):
    """Module semantics in plain JAX with the same bf16-matmul / f32-accumulate
    numerics contract as the kernel."""
    f_pad, e_pad = params['f_pad'], params['e_pad']
    feat = params['embed_feat']
    n, node_feat = node_feats.shape
    m, edge_feat = edge_feats.shape

    def dot(a, w):
        return jnp.dot(a.astype(jnp.bfloat16), w,
                       preferred_element_type=jnp.float32)

    cmask = (jnp.arange(f_pad) < feat).astype(jnp.float32)[None, :]

    wemb, bemb = params['embed']
    y = dot(node_feats, wemb[:node_feat]) + bemb
    v = (y * jax.nn.sigmoid(y)) * cmask

    e = jnp.zeros((m, e_pad), jnp.float32).at[:, :edge_feat].set(edge_feats)
    src = src.astype(jnp.int32)
    dst = dst.astype(jnp.int32)
    for li in range(params['conv_ws'].shape[0]):
        y = (dot(v[src], params['conv_ws'][li])
             + dot(v[dst], params['conv_wd'][li])
             + dot(e, params['conv_we'][li]) + params['conv_b'][li])
        u = jax.nn.sigmoid(y[:, :f_pad]) * _softplus(y[:, f_pad:])
        u = u.astype(jnp.bfloat16).astype(jnp.float32)
        s = jax.ops.segment_sum(u, dst, num_segments=n)
        v = _softplus(s * params['bn_scale'][li]
                      + params['bn_shift'][li] + v) * cmask

    vc = jnp.mean(v, axis=0, keepdims=True)
    for w, b in params['fcs']:
        y = dot(vc, w) + b
        vc = y * jax.nn.sigmoid(y)
    wr, br = params['regre']
    out = dot(vc, wr) + br
    return out[:, :params['out_dim']]


# ----------------------------------- main --------------------------------------

if __name__ == "__main__":
    key = jax.random.PRNGKey(0)
    k_v, k_e, k_src, k_dst, k_params = jax.random.split(key, 5)

    # small synthetic crystal graph
    N_NODES, N_EDGES = 16, 32
    NODE_FEAT, EDGE_FEAT, EMBED_FEAT = 8, 6, 32
    CONV_NUMBER = 2
    FC_LENS = [32, 16]
    REGRE_DIM = [1]

    node_feats = jax.random.normal(k_v, (N_NODES, NODE_FEAT), jnp.float32)
    edge_feats = jax.random.normal(k_e, (N_EDGES, EDGE_FEAT), jnp.float32)
    src = jax.random.randint(k_src, (N_EDGES,), 0, N_NODES)
    dst = jax.random.randint(k_dst, (N_EDGES,), 0, N_NODES)

    params = init_cgcnn_params(k_params, NODE_FEAT, EDGE_FEAT, EMBED_FEAT,
                               CONV_NUMBER, FC_LENS, REGRE_DIM)

    try:
        fwd = jax.jit(functools.partial(cgcnn_forward, params=params,
                                        single_buffer=True))
        out = jax.block_until_ready(fwd(node_feats, edge_feats, src, dst))
    except Exception:
        # Fallback if this build rejects pl.Buffered(1) single-buffering.
        fwd = jax.jit(functools.partial(cgcnn_forward, params=params,
                                        single_buffer=False))
        out = jax.block_until_ready(fwd(node_feats, edge_feats, src, dst))

    ref = jax.block_until_ready(
        reference_forward(node_feats, edge_feats, src, dst, params))

    assert out.shape == (1, sum(REGRE_DIM)), out.shape
    assert bool(jnp.all(jnp.isfinite(out)))
    assert bool(jnp.allclose(out, ref, rtol=3e-2, atol=3e-2)), (out, ref)
    print("KERNEL_OK")
</pallas_src>

<mosaic_0001>
module attributes {stable_mosaic.version = 11 : i64} {
  func.func @_cgcnn_kernel(%arg0: i32, %arg1: i32, %arg2: memref<2x128xi32, #tpu.memory_space<vmem>>, %arg3: memref<128x8xf32, #tpu.memory_space<vmem>>, %arg4: memref<16x8xf32, #tpu.memory_space<vmem>>, %arg5: memref<8x128xbf16, #tpu.memory_space<vmem>>, %arg6: memref<1x128xf32, #tpu.memory_space<vmem>>, %arg7: memref<1x128x256xbf16, #tpu.memory_space<vmem>>, %arg8: memref<1x128x256xbf16, #tpu.memory_space<vmem>>, %arg9: memref<1x8x256xbf16, #tpu.memory_space<vmem>>, %arg10: memref<1x1x256xf32, #tpu.memory_space<vmem>>, %arg11: memref<1x1x128xf32, #tpu.memory_space<vmem>>, %arg12: memref<1x1x128xf32, #tpu.memory_space<vmem>>, %arg13: memref<128x128xbf16, #tpu.memory_space<vmem>>, %arg14: memref<1x128xf32, #tpu.memory_space<vmem>>, %arg15: memref<128x128xbf16, #tpu.memory_space<vmem>>, %arg16: memref<1x128xf32, #tpu.memory_space<vmem>>, %arg17: memref<128x128xbf16, #tpu.memory_space<vmem>>, %arg18: memref<1x128xf32, #tpu.memory_space<vmem>>, %arg19: memref<1x128xf32, #tpu.memory_space<vmem>>, %arg20: memref<16x128xf32, #tpu.memory_space<vmem>>, %arg21: memref<16x128xf32, #tpu.memory_space<vmem>>, %arg22: memref<16x256xf32, #tpu.memory_space<vmem>>, %arg23: memref<16x256xf32, #tpu.memory_space<vmem>>) attributes {dimension_semantics = [#tpu.dimension_semantics<arbitrary>, #tpu.dimension_semantics<arbitrary>], iteration_bounds = array<i64: 2, 1>, scalar_prefetch = 0 : i64, scratch_operands = 4 : i64, tpu.core_type = #tpu.core_type<tc>, window_params = [{transform_indices = @transform_0, window_bounds = array<i64: 2, 128>}, {transform_indices = @transform_1, window_bounds = array<i64: 128, 8>}, {pipeline_mode = #tpu.pipeline_mode<synchronous>, transform_indices = @transform_2, window_bounds = array<i64: 16, 8>}, {pipeline_mode = #tpu.pipeline_mode<synchronous>, transform_indices = @transform_3, window_bounds = array<i64: 8, 128>}, {pipeline_mode = #tpu.pipeline_mode<synchronous>, transform_indices = @transform_4, window_bounds = array<i64: 1, 128>}, {transform_indices = @transform_5, window_bounds = array<i64: 1, 128, 256>}, {transform_indices = @transform_6, window_bounds = array<i64: 1, 128, 256>}, {transform_indices = @transform_7, window_bounds = array<i64: 1, 8, 256>}, {transform_indices = @transform_8, window_bounds = array<i64: 1, 1, 256>}, {transform_indices = @transform_9, window_bounds = array<i64: 1, 1, 128>}, {transform_indices = @transform_10, window_bounds = array<i64: 1, 1, 128>}, {pipeline_mode = #tpu.pipeline_mode<synchronous>, transform_indices = @transform_11, window_bounds = array<i64: 128, 128>}, {pipeline_mode = #tpu.pipeline_mode<synchronous>, transform_indices = @transform_12, window_bounds = array<i64: 1, 128>}, {pipeline_mode = #tpu.pipeline_mode<synchronous>, transform_indices = @transform_13, window_bounds = array<i64: 128, 128>}, {pipeline_mode = #tpu.pipeline_mode<synchronous>, transform_indices = @transform_14, window_bounds = array<i64: 1, 128>}, {pipeline_mode = #tpu.pipeline_mode<synchronous>, transform_indices = @transform_15, window_bounds = array<i64: 128, 128>}, {pipeline_mode = #tpu.pipeline_mode<synchronous>, transform_indices = @transform_16, window_bounds = array<i64: 1, 128>}, {pipeline_mode = #tpu.pipeline_mode<synchronous>, transform_indices = @transform_17, window_bounds = array<i64: 1, 128>}]} {
    %c0_i32 = arith.constant 0 : i32
    %0 = arith.cmpi eq, %arg0, %c0_i32 : i32
    %c0_i32_0 = arith.constant 0 : i32
    %1 = arith.cmpi eq, %arg1, %c0_i32_0 : i32
    %2 = arith.andi %0, %1 : i1
    %3 = arith.extui %2 : i1 to i32
    %c0_i32_1 = arith.constant 0 : i32
    %4 = arith.cmpi ne, %3, %c0_i32_1 : i32
    scf.if %4 {
      %c0_31 = arith.constant 0 : index
      %c0_32 = arith.constant 0 : index
      %66 = vector.load %arg4[%c0_31, %c0_32] : memref<16x8xf32, #tpu.memory_space<vmem>>, vector<16x8xf32>
      %67 = arith.truncf %66 : vector<16x8xf32> to vector<16x8xbf16>
      %c0_33 = arith.constant 0 : index
      %c0_34 = arith.constant 0 : index
      %68 = vector.load %arg5[%c0_33, %c0_34] : memref<8x128xbf16, #tpu.memory_space<vmem>>, vector<8x128xbf16>
      %cst_35 = arith.constant dense<0.000000e+00> : vector<16x128xf32>
      %69 = tpu.matmul %67, %68, %cst_35 {dimension_numbers = #tpu.dot_dimension_numbers<[1], [0], [0], [1], [0, 0, 1, 1], [], []>} : vector<16x8xbf16>, vector<8x128xbf16>, vector<16x128xf32> -> vector<16x128xf32>
      %c0_36 = arith.constant 0 : index
      %c0_37 = arith.constant 0 : index
      %70 = vector.load %arg6[%c0_36, %c0_37] : memref<1x128xf32, #tpu.memory_space<vmem>>, vector<1x128xf32>
      %71 = vector.broadcast %70 : vector<1x128xf32> to vector<16x128xf32>
      %72 = arith.addf %69, %71 : vector<16x128xf32>
      %73 = arith.negf %72 : vector<16x128xf32>
      %74 = math.exp %73 : vector<16x128xf32>
      %cst_38 = arith.constant 1.000000e+00 : f32
      %75 = vector.broadcast %cst_38 : f32 to vector<16x128xf32>
      %76 = arith.addf %75, %74 : vector<16x128xf32>
      %77 = arith.divf %75, %76 : vector<16x128xf32>
      %78 = arith.mulf %72, %77 : vector<16x128xf32>
      %79 = tpu.iota {dimensions = array<i32: 0>} : vector<16x1xi32>
      %c16_i32 = arith.constant 16 : i32
      %80 = vector.broadcast %c16_i32 : i32 to vector<16x1xi32>
      %81 = arith.cmpi slt, %79, %80 : vector<16x1xi32>
      %82 = tpu.iota {dimensions = array<i32: 1>} : vector<1x128xi32>
      %c32_i32 = arith.constant 32 : i32
      %83 = vector.broadcast %c32_i32 : i32 to vector<1x128xi32>
      %84 = arith.cmpi slt, %82, %83 : vector<1x128xi32>
      %85 = vector.broadcast %81 : vector<16x1xi1> to vector<16x128xi1>
      %86 = vector.broadcast %84 : vector<1x128xi1> to vector<16x128xi1>
      %87 = arith.andi %85, %86 : vector<16x128xi1>
      %88 = arith.extui %87 : vector<16x128xi1> to vector<16x128xi32>
      %89 = arith.sitofp %88 : vector<16x128xi32> to vector<16x128xf32>
      %90 = arith.mulf %78, %89 : vector<16x128xf32>
      %c0_39 = arith.constant 0 : index
      %c0_40 = arith.constant 0 : index
      %91 = vector.load %arg20[%c0_39, %c0_40] : memref<16x128xf32, #tpu.memory_space<vmem>>, vector<16x128xf32>
      tpu.vector_store %arg20[%c0_39, %c0_40], %90 {strides = array<i32>} : memref<16x128xf32, #tpu.memory_space<vmem>>, vector<16x128xf32>,
    } else {
    }
    %c0_i32_2 = arith.constant 0 : i32
    %5 = arith.cmpi eq, %arg1, %c0_i32_2 : i32
    %6 = arith.extui %5 : i1 to i32
    %c0_i32_3 = arith.constant 0 : i32
    %7 = arith.cmpi ne, %6, %c0_i32_3 : i32
    scf.if %7 {
      %cst_31 = arith.constant 0.000000e+00 : f32
      %66 = vector.broadcast %cst_31 : f32 to vector<16x128xf32>
      %c0_32 = arith.constant 0 : index
      %c0_33 = arith.constant 0 : index
      %67 = vector.load %arg21[%c0_32, %c0_33] : memref<16x128xf32, #tpu.memory_space<vmem>>, vector<16x128xf32>
      tpu.vector_store %arg21[%c0_32, %c0_33], %66 {strides = array<i32>} : memref<16x128xf32, #tpu.memory_space<vmem>>, vector<16x128xf32>,
      %c0_34 = arith.constant 0 : index
      %c0_35 = arith.constant 0 : index
      %68 = vector.load %arg20[%c0_34, %c0_35] : memref<16x128xf32, #tpu.memory_space<vmem>>, vector<16x128xf32>
      %69 = arith.truncf %68 : vector<16x128xf32> to vector<16x128xbf16>
      %c0_36 = arith.constant 0 : index
      %c0_37 = arith.constant 0 : index
      %c0_38 = arith.constant 0 : index
      %70 = vector.load %arg7[%c0_36, %c0_37, %c0_38] : memref<1x128x256xbf16, #tpu.memory_space<vmem>>, vector<1x128x256xbf16>
      %71 = vector.shape_cast %70 : vector<1x128x256xbf16> to vector<128x256xbf16>
      %cst_39 = arith.constant dense<0.000000e+00> : vector<16x256xf32>
      %72 = tpu.matmul %69, %71, %cst_39 {dimension_numbers = #tpu.dot_dimension_numbers<[1], [0], [0], [1], [0, 0, 1, 1], [], []>} : vector<16x128xbf16>, vector<128x256xbf16>, vector<16x256xf32> -> vector<16x256xf32>
      %c0_40 = arith.constant 0 : index
      %c0_41 = arith.constant 0 : index
      %73 = vector.load %arg22[%c0_40, %c0_41] : memref<16x256xf32, #tpu.memory_space<vmem>>, vector<16x256xf32>
      tpu.vector_store %arg22[%c0_40, %c0_41], %72 {strides = array<i32>} : memref<16x256xf32, #tpu.memory_space<vmem>>, vector<16x256xf32>,
      %c0_42 = arith.constant 0 : index
      %c0_43 = arith.constant 0 : index
      %c0_44 = arith.constant 0 : index
      %74 = vector.load %arg8[%c0_42, %c0_43, %c0_44] : memref<1x128x256xbf16, #tpu.memory_space<vmem>>, vector<1x128x256xbf16>
      %75 = vector.shape_cast %74 : vector<1x128x256xbf16> to vector<128x256xbf16>
      %cst_45 = arith.constant dense<0.000000e+00> : vector<16x256xf32>
      %76 = tpu.matmul %69, %75, %cst_45 {dimension_numbers = #tpu.dot_dimension_numbers<[1], [0], [0], [1], [0, 0, 1, 1], [], []>} : vector<16x128xbf16>, vector<128x256xbf16>, vector<16x256xf32> -> vector<16x256xf32>
      %c0_46 = arith.constant 0 : index
      %c0_47 = arith.constant 0 : index
      %77 = vector.load %arg23[%c0_46, %c0_47] : memref<16x256xf32, #tpu.memory_space<vmem>>, vector<16x256xf32>
      tpu.vector_store %arg23[%c0_46, %c0_47], %76 {strides = array<i32>} : memref<16x256xf32, #tpu.memory_space<vmem>>, vector<16x256xf32>,
    } else {
    }
    %c0 = arith.constant 0 : index
    %c0_4 = arith.constant 0 : index
    %8 = vector.load %arg2[%c0, %c0_4] : memref<2x128xi32, #tpu.memory_space<vmem>>, vector<2x128xi32>
    %9 = tpu.iota {dimensions = array<i32: 0>} : vector<16x128xi32>
    %10 = vector.extract_strided_slice %8 {offsets = [0, 0], sizes = [1, 128], strides = [1, 1]} : vector<2x128xi32> to vector<1x128xi32>
    %11 = vector.broadcast %10 : vector<1x128xi32> to vector<16x128xi32>
    %12 = arith.cmpi eq, %9, %11 : vector<16x128xi32>
    %13 = vector.extract_strided_slice %8 {offsets = [1, 0], sizes = [1, 128], strides = [1, 1]} : vector<2x128xi32> to vector<1x128xi32>
    %14 = vector.broadcast %13 : vector<1x128xi32> to vector<16x128xi32>
    %15 = arith.cmpi eq, %9, %14 : vector<16x128xi32>
    %16 = arith.extui %12 : vector<16x128xi1> to vector<16x128xi32>
    %17 = arith.sitofp %16 : vector<16x128xi32> to vector<16x128xf32>
    %c0_5 = arith.constant 0 : index
    %c0_6 = arith.constant 0 : index
    %18 = vector.load %arg22[%c0_5, %c0_6] : memref<16x256xf32, #tpu.memory_space<vmem>>, vector<16x256xf32>
    %cst = arith.constant dense<0.000000e+00> : vector<128x256xf32>
    %19 = tpu.matmul %17, %18, %cst {dimension_numbers = #tpu.dot_dimension_numbers<[0], [0], [1], [1], [0, 1, 1, 1], [], []>} : vector<16x128xf32>, vector<16x256xf32>, vector<128x256xf32> -> vector<128x256xf32>
    %20 = arith.extui %15 : vector<16x128xi1> to vector<16x128xi32>
    %21 = arith.sitofp %20 : vector<16x128xi32> to vector<16x128xf32>
    %c0_7 = arith.constant 0 : index
    %c0_8 = arith.constant 0 : index
    %22 = vector.load %arg23[%c0_7, %c0_8] : memref<16x256xf32, #tpu.memory_space<vmem>>, vector<16x256xf32>
    %cst_9 = arith.constant dense<0.000000e+00> : vector<128x256xf32>
    %23 = tpu.matmul %21, %22, %cst_9 {dimension_numbers = #tpu.dot_dimension_numbers<[0], [0], [1], [1], [0, 1, 1, 1], [], []>} : vector<16x128xf32>, vector<16x256xf32>, vector<128x256xf32> -> vector<128x256xf32>
    %24 = arith.addf %19, %23 : vector<128x256xf32>
    %c0_10 = arith.constant 0 : index
    %c0_11 = arith.constant 0 : index
    %25 = vector.load %arg3[%c0_10, %c0_11] : memref<128x8xf32, #tpu.memory_space<vmem>>, vector<128x8xf32>
    %26 = arith.truncf %25 : vector<128x8xf32> to vector<128x8xbf16>
    %c0_12 = arith.constant 0 : index
    %c0_13 = arith.constant 0 : index
    %c0_14 = arith.constant 0 : index
    %27 = vector.load %arg9[%c0_12, %c0_13, %c0_14] : memref<1x8x256xbf16, #tpu.memory_space<vmem>>, vector<1x8x256xbf16>
    %28 = vector.shape_cast %27 : vector<1x8x256xbf16> to vector<8x256xbf16>
    %cst_15 = arith.constant dense<0.000000e+00> : vector<128x256xf32>
    %29 = tpu.matmul %26, %28, %cst_15 {dimension_numbers = #tpu.dot_dimension_numbers<[1], [0], [0], [1], [0, 0, 1, 1], [], []>} : vector<128x8xbf16>, vector<8x256xbf16>, vector<128x256xf32> -> vector<128x256xf32>
    %30 = arith.addf %24, %29 : vector<128x256xf32>
    %c0_16 = arith.constant 0 : index
    %c0_17 = arith.constant 0 : index
    %c0_18 = arith.constant 0 : index
    %31 = vector.load %arg10[%c0_16, %c0_17, %c0_18] : memref<1x1x256xf32, #tpu.memory_space<vmem>>, vector<1x1x256xf32>
    %32 = vector.shape_cast %31 : vector<1x1x256xf32> to vector<1x256xf32>
    %33 = vector.broadcast %32 : vector<1x256xf32> to vector<128x256xf32>
    %34 = arith.addf %30, %33 : vector<128x256xf32>
    %35 = vector.extract_strided_slice %34 {offsets = [0, 0], sizes = [128, 128], strides = [1, 1]} : vector<128x256xf32> to vector<128x128xf32>
    %36 = arith.negf %35 : vector<128x128xf32>
    %37 = math.exp %36 : vector<128x128xf32>
    %cst_19 = arith.constant 1.000000e+00 : f32
    %38 = vector.broadcast %cst_19 : f32 to vector<128x128xf32>
    %39 = arith.addf %38, %37 : vector<128x128xf32>
    %40 = arith.divf %38, %39 : vector<128x128xf32>
    %41 = vector.extract_strided_slice %34 {offsets = [0, 128], sizes = [128, 128], strides = [1, 1]} : vector<128x256xf32> to vector<128x128xf32>
    %cst_20 = arith.constant 2.000000e+01 : f32
    %42 = vector.broadcast %cst_20 : f32 to vector<128x128xf32>
    %43 = arith.cmpf ogt, %41, %42 : vector<128x128xf32>
    %cst_21 = arith.constant 2.000000e+01 : f32
    %44 = vector.broadcast %cst_21 : f32 to vector<128x128xf32>
    %45 = arith.minimumf %41, %44 : vector<128x128xf32>
    %46 = math.exp %45 : vector<128x128xf32>
    %47 = math.log1p %46 : vector<128x128xf32>
    %48 = arith.select %43, %41, %47 : vector<128x128xi1>, vector<128x128xf32>
    %49 = arith.mulf %40, %48 : vector<128x128xf32>
    %c0_22 = arith.constant 0 : index
    %c0_23 = arith.constant 0 : index
    %50 = vector.load %arg21[%c0_22, %c0_23] : memref<16x128xf32, #tpu.memory_space<vmem>>, vector<16x128xf32>
    %51 = arith.extui %15 : vector<16x128xi1> to vector<16x128xi32>
    %52 = arith.sitofp %51 : vector<16x128xi32> to vector<16x128xf32>
    %53 = arith.truncf %52 : vector<16x128xf32> to vector<16x128xbf16>
    %54 = arith.truncf %49 : vector<128x128xf32> to vector<128x128xbf16>
    %cst_24 = arith.constant dense<0.000000e+00> : vector<16x128xf32>
    %55 = tpu.matmul %53, %54, %cst_24 {dimension_numbers = #tpu.dot_dimension_numbers<[1], [0], [0], [1], [0, 0, 1, 1], [], []>} : vector<16x128xbf16>, vector<128x128xbf16>, vector<16x128xf32> -> vector<16x128xf32>
    %56 = arith.addf %50, %55 : vector<16x128xf32>
    %c0_25 = arith.constant 0 : index
    %c0_26 = arith.constant 0 : index
    %57 = vector.load %arg21[%c0_25, %c0_26] : memref<16x128xf32, #tpu.memory_space<vmem>>, vector<16x128xf32>
    tpu.vector_store %arg21[%c0_25, %c0_26], %56 {strides = array<i32>} : memref<16x128xf32, #tpu.memory_space<vmem>>, vector<16x128xf32>,
    %c0_i32_27 = arith.constant 0 : i32
    %58 = arith.cmpi eq, %arg1, %c0_i32_27 : i32
    %59 = arith.extui %58 : i1 to i32
    %c0_i32_28 = arith.constant 0 : i32
    %60 = arith.cmpi ne, %59, %c0_i32_28 : i32
    scf.if %60 {
      %c0_31 = arith.constant 0 : index
      %c0_32 = arith.constant 0 : index
      %66 = vector.load %arg21[%c0_31, %c0_32] : memref<16x128xf32, #tpu.memory_space<vmem>>, vector<16x128xf32>
      %c0_33 = arith.constant 0 : index
      %c0_34 = arith.constant 0 : index
      %c0_35 = arith.constant 0 : index
      %67 = vector.load %arg11[%c0_33, %c0_34, %c0_35] : memref<1x1x128xf32, #tpu.memory_space<vmem>>, vector<1x1x128xf32>
      %68 = vector.shape_cast %67 : vector<1x1x128xf32> to vector<1x128xf32>
      %69 = vector.broadcast %68 : vector<1x128xf32> to vector<16x128xf32>
      %70 = arith.mulf %66, %69 : vector<16x128xf32>
      %c0_36 = arith.constant 0 : index
      %c0_37 = arith.constant 0 : index
      %c0_38 = arith.constant 0 : index
      %71 = vector.load %arg12[%c0_36, %c0_37, %c0_38] : memref<1x1x128xf32, #tpu.memory_space<vmem>>, vector<1x1x128xf32>
      %72 = vector.shape_cast %71 : vector<1x1x128xf32> to vector<1x128xf32>
      %73 = vector.broadcast %72 : vector<1x128xf32> to vector<16x128xf32>
      %74 = arith.addf %70, %73 : vector<16x128xf32>
      %c0_39 = arith.constant 0 : index
      %c0_40 = arith.constant 0 : index
      %75 = vector.load %arg20[%c0_39, %c0_40] : memref<16x128xf32, #tpu.memory_space<vmem>>, vector<16x128xf32>
      %76 = arith.addf %74, %75 : vector<16x128xf32>
      %cst_41 = arith.constant 2.000000e+01 : f32
      %77 = vector.broadcast %cst_41 : f32 to vector<16x128xf32>
      %78 = arith.cmpf ogt, %76, %77 : vector<16x128xf32>
      %cst_42 = arith.constant 2.000000e+01 : f32
      %79 = vector.broadcast %cst_42 : f32 to vector<16x128xf32>
      %80 = arith.minimumf %76, %79 : vector<16x128xf32>
      %81 = math.exp %80 : vector<16x128xf32>
      %82 = math.log1p %81 : vector<16x128xf32>
      %83 = arith.select %78, %76, %82 : vector<16x128xi1>, vector<16x128xf32>
      %84 = tpu.iota {dimensions = array<i32: 0>} : vector<16x1xi32>
      %c16_i32 = arith.constant 16 : i32
      %85 = vector.broadcast %c16_i32 : i32 to vector<16x1xi32>
      %86 = arith.cmpi slt, %84, %85 : vector<16x1xi32>
      %87 = tpu.iota {dimensions = array<i32: 1>} : vector<1x128xi32>
      %c32_i32 = arith.constant 32 : i32
      %88 = vector.broadcast %c32_i32 : i32 to vector<1x128xi32>
      %89 = arith.cmpi slt, %87, %88 : vector<1x128xi32>
      %90 = vector.broadcast %86 : vector<16x1xi1> to vector<16x128xi1>
      %91 = vector.broadcast %89 : vector<1x128xi1> to vector<16x128xi1>
      %92 = arith.andi %90, %91 : vector<16x128xi1>
      %93 = arith.extui %92 : vector<16x128xi1> to vector<16x128xi32>
      %94 = arith.sitofp %93 : vector<16x128xi32> to vector<16x128xf32>
      %95 = arith.mulf %83, %94 : vector<16x128xf32>
      %c0_43 = arith.constant 0 : index
      %c0_44 = arith.constant 0 : index
      %96 = vector.load %arg20[%c0_43, %c0_44] : memref<16x128xf32, #tpu.memory_space<vmem>>, vector<16x128xf32>
      tpu.vector_store %arg20[%c0_43, %c0_44], %95 {strides = array<i32>} : memref<16x128xf32, #tpu.memory_space<vmem>>, vector<16x128xf32>,
    } else {
    }
    %c1_i32 = arith.constant 1 : i32
    %61 = arith.cmpi eq, %arg0, %c1_i32 : i32
    %c0_i32_29 = arith.constant 0 : i32
    %62 = arith.cmpi eq, %arg1, %c0_i32_29 : i32
    %63 = arith.andi %61, %62 : i1
    %64 = arith.extui %63 : i1 to i32
    %c0_i32_30 = arith.constant 0 : i32
    %65 = arith.cmpi ne, %64, %c0_i32_30 : i32
    scf.if %65 {
      %c0_31 = arith.constant 0 : index
      %c0_32 = arith.constant 0 : index
      %66 = vector.load %arg20[%c0_31, %c0_32] : memref<16x128xf32, #tpu.memory_space<vmem>>, vector<16x128xf32>
      %cst_33 = arith.constant dense<0.000000e+00> : vector<128xf32>
      %67 = vector.multi_reduction <add>, %66, %cst_33 [0] : vector<16x128xf32> to vector<128xf32>
      %68 = vector.shape_cast %67 : vector<128xf32> to vector<1x128xf32>
      %cst_34 = arith.constant 6.250000e-02 : f32
      %69 = vector.broadcast %cst_34 : f32 to vector<1x128xf32>
      %70 = arith.mulf %68, %69 : vector<1x128xf32>
      %71 = arith.truncf %70 : vector<1x128xf32> to vector<1x128xbf16>
      %c0_35 = arith.constant 0 : index
      %c0_36 = arith.constant 0 : index
      %72 = vector.load %arg13[%c0_35, %c0_36] : memref<128x128xbf16, #tpu.memory_space<vmem>>, vector<128x128xbf16>
      %cst_37 = arith.constant dense<0.000000e+00> : vector<1x128xf32>
      %73 = tpu.matmul %71, %72, %cst_37 {dimension_numbers = #tpu.dot_dimension_numbers<[1], [0], [0], [1], [0, 0, 1, 1], [], []>} : vector<1x128xbf16>, vector<128x128xbf16>, vector<1x128xf32> -> vector<1x128xf32>
      %c0_38 = arith.constant 0 : index
      %c0_39 = arith.constant 0 : index
      %74 = vector.load %arg14[%c0_38, %c0_39] : memref<1x128xf32, #tpu.memory_space<vmem>>, vector<1x128xf32>
      %75 = arith.addf %73, %74 : vector<1x128xf32>
      %76 = arith.negf %75 : vector<1x128xf32>
      %77 = math.exp %76 : vector<1x128xf32>
      %cst_40 = arith.constant 1.000000e+00 : f32
      %78 = vector.broadcast %cst_40 : f32 to vector<1x128xf32>
      %79 = arith.addf %78, %77 : vector<1x128xf32>
      %80 = arith.divf %78, %79 : vector<1x128xf32>
      %81 = arith.mulf %75, %80 : vector<1x128xf32>
      %82 = arith.truncf %81 : vector<1x128xf32> to vector<1x128xbf16>
      %c0_41 = arith.constant 0 : index
      %c0_42 = arith.constant 0 : index
      %83 = vector.load %arg15[%c0_41, %c0_42] : memref<128x128xbf16, #tpu.memory_space<vmem>>, vector<128x128xbf16>
      %cst_43 = arith.constant dense<0.000000e+00> : vector<1x128xf32>
      %84 = tpu.matmul %82, %83, %cst_43 {dimension_numbers = #tpu.dot_dimension_numbers<[1], [0], [0], [1], [0, 0, 1, 1], [], []>} : vector<1x128xbf16>, vector<128x128xbf16>, vector<1x128xf32> -> vector<1x128xf32>
      %c0_44 = arith.constant 0 : index
      %c0_45 = arith.constant 0 : index
      %85 = vector.load %arg16[%c0_44, %c0_45] : memref<1x128xf32, #tpu.memory_space<vmem>>, vector<1x128xf32>
      %86 = arith.addf %84, %85 : vector<1x128xf32>
      %87 = arith.negf %86 : vector<1x128xf32>
      %88 = math.exp %87 : vector<1x128xf32>
      %cst_46 = arith.constant 1.000000e+00 : f32
      %89 = vector.broadcast %cst_46 : f32 to vector<1x128xf32>
      %90 = arith.addf %89, %88 : vector<1x128xf32>
      %91 = arith.divf %89, %90 : vector<1x128xf32>
      %92 = arith.mulf %86, %91 : vector<1x128xf32>
      %93 = arith.truncf %92 : vector<1x128xf32> to vector<1x128xbf16>
      %c0_47 = arith.constant 0 : index
      %c0_48 = arith.constant 0 : index
      %94 = vector.load %arg17[%c0_47, %c0_48] : memref<128x128xbf16, #tpu.memory_space<vmem>>, vector<128x128xbf16>
      %cst_49 = arith.constant dense<0.000000e+00> : vector<1x128xf32>
      %95 = tpu.matmul %93, %94, %cst_49 {dimension_numbers = #tpu.dot_dimension_numbers<[1], [0], [0], [1], [0, 0, 1, 1], [], []>} : vector<1x128xbf16>, vector<128x128xbf16>, vector<1x128xf32> -> vector<1x128xf32>
      %c0_50 = arith.constant 0 : index
      %c0_51 = arith.constant 0 : index
      %96 = vector.load %arg18[%c0_50, %c0_51] : memref<1x128xf32, #tpu.memory_space<vmem>>, vector<1x128xf32>
      %97 = arith.addf %95, %96 : vector<1x128xf32>
      %c0_52 = arith.constant 0 : index
      %c0_53 = arith.constant 0 : index
      %98 = vector.load %arg19[%c0_52, %c0_53] : memref<1x128xf32, #tpu.memory_space<vmem>>, vector<1x128xf32>
      tpu.vector_store %arg19[%c0_52, %c0_53], %97 {strides = array<i32>} : memref<1x128xf32, #tpu.memory_space<vmem>>, vector<1x128xf32>,
    } else {
    }
    return
  }
  func.func @transform_0(%arg0: i32, %arg1: i32) -> (i32, i32) {
    %c0_i32 = arith.constant 0 : i32
    %c0_i32_0 = arith.constant 0 : i32
    return %c0_i32, %arg1 : i32, i32
  }
  func.func @transform_1(%arg0: i32, %arg1: i32) -> (i32, i32) {
    %c0_i32 = arith.constant 0 : i32
    %c0_i32_0 = arith.constant 0 : i32
    return %arg1, %c0_i32 : i32, i32
  }
  func.func @transform_2(%arg0: i32, %arg1: i32) -> (i32, i32) {
    %c0_i32 = arith.constant 0 : i32
    %c0_i32_0 = arith.constant 0 : i32
    %c0_i32_1 = arith.constant 0 : i32
    return %c0_i32, %c0_i32_0 : i32, i32
  }
  func.func @transform_3(%arg0: i32, %arg1: i32) -> (i32, i32) {
    %c0_i32 = arith.constant 0 : i32
    %c0_i32_0 = arith.constant 0 : i32
    %c0_i32_1 = arith.constant 0 : i32
    return %c0_i32, %c0_i32_0 : i32, i32
  }
  func.func @transform_4(%arg0: i32, %arg1: i32) -> (i32, i32) {
    %c0_i32 = arith.constant 0 : i32
    %c0_i32_0 = arith.constant 0 : i32
    %c0_i32_1 = arith.constant 0 : i32
    return %c0_i32, %c0_i32_0 : i32, i32
  }
  func.func @transform_5(%arg0: i32, %arg1: i32) -> (i32, i32, i32) {
    %c0_i32 = arith.constant 0 : i32
    %c0_i32_0 = arith.constant 0 : i32
    %c0_i32_1 = arith.constant 0 : i32
    return %arg0, %c0_i32, %c0_i32_0 : i32, i32, i32
  }
  func.func @transform_6(%arg0: i32, %arg1: i32) -> (i32, i32, i32) {
    %c0_i32 = arith.constant 0 : i32
    %c0_i32_0 = arith.constant 0 : i32
    %c0_i32_1 = arith.constant 0 : i32
    return %arg0, %c0_i32, %c0_i32_0 : i32, i32, i32
  }
  func.func @transform_7(%arg0: i32, %arg1: i32) -> (i32, i32, i32) {
    %c0_i32 = arith.constant 0 : i32
    %c0_i32_0 = arith.constant 0 : i32
    %c0_i32_1 = arith.constant 0 : i32
    return %arg0, %c0_i32, %c0_i32_0 : i32, i32, i32
  }
  func.func @transform_8(%arg0: i32, %arg1: i32) -> (i32, i32, i32) {
    %c0_i32 = arith.constant 0 : i32
    %c0_i32_0 = arith.constant 0 : i32
    %c0_i32_1 = arith.constant 0 : i32
    return %arg0, %c0_i32, %c0_i32_0 : i32, i32, i32
  }
  func.func @transform_9(%arg0: i32, %arg1: i32) -> (i32, i32, i32) {
    %c0_i32 = arith.constant 0 : i32
    %c0_i32_0 = arith.constant 0 : i32
    %c0_i32_1 = arith.constant 0 : i32
    return %arg0, %c0_i32, %c0_i32_0 : i32, i32, i32
  }
  func.func @transform_10(%arg0: i32, %arg1: i32) -> (i32, i32, i32) {
    %c0_i32 = arith.constant 0 : i32
    %c0_i32_0 = arith.constant 0 : i32
    %c0_i32_1 = arith.constant 0 : i32
    return %arg0, %c0_i32, %c0_i32_0 : i32, i32, i32
  }
  func.func @transform_11(%arg0: i32, %arg1: i32) -> (i32, i32) {
    %c0_i32 = arith.constant 0 : i32
    %c0_i32_0 = arith.constant 0 : i32
    %c0_i32_1 = arith.constant 0 : i32
    return %c0_i32, %c0_i32_0 : i32, i32
  }
  func.func @transform_12(%arg0: i32, %arg1: i32) -> (i32, i32) {
    %c0_i32 = arith.constant 0 : i32
    %c0_i32_0 = arith.constant 0 : i32
    %c0_i32_1 = arith.constant 0 : i32
    return %c0_i32, %c0_i32_0 : i32, i32
  }
  func.func @transform_13(%arg0: i32, %arg1: i32) -> (i32, i32) {
    %c0_i32 = arith.constant 0 : i32
    %c0_i32_0 = arith.constant 0 : i32
    %c0_i32_1 = arith.constant 0 : i32
    return %c0_i32, %c0_i32_0 : i32, i32
  }
  func.func @transform_14(%arg0: i32, %arg1: i32) -> (i32, i32) {
    %c0_i32 = arith.constant 0 : i32
    %c0_i32_0 = arith.constant 0 : i32
    %c0_i32_1 = arith.constant 0 : i32
    return %c0_i32, %c0_i32_0 : i32, i32
  }
  func.func @transform_15(%arg0: i32, %arg1: i32) -> (i32, i32) {
    %c0_i32 = arith.constant 0 : i32
    %c0_i32_0 = arith.constant 0 : i32
    %c0_i32_1 = arith.constant 0 : i32
    return %c0_i32, %c0_i32_0 : i32, i32
  }
  func.func @transform_16(%arg0: i32, %arg1: i32) -> (i32, i32) {
    %c0_i32 = arith.constant 0 : i32
    %c0_i32_0 = arith.constant 0 : i32
    %c0_i32_1 = arith.constant 0 : i32
    return %c0_i32, %c0_i32_0 : i32, i32
  }
  func.func @transform_17(%arg0: i32, %arg1: i32) -> (i32, i32) {
    %c0_i32 = arith.constant 0 : i32
    %c0_i32_0 = arith.constant 0 : i32
    %c0_i32_1 = arith.constant 0 : i32
    return %c0_i32, %c0_i32_0 : i32, i32
  }
}

module attributes {stable_mosaic.version = 11 : i64} {
  func.func @_cgcnn_kernel(%arg0: i32, %arg1: i32, %arg2: memref<2x128xi32, #tpu.memory_space<vmem>>, %arg3: memref<128x8xf32, #tpu.memory_space<vmem>>, %arg4: memref<16x8xf32, #tpu.memory_space<vmem>>, %arg5: memref<8x128xbf16, #tpu.memory_space<vmem>>, %arg6: memref<1x128xf32, #tpu.memory_space<vmem>>, %arg7: memref<1x128x256xbf16, #tpu.memory_space<vmem>>, %arg8: memref<1x128x256xbf16, #tpu.memory_space<vmem>>, %arg9: memref<1x8x256xbf16, #tpu.memory_space<vmem>>, %arg10: memref<1x1x256xf32, #tpu.memory_space<vmem>>, %arg11: memref<1x1x128xf32, #tpu.memory_space<vmem>>, %arg12: memref<1x1x128xf32, #tpu.memory_space<vmem>>, %arg13: memref<128x128xbf16, #tpu.memory_space<vmem>>, %arg14: memref<1x128xf32, #tpu.memory_space<vmem>>, %arg15: memref<128x128xbf16, #tpu.memory_space<vmem>>, %arg16: memref<1x128xf32, #tpu.memory_space<vmem>>, %arg17: memref<128x128xbf16, #tpu.memory_space<vmem>>, %arg18: memref<1x128xf32, #tpu.memory_space<vmem>>, %arg19: memref<1x128xf32, #tpu.memory_space<vmem>>, %arg20: memref<16x128xf32, #tpu.memory_space<vmem>>, %arg21: memref<16x128xf32, #tpu.memory_space<vmem>>, %arg22: memref<16x256xf32, #tpu.memory_space<vmem>>, %arg23: memref<16x256xf32, #tpu.memory_space<vmem>>) attributes {dimension_semantics = [#tpu.dimension_semantics<arbitrary>, #tpu.dimension_semantics<arbitrary>], iteration_bounds = array<i64: 2, 1>, scalar_prefetch = 0 : i64, scratch_operands = 4 : i64, tpu.core_type = #tpu.core_type<tc>, window_params = [{transform_indices = @transform_0, window_bounds = array<i64: 2, 128>}, {transform_indices = @transform_1, window_bounds = array<i64: 128, 8>}, {pipeline_mode = #tpu.pipeline_mode<synchronous>, transform_indices = @transform_2, window_bounds = array<i64: 16, 8>}, {pipeline_mode = #tpu.pipeline_mode<synchronous>, transform_indices = @transform_3, window_bounds = array<i64: 8, 128>}, {pipeline_mode = #tpu.pipeline_mode<synchronous>, transform_indices = @transform_4, window_bounds = array<i64: 1, 128>}, {transform_indices = @transform_5, window_bounds = array<i64: 1, 128, 256>}, {transform_indices = @transform_6, window_bounds = array<i64: 1, 128, 256>}, {transform_indices = @transform_7, window_bounds = array<i64: 1, 8, 256>}, {transform_indices = @transform_8, window_bounds = array<i64: 1, 1, 256>}, {transform_indices = @transform_9, window_bounds = array<i64: 1, 1, 128>}, {transform_indices = @transform_10, window_bounds = array<i64: 1, 1, 128>}, {pipeline_mode = #tpu.pipeline_mode<synchronous>, transform_indices = @transform_11, window_bounds = array<i64: 128, 128>}, {pipeline_mode = #tpu.pipeline_mode<synchronous>, transform_indices = @transform_12, window_bounds = array<i64: 1, 128>}, {pipeline_mode = #tpu.pipeline_mode<synchronous>, transform_indices = @transform_13, window_bounds = array<i64: 128, 128>}, {pipeline_mode = #tpu.pipeline_mode<synchronous>, transform_indices = @transform_14, window_bounds = array<i64: 1, 128>}, {pipeline_mode = #tpu.pipeline_mode<synchronous>, transform_indices = @transform_15, window_bounds = array<i64: 128, 128>}, {pipeline_mode = #tpu.pipeline_mode<synchronous>, transform_indices = @transform_16, window_bounds = array<i64: 1, 128>}, {pipeline_mode = #tpu.pipeline_mode<synchronous>, transform_indices = @transform_17, window_bounds = array<i64: 1, 128>}]} {
    %c0_i32 = arith.constant 0 : i32
    %0 = arith.cmpi eq, %arg0, %c0_i32 : i32
    %c0_i32_0 = arith.constant 0 : i32
    %1 = arith.cmpi eq, %arg1, %c0_i32_0 : i32
    %2 = arith.andi %0, %1 : i1
    %3 = arith.extui %2 : i1 to i32
    %c0_i32_1 = arith.constant 0 : i32
    %4 = arith.cmpi ne, %3, %c0_i32_1 : i32
    scf.if %4 {
      %c0_31 = arith.constant 0 : index
      %c0_32 = arith.constant 0 : index
      %66 = vector.load %arg4[%c0_31, %c0_32] : memref<16x8xf32, #tpu.memory_space<vmem>>, vector<16x8xf32>
      %67 = arith.truncf %66 : vector<16x8xf32> to vector<16x8xbf16>
      %c0_33 = arith.constant 0 : index
      %c0_34 = arith.constant 0 : index
      %68 = vector.load %arg5[%c0_33, %c0_34] : memref<8x128xbf16, #tpu.memory_space<vmem>>, vector<8x128xbf16>
      %cst_35 = arith.constant dense<0.000000e+00> : vector<16x128xf32>
      %69 = tpu.matmul %67, %68, %cst_35 {dimension_numbers = #tpu.dot_dimension_numbers<[1], [0], [0], [1], [0, 0, 1, 1], [], []>} : vector<16x8xbf16>, vector<8x128xbf16>, vector<16x128xf32> -> vector<16x128xf32>
      %c0_36 = arith.constant 0 : index
      %c0_37 = arith.constant 0 : index
      %70 = vector.load %arg6[%c0_36, %c0_37] : memref<1x128xf32, #tpu.memory_space<vmem>>, vector<1x128xf32>
      %71 = vector.broadcast %70 : vector<1x128xf32> to vector<16x128xf32>
      %72 = arith.addf %69, %71 : vector<16x128xf32>
      %73 = arith.negf %72 : vector<16x128xf32>
      %74 = math.exp %73 : vector<16x128xf32>
      %cst_38 = arith.constant 1.000000e+00 : f32
      %75 = vector.broadcast %cst_38 : f32 to vector<16x128xf32>
      %76 = arith.addf %75, %74 : vector<16x128xf32>
      %77 = arith.divf %75, %76 : vector<16x128xf32>
      %78 = arith.mulf %72, %77 : vector<16x128xf32>
      %79 = tpu.iota {dimensions = array<i32: 0>} : vector<16x1xi32>
      %c16_i32 = arith.constant 16 : i32
      %80 = vector.broadcast %c16_i32 : i32 to vector<16x1xi32>
      %81 = arith.cmpi slt, %79, %80 : vector<16x1xi32>
      %82 = tpu.iota {dimensions = array<i32: 1>} : vector<1x128xi32>
      %c32_i32 = arith.constant 32 : i32
      %83 = vector.broadcast %c32_i32 : i32 to vector<1x128xi32>
      %84 = arith.cmpi slt, %82, %83 : vector<1x128xi32>
      %85 = vector.broadcast %81 : vector<16x1xi1> to vector<16x128xi1>
      %86 = vector.broadcast %84 : vector<1x128xi1> to vector<16x128xi1>
      %87 = arith.andi %85, %86 : vector<16x128xi1>
      %88 = arith.extui %87 : vector<16x128xi1> to vector<16x128xi32>
      %89 = arith.sitofp %88 : vector<16x128xi32> to vector<16x128xf32>
      %90 = arith.mulf %78, %89 : vector<16x128xf32>
      %c0_39 = arith.constant 0 : index
      %c0_40 = arith.constant 0 : index
      %91 = vector.load %arg20[%c0_39, %c0_40] : memref<16x128xf32, #tpu.memory_space<vmem>>, vector<16x128xf32>
      tpu.vector_store %arg20[%c0_39, %c0_40], %90 {strides = array<i32>} : memref<16x128xf32, #tpu.memory_space<vmem>>, vector<16x128xf32>,
    } else {
    }
    %c0_i32_2 = arith.constant 0 : i32
    %5 = arith.cmpi eq, %arg1, %c0_i32_2 : i32
    %6 = arith.extui %5 : i1 to i32
    %c0_i32_3 = arith.constant 0 : i32
    %7 = arith.cmpi ne, %6, %c0_i32_3 : i32
    scf.if %7 {
      %cst_31 = arith.constant 0.000000e+00 : f32
      %66 = vector.broadcast %cst_31 : f32 to vector<16x128xf32>
      %c0_32 = arith.constant 0 : index
      %c0_33 = arith.constant 0 : index
      %67 = vector.load %arg21[%c0_32, %c0_33] : memref<16x128xf32, #tpu.memory_space<vmem>>, vector<16x128xf32>
      tpu.vector_store %arg21[%c0_32, %c0_33], %66 {strides = array<i32>} : memref<16x128xf32, #tpu.memory_space<vmem>>, vector<16x128xf32>,
      %c0_34 = arith.constant 0 : index
      %c0_35 = arith.constant 0 : index
      %68 = vector.load %arg20[%c0_34, %c0_35] : memref<16x128xf32, #tpu.memory_space<vmem>>, vector<16x128xf32>
      %69 = arith.truncf %68 : vector<16x128xf32> to vector<16x128xbf16>
      %c0_36 = arith.constant 0 : index
      %c0_37 = arith.constant 0 : index
      %c0_38 = arith.constant 0 : index
      %70 = vector.load %arg7[%c0_36, %c0_37, %c0_38] : memref<1x128x256xbf16, #tpu.memory_space<vmem>>, vector<1x128x256xbf16>
      %71 = vector.shape_cast %70 : vector<1x128x256xbf16> to vector<128x256xbf16>
      %cst_39 = arith.constant dense<0.000000e+00> : vector<16x256xf32>
      %72 = tpu.matmul %69, %71, %cst_39 {dimension_numbers = #tpu.dot_dimension_numbers<[1], [0], [0], [1], [0, 0, 1, 1], [], []>} : vector<16x128xbf16>, vector<128x256xbf16>, vector<16x256xf32> -> vector<16x256xf32>
      %c0_40 = arith.constant 0 : index
      %c0_41 = arith.constant 0 : index
      %73 = vector.load %arg22[%c0_40, %c0_41] : memref<16x256xf32, #tpu.memory_space<vmem>>, vector<16x256xf32>
      tpu.vector_store %arg22[%c0_40, %c0_41], %72 {strides = array<i32>} : memref<16x256xf32, #tpu.memory_space<vmem>>, vector<16x256xf32>,
      %c0_42 = arith.constant 0 : index
      %c0_43 = arith.constant 0 : index
      %c0_44 = arith.constant 0 : index
      %74 = vector.load %arg8[%c0_42, %c0_43, %c0_44] : memref<1x128x256xbf16, #tpu.memory_space<vmem>>, vector<1x128x256xbf16>
      %75 = vector.shape_cast %74 : vector<1x128x256xbf16> to vector<128x256xbf16>
      %cst_45 = arith.constant dense<0.000000e+00> : vector<16x256xf32>
      %76 = tpu.matmul %69, %75, %cst_45 {dimension_numbers = #tpu.dot_dimension_numbers<[1], [0], [0], [1], [0, 0, 1, 1], [], []>} : vector<16x128xbf16>, vector<128x256xbf16>, vector<16x256xf32> -> vector<16x256xf32>
      %c0_46 = arith.constant 0 : index
      %c0_47 = arith.constant 0 : index
      %77 = vector.load %arg23[%c0_46, %c0_47] : memref<16x256xf32, #tpu.memory_space<vmem>>, vector<16x256xf32>
      tpu.vector_store %arg23[%c0_46, %c0_47], %76 {strides = array<i32>} : memref<16x256xf32, #tpu.memory_space<vmem>>, vector<16x256xf32>,
    } else {
    }
    %c0 = arith.constant 0 : index
    %c0_4 = arith.constant 0 : index
    %8 = vector.load %arg2[%c0, %c0_4] : memref<2x128xi32, #tpu.memory_space<vmem>>, vector<2x128xi32>
    %9 = tpu.iota {dimensions = array<i32: 0>} : vector<16x128xi32>
    %10 = vector.extract_strided_slice %8 {offsets = [0, 0], sizes = [1, 128], strides = [1, 1]} : vector<2x128xi32> to vector<1x128xi32>
    %11 = vector.broadcast %10 : vector<1x128xi32> to vector<16x128xi32>
    %12 = arith.cmpi eq, %9, %11 : vector<16x128xi32>
    %13 = vector.extract_strided_slice %8 {offsets = [1, 0], sizes = [1, 128], strides = [1, 1]} : vector<2x128xi32> to vector<1x128xi32>
    %14 = vector.broadcast %13 : vector<1x128xi32> to vector<16x128xi32>
    %15 = arith.cmpi eq, %9, %14 : vector<16x128xi32>
    %16 = arith.extui %12 : vector<16x128xi1> to vector<16x128xi32>
    %17 = arith.sitofp %16 : vector<16x128xi32> to vector<16x128xf32>
    %c0_5 = arith.constant 0 : index
    %c0_6 = arith.constant 0 : index
    %18 = vector.load %arg22[%c0_5, %c0_6] : memref<16x256xf32, #tpu.memory_space<vmem>>, vector<16x256xf32>
    %cst = arith.constant dense<0.000000e+00> : vector<128x256xf32>
    %19 = tpu.matmul %17, %18, %cst {dimension_numbers = #tpu.dot_dimension_numbers<[0], [0], [1], [1], [0, 1, 1, 1], [], []>} : vector<16x128xf32>, vector<16x256xf32>, vector<128x256xf32> -> vector<128x256xf32>
    %20 = arith.extui %15 : vector<16x128xi1> to vector<16x128xi32>
    %21 = arith.sitofp %20 : vector<16x128xi32> to vector<16x128xf32>
    %c0_7 = arith.constant 0 : index
    %c0_8 = arith.constant 0 : index
    %22 = vector.load %arg23[%c0_7, %c0_8] : memref<16x256xf32, #tpu.memory_space<vmem>>, vector<16x256xf32>
    %cst_9 = arith.constant dense<0.000000e+00> : vector<128x256xf32>
    %23 = tpu.matmul %21, %22, %cst_9 {dimension_numbers = #tpu.dot_dimension_numbers<[0], [0], [1], [1], [0, 1, 1, 1], [], []>} : vector<16x128xf32>, vector<16x256xf32>, vector<128x256xf32> -> vector<128x256xf32>
    %24 = arith.addf %19, %23 : vector<128x256xf32>
    %c0_10 = arith.constant 0 : index
    %c0_11 = arith.constant 0 : index
    %25 = vector.load %arg3[%c0_10, %c0_11] : memref<128x8xf32, #tpu.memory_space<vmem>>, vector<128x8xf32>
    %26 = arith.truncf %25 : vector<128x8xf32> to vector<128x8xbf16>
    %c0_12 = arith.constant 0 : index
    %c0_13 = arith.constant 0 : index
    %c0_14 = arith.constant 0 : index
    %27 = vector.load %arg9[%c0_12, %c0_13, %c0_14] : memref<1x8x256xbf16, #tpu.memory_space<vmem>>, vector<1x8x256xbf16>
    %28 = vector.shape_cast %27 : vector<1x8x256xbf16> to vector<8x256xbf16>
    %cst_15 = arith.constant dense<0.000000e+00> : vector<128x256xf32>
    %29 = tpu.matmul %26, %28, %cst_15 {dimension_numbers = #tpu.dot_dimension_numbers<[1], [0], [0], [1], [0, 0, 1, 1], [], []>} : vector<128x8xbf16>, vector<8x256xbf16>, vector<128x256xf32> -> vector<128x256xf32>
    %30 = arith.addf %24, %29 : vector<128x256xf32>
    %c0_16 = arith.constant 0 : index
    %c0_17 = arith.constant 0 : index
    %c0_18 = arith.constant 0 : index
    %31 = vector.load %arg10[%c0_16, %c0_17, %c0_18] : memref<1x1x256xf32, #tpu.memory_space<vmem>>, vector<1x1x256xf32>
    %32 = vector.shape_cast %31 : vector<1x1x256xf32> to vector<1x256xf32>
    %33 = vector.broadcast %32 : vector<1x256xf32> to vector<128x256xf32>
    %34 = arith.addf %30, %33 : vector<128x256xf32>
    %35 = vector.extract_strided_slice %34 {offsets = [0, 0], sizes = [128, 128], strides = [1, 1]} : vector<128x256xf32> to vector<128x128xf32>
    %36 = arith.negf %35 : vector<128x128xf32>
    %37 = math.exp %36 : vector<128x128xf32>
    %cst_19 = arith.constant 1.000000e+00 : f32
    %38 = vector.broadcast %cst_19 : f32 to vector<128x128xf32>
    %39 = arith.addf %38, %37 : vector<128x128xf32>
    %40 = arith.divf %38, %39 : vector<128x128xf32>
    %41 = vector.extract_strided_slice %34 {offsets = [0, 128], sizes = [128, 128], strides = [1, 1]} : vector<128x256xf32> to vector<128x128xf32>
    %cst_20 = arith.constant 2.000000e+01 : f32
    %42 = vector.broadcast %cst_20 : f32 to vector<128x128xf32>
    %43 = arith.cmpf ogt, %41, %42 : vector<128x128xf32>
    %cst_21 = arith.constant 2.000000e+01 : f32
    %44 = vector.broadcast %cst_21 : f32 to vector<128x128xf32>
    %45 = arith.minimumf %41, %44 : vector<128x128xf32>
    %46 = math.exp %45 : vector<128x128xf32>
    %47 = math.log1p %46 : vector<128x128xf32>
    %48 = arith.select %43, %41, %47 : vector<128x128xi1>, vector<128x128xf32>
    %49 = arith.mulf %40, %48 : vector<128x128xf32>
    %c0_22 = arith.constant 0 : index
    %c0_23 = arith.constant 0 : index
    %50 = vector.load %arg21[%c0_22, %c0_23] : memref<16x128xf32, #tpu.memory_space<vmem>>, vector<16x128xf32>
    %51 = arith.extui %15 : vector<16x128xi1> to vector<16x128xi32>
    %52 = arith.sitofp %51 : vector<16x128xi32> to vector<16x128xf32>
    %53 = arith.truncf %52 : vector<16x128xf32> to vector<16x128xbf16>
    %54 = arith.truncf %49 : vector<128x128xf32> to vector<128x128xbf16>
    %cst_24 = arith.constant dense<0.000000e+00> : vector<16x128xf32>
    %55 = tpu.matmul %53, %54, %cst_24 {dimension_numbers = #tpu.dot_dimension_numbers<[1], [0], [0], [1], [0, 0, 1, 1], [], []>} : vector<16x128xbf16>, vector<128x128xbf16>, vector<16x128xf32> -> vector<16x128xf32>
    %56 = arith.addf %50, %55 : vector<16x128xf32>
    %c0_25 = arith.constant 0 : index
    %c0_26 = arith.constant 0 : index
    %57 = vector.load %arg21[%c0_25, %c0_26] : memref<16x128xf32, #tpu.memory_space<vmem>>, vector<16x128xf32>
    tpu.vector_store %arg21[%c0_25, %c0_26], %56 {strides = array<i32>} : memref<16x128xf32, #tpu.memory_space<vmem>>, vector<16x128xf32>,
    %c0_i32_27 = arith.constant 0 : i32
    %58 = arith.cmpi eq, %arg1, %c0_i32_27 : i32
    %59 = arith.extui %58 : i1 to i32
    %c0_i32_28 = arith.constant 0 : i32
    %60 = arith.cmpi ne, %59, %c0_i32_28 : i32
    scf.if %60 {
      %c0_31 = arith.constant 0 : index
      %c0_32 = arith.constant 0 : index
      %66 = vector.load %arg21[%c0_31, %c0_32] : memref<16x128xf32, #tpu.memory_space<vmem>>, vector<16x128xf32>
      %c0_33 = arith.constant 0 : index
      %c0_34 = arith.constant 0 : index
      %c0_35 = arith.constant 0 : index
      %67 = vector.load %arg11[%c0_33, %c0_34, %c0_35] : memref<1x1x128xf32, #tpu.memory_space<vmem>>, vector<1x1x128xf32>
      %68 = vector.shape_cast %67 : vector<1x1x128xf32> to vector<1x128xf32>
      %69 = vector.broadcast %68 : vector<1x128xf32> to vector<16x128xf32>
      %70 = arith.mulf %66, %69 : vector<16x128xf32>
      %c0_36 = arith.constant 0 : index
      %c0_37 = arith.constant 0 : index
      %c0_38 = arith.constant 0 : index
      %71 = vector.load %arg12[%c0_36, %c0_37, %c0_38] : memref<1x1x128xf32, #tpu.memory_space<vmem>>, vector<1x1x128xf32>
      %72 = vector.shape_cast %71 : vector<1x1x128xf32> to vector<1x128xf32>
      %73 = vector.broadcast %72 : vector<1x128xf32> to vector<16x128xf32>
      %74 = arith.addf %70, %73 : vector<16x128xf32>
      %c0_39 = arith.constant 0 : index
      %c0_40 = arith.constant 0 : index
      %75 = vector.load %arg20[%c0_39, %c0_40] : memref<16x128xf32, #tpu.memory_space<vmem>>, vector<16x128xf32>
      %76 = arith.addf %74, %75 : vector<16x128xf32>
      %cst_41 = arith.constant 2.000000e+01 : f32
      %77 = vector.broadcast %cst_41 : f32 to vector<16x128xf32>
      %78 = arith.cmpf ogt, %76, %77 : vector<16x128xf32>
      %cst_42 = arith.constant 2.000000e+01 : f32
      %79 = vector.broadcast %cst_42 : f32 to vector<16x128xf32>
      %80 = arith.minimumf %76, %79 : vector<16x128xf32>
      %81 = math.exp %80 : vector<16x128xf32>
      %82 = math.log1p %81 : vector<16x128xf32>
      %83 = arith.select %78, %76, %82 : vector<16x128xi1>, vector<16x128xf32>
      %84 = tpu.iota {dimensions = array<i32: 0>} : vector<16x1xi32>
      %c16_i32 = arith.constant 16 : i32
      %85 = vector.broadcast %c16_i32 : i32 to vector<16x1xi32>
      %86 = arith.cmpi slt, %84, %85 : vector<16x1xi32>
      %87 = tpu.iota {dimensions = array<i32: 1>} : vector<1x128xi32>
      %c32_i32 = arith.constant 32 : i32
      %88 = vector.broadcast %c32_i32 : i32 to vector<1x128xi32>
      %89 = arith.cmpi slt, %87, %88 : vector<1x128xi32>
      %90 = vector.broadcast %86 : vector<16x1xi1> to vector<16x128xi1>
      %91 = vector.broadcast %89 : vector<1x128xi1> to vector<16x128xi1>
      %92 = arith.andi %90, %91 : vector<16x128xi1>
      %93 = arith.extui %92 : vector<16x128xi1> to vector<16x128xi32>
      %94 = arith.sitofp %93 : vector<16x128xi32> to vector<16x128xf32>
      %95 = arith.mulf %83, %94 : vector<16x128xf32>
      %c0_43 = arith.constant 0 : index
      %c0_44 = arith.constant 0 : index
      %96 = vector.load %arg20[%c0_43, %c0_44] : memref<16x128xf32, #tpu.memory_space<vmem>>, vector<16x128xf32>
      tpu.vector_store %arg20[%c0_43, %c0_44], %95 {strides = array<i32>} : memref<16x128xf32, #tpu.memory_space<vmem>>, vector<16x128xf32>,
    } else {
    }
    %c1_i32 = arith.constant 1 : i32
    %61 = arith.cmpi eq, %arg0, %c1_i32 : i32
    %c0_i32_29 = arith.constant 0 : i32
    %62 = arith.cmpi eq, %arg1, %c0_i32_29 : i32
    %63 = arith.andi %61, %62 : i1
    %64 = arith.extui %63 : i1 to i32
    %c0_i32_30 = arith.constant 0 : i32
    %65 = arith.cmpi ne, %64, %c0_i32_30 : i32
    scf.if %65 {
      %c0_31 = arith.constant 0 : index
      %c0_32 = arith.constant 0 : index
      %66 = vector.load %arg20[%c0_31, %c0_32] : memref<16x128xf32, #tpu.memory_space<vmem>>, vector<16x128xf32>
      %cst_33 = arith.constant dense<0.000000e+00> : vector<128xf32>
      %67 = vector.multi_reduction <add>, %66, %cst_33 [0] : vector<16x128xf32> to vector<128xf32>
      %68 = vector.shape_cast %67 : vector<128xf32> to vector<1x128xf32>
      %cst_34 = arith.constant 6.250000e-02 : f32
      %69 = vector.broadcast %cst_34 : f32 to vector<1x128xf32>
      %70 = arith.mulf %68, %69 : vector<1x128xf32>
      %71 = arith.truncf %70 : vector<1x128xf32> to vector<1x128xbf16>
      %c0_35 = arith.constant 0 : index
      %c0_36 = arith.constant 0 : index
      %72 = vector.load %arg13[%c0_35, %c0_36] : memref<128x128xbf16, #tpu.memory_space<vmem>>, vector<128x128xbf16>
      %cst_37 = arith.constant dense<0.000000e+00> : vector<1x128xf32>
      %73 = tpu.matmul %71, %72, %cst_37 {dimension_numbers = #tpu.dot_dimension_numbers<[1], [0], [0], [1], [0, 0, 1, 1], [], []>} : vector<1x128xbf16>, vector<128x128xbf16>, vector<1x128xf32> -> vector<1x128xf32>
      %c0_38 = arith.constant 0 : index
      %c0_39 = arith.constant 0 : index
      %74 = vector.load %arg14[%c0_38, %c0_39] : memref<1x128xf32, #tpu.memory_space<vmem>>, vector<1x128xf32>
      %75 = arith.addf %73, %74 : vector<1x128xf32>
      %76 = arith.negf %75 : vector<1x128xf32>
      %77 = math.exp %76 : vector<1x128xf32>
      %cst_40 = arith.constant 1.000000e+00 : f32
      %78 = vector.broadcast %cst_40 : f32 to vector<1x128xf32>
      %79 = arith.addf %78, %77 : vector<1x128xf32>
      %80 = arith.divf %78, %79 : vector<1x128xf32>
      %81 = arith.mulf %75, %80 : vector<1x128xf32>
      %82 = arith.truncf %81 : vector<1x128xf32> to vector<1x128xbf16>
      %c0_41 = arith.constant 0 : index
      %c0_42 = arith.constant 0 : index
      %83 = vector.load %arg15[%c0_41, %c0_42] : memref<128x128xbf16, #tpu.memory_space<vmem>>, vector<128x128xbf16>
      %cst_43 = arith.constant dense<0.000000e+00> : vector<1x128xf32>
      %84 = tpu.matmul %82, %83, %cst_43 {dimension_numbers = #tpu.dot_dimension_numbers<[1], [0], [0], [1], [0, 0, 1, 1], [], []>} : vector<1x128xbf16>, vector<128x128xbf16>, vector<1x128xf32> -> vector<1x128xf32>
      %c0_44 = arith.constant 0 : index
      %c0_45 = arith.constant 0 : index
      %85 = vector.load %arg16[%c0_44, %c0_45] : memref<1x128xf32, #tpu.memory_space<vmem>>, vector<1x128xf32>
      %86 = arith.addf %84, %85 : vector<1x128xf32>
      %87 = arith.negf %86 : vector<1x128xf32>
      %88 = math.exp %87 : vector<1x128xf32>
      %cst_46 = arith.constant 1.000000e+00 : f32
      %89 = vector.broadcast %cst_46 : f32 to vector<1x128xf32>
      %90 = arith.addf %89, %88 : vector<1x128xf32>
      %91 = arith.divf %89, %90 : vector<1x128xf32>
      %92 = arith.mulf %86, %91 : vector<1x128xf32>
      %93 = arith.truncf %92 : vector<1x128xf32> to vector<1x128xbf16>
      %c0_47 = arith.constant 0 : index
      %c0_48 = arith.constant 0 : index
      %94 = vector.load %arg17[%c0_47, %c0_48] : memref<128x128xbf16, #tpu.memory_space<vmem>>, vector<128x128xbf16>
      %cst_49 = arith.constant dense<0.000000e+00> : vector<1x128xf32>
      %95 = tpu.matmul %93, %94, %cst_49 {dimension_numbers = #tpu.dot_dimension_numbers<[1], [0], [0], [1], [0, 0, 1, 1], [], []>} : vector<1x128xbf16>, vector<128x128xbf16>, vector<1x128xf32> -> vector<1x128xf32>
      %c0_50 = arith.constant 0 : index
      %c0_51 = arith.constant 0 : index
      %96 = vector.load %arg18[%c0_50, %c0_51] : memref<1x128xf32, #tpu.memory_space<vmem>>, vector<1x128xf32>
      %97 = arith.addf %95, %96 : vector<1x128xf32>
      %c0_52 = arith.constant 0 : index
      %c0_53 = arith.constant 0 : index
      %98 = vector.load %arg19[%c0_52, %c0_53] : memref<1x128xf32, #tpu.memory_space<vmem>>, vector<1x128xf32>
      tpu.vector_store %arg19[%c0_52, %c0_53], %97 {strides = array<i32>} : memref<1x128xf32, #tpu.memory_space<vmem>>, vector<1x128xf32>,
    } else {
    }
    return
  }
  func.func @transform_0(%arg0: i32, %arg1: i32) -> (i32, i32) {
    %c0_i32 = arith.constant 0 : i32
    %c0_i32_0 = arith.constant 0 : i32
    return %c0_i32, %arg1 : i32, i32
  }
  func.func @transform_1(%arg0: i32, %arg1: i32) -> (i32, i32) {
    %c0_i32 = arith.constant 0 : i32
    %c0_i32_0 = arith.constant 0 : i32
    return %arg1, %c0_i32 : i32, i32
  }
  func.func @transform_2(%arg0: i32, %arg1: i32) -> (i32, i32) {
    %c0_i32 = arith.constant 0 : i32
    %c0_i32_0 = arith.constant 0 : i32
    %c0_i32_1 = arith.constant 0 : i32
    return %c0_i32, %c0_i32_0 : i32, i32
  }
  func.func @transform_3(%arg0: i32, %arg1: i32) -> (i32, i32) {
    %c0_i32 = arith.constant 0 : i32
    %c0_i32_0 = arith.constant 0 : i32
    %c0_i32_1 = arith.constant 0 : i32
    return %c0_i32, %c0_i32_0 : i32, i32
  }
  func.func @transform_4(%arg0: i32, %arg1: i32) -> (i32, i32) {
    %c0_i32 = arith.constant 0 : i32
    %c0_i32_0 = arith.constant 0 : i32
    %c0_i32_1 = arith.constant 0 : i32
    return %c0_i32, %c0_i32_0 : i32, i32
  }
  func.func @transform_5(%arg0: i32, %arg1: i32) -> (i32, i32, i32) {
    %c0_i32 = arith.constant 0 : i32
    %c0_i32_0 = arith.constant 0 : i32
    %c0_i32_1 = arith.constant 0 : i32
    return %arg0, %c0_i32, %c0_i32_0 : i32, i32, i32
  }
  func.func @transform_6(%arg0: i32, %arg1: i32) -> (i32, i32, i32) {
    %c0_i32 = arith.constant 0 : i32
    %c0_i32_0 = arith.constant 0 : i32
    %c0_i32_1 = arith.constant 0 : i32
    return %arg0, %c0_i32, %c0_i32_0 : i32, i32, i32
  }
  func.func @transform_7(%arg0: i32, %arg1: i32) -> (i32, i32, i32) {
    %c0_i32 = arith.constant 0 : i32
    %c0_i32_0 = arith.constant 0 : i32
    %c0_i32_1 = arith.constant 0 : i32
    return %arg0, %c0_i32, %c0_i32_0 : i32, i32, i32
  }
  func.func @transform_8(%arg0: i32, %arg1: i32) -> (i32, i32, i32) {
    %c0_i32 = arith.constant 0 : i32
    %c0_i32_0 = arith.constant 0 : i32
    %c0_i32_1 = arith.constant 0 : i32
    return %arg0, %c0_i32, %c0_i32_0 : i32, i32, i32
  }
  func.func @transform_9(%arg0: i32, %arg1: i32) -> (i32, i32, i32) {
    %c0_i32 = arith.constant 0 : i32
    %c0_i32_0 = arith.constant 0 : i32
    %c0_i32_1 = arith.constant 0 : i32
    return %arg0, %c0_i32, %c0_i32_0 : i32, i32, i32
  }
  func.func @transform_10(%arg0: i32, %arg1: i32) -> (i32, i32, i32) {
    %c0_i32 = arith.constant 0 : i32
    %c0_i32_0 = arith.constant 0 : i32
    %c0_i32_1 = arith.constant 0 : i32
    return %arg0, %c0_i32, %c0_i32_0 : i32, i32, i32
  }
  func.func @transform_11(%arg0: i32, %arg1: i32) -> (i32, i32) {
    %c0_i32 = arith.constant 0 : i32
    %c0_i32_0 = arith.constant 0 : i32
    %c0_i32_1 = arith.constant 0 : i32
    return %c0_i32, %c0_i32_0 : i32, i32
  }
  func.func @transform_12(%arg0: i32, %arg1: i32) -> (i32, i32) {
    %c0_i32 = arith.constant 0 : i32
    %c0_i32_0 = arith.constant 0 : i32
    %c0_i32_1 = arith.constant 0 : i32
    return %c0_i32, %c0_i32_0 : i32, i32
  }
  func.func @transform_13(%arg0: i32, %arg1: i32) -> (i32, i32) {
    %c0_i32 = arith.constant 0 : i32
    %c0_i32_0 = arith.constant 0 : i32
    %c0_i32_1 = arith.constant 0 : i32
    return %c0_i32, %c0_i32_0 : i32, i32
  }
  func.func @transform_14(%arg0: i32, %arg1: i32) -> (i32, i32) {
    %c0_i32 = arith.constant 0 : i32
    %c0_i32_0 = arith.constant 0 : i32
    %c0_i32_1 = arith.constant 0 : i32
    return %c0_i32, %c0_i32_0 : i32, i32
  }
  func.func @transform_15(%arg0: i32, %arg1: i32) -> (i32, i32) {
    %c0_i32 = arith.constant 0 : i32
    %c0_i32_0 = arith.constant 0 : i32
    %c0_i32_1 = arith.constant 0 : i32
    return %c0_i32, %c0_i32_0 : i32, i32
  }
  func.func @transform_16(%arg0: i32, %arg1: i32) -> (i32, i32) {
    %c0_i32 = arith.constant 0 : i32
    %c0_i32_0 = arith.constant 0 : i32
    %c0_i32_1 = arith.constant 0 : i32
    return %c0_i32, %c0_i32_0 : i32, i32
  }
  func.func @transform_17(%arg0: i32, %arg1: i32) -> (i32, i32) {
    %c0_i32 = arith.constant 0 : i32
    %c0_i32_0 = arith.constant 0 : i32
    %c0_i32_1 = arith.constant 0 : i32
    return %c0_i32, %c0_i32_0 : i32, i32
  }
}

</mosaic_0001>

<llo_original>
// kernel: cgcnn_forward.1
$region0: #{cgcnn_forward.1}
  #allocation0 [shape = 'u32[]', space=smem, size = 0x4, offset = 0x4, fixed_abs, tag = 'smem constant byte address 0x4 - core index']
  #allocation1 [shape = 'u32[144,128]{1,0:T(1,128)}', space=vmem, size = 0x12000, scoped, tag = 'internal scratch']
  #allocation2 [shape = 'f32[16,128]{1,0:T(8,128)}', space=vmem, size = 0x2000, scoped, tag = 'scratch operand']
  #allocation3 [shape = 'f32[16,128]{1,0:T(8,128)}', space=vmem, size = 0x2000, scoped, tag = 'scratch operand']
  #allocation4 [shape = 'f32[16,256]{1,0:T(8,128)}', space=vmem, size = 0x4000, scoped, tag = 'scratch operand']
  #allocation5 [shape = 'f32[16,256]{1,0:T(8,128)}', space=vmem, size = 0x4000, scoped, tag = 'scratch operand']
  %s0 = inlined_call_operand.vmem [shape: s32[2,128], index: 0, kind: input, shape index: {}]
  %s1 = inlined_call_operand.vmem [shape: f32[128,8], index: 1, kind: input, shape index: {}]
  %s2 = inlined_call_operand.vmem [shape: f32[16,8], index: 2, kind: input, shape index: {}]
  %s3 = inlined_call_operand.vmem [shape: bf16[8,128], index: 3, kind: input, shape index: {}]
  %s4 = inlined_call_operand.vmem [shape: f32[1,128], index: 4, kind: input, shape index: {}]
  %s5 = inlined_call_operand.vmem [shape: bf16[2,128,256], index: 5, kind: input, shape index: {}]
  %s6 = inlined_call_operand.vmem [shape: bf16[2,128,256], index: 6, kind: input, shape index: {}]
  %s7 = inlined_call_operand.vmem [shape: bf16[2,8,256], index: 7, kind: input, shape index: {}]
  %s8 = inlined_call_operand.vmem [shape: f32[2,1,256], index: 8, kind: input, shape index: {}]
  %s9 = inlined_call_operand.vmem [shape: f32[2,1,128], index: 9, kind: input, shape index: {}]
  %s10 = inlined_call_operand.vmem [shape: f32[2,1,128], index: 10, kind: input, shape index: {}]
  %s11 = inlined_call_operand.vmem [shape: bf16[128,128], index: 11, kind: input, shape index: {}]
  %s12 = inlined_call_operand.vmem [shape: f32[1,128], index: 12, kind: input, shape index: {}]
  %s13 = inlined_call_operand.vmem [shape: bf16[128,128], index: 13, kind: input, shape index: {}]
  %s14 = inlined_call_operand.vmem [shape: f32[1,128], index: 14, kind: input, shape index: {}]
  %s15 = inlined_call_operand.vmem [shape: bf16[128,128], index: 15, kind: input, shape index: {}]
  %s16 = inlined_call_operand.vmem [shape: f32[1,128], index: 16, kind: input, shape index: {}]
  %s17 = inlined_call_operand.hbm [shape: f32[1,128], index: 17, kind: output, shape index: {}]
  %s18 = sld [smem:[#allocation0]]
  $region117: #{cgcnn_forward.1} parent=0
    _
  %s20 = ssub.s32 1, %s18
  %s21 = scalar_select 0, %s20, %s18
  $region1: #{cgcnn_forward.1} parent=0
    #allocation6 [shape = 'u8[512]{0}', space=vmem, size = 0x400, scoped, tag = 'output window, operand 0, single buffered']
    #allocation7 [shape = 's32[2]{0}', space=sflag, size = 0x8, scoped, tag = 'scoped memory for cgcnn_forward.1']
    %22 = vsyncpa [#allocation7], 0
    loop: start=0, step=1, limit=4
    $region2: #{cgcnn_forward.1} parent=1 // loop_pre_header
      _
    $region3: #{cgcnn_forward.1} parent=1 // loop_header
      %s24 = sphi 0, %s28
      %p25 = scmp.ge.s32.totalorder %s24, 4
      %s31 = sphi 0, %s43
      %s32 = sphi 0, %s39
      %s33 = sphi 0, %s31
      %s34 = sphi 0, %s32
      %s35 = sphi 0, %s33
      %s36 = sphi 0, %s34
      %s46 = sphi 0, %s48
      %s49 = sphi 0, %s46
      %s50 = sphi 0, %s49
      %s66 = sphi 0, %s50
      %s72 = sphi 0, %s74
      %s75 = sphi 0, %s72
      %s76 = sphi 0, %s75
      %s92 = sphi 0, %s76
      %s96 = sphi 0, %s96
      %s98 = sphi 0, %s96
      %s99 = sphi 0, %s98
      %s113 = sphi 0, %s99
      %s117 = sphi 0, %s117
      %s119 = sphi 0, %s117
      %s120 = sphi 0, %s119
      %s134 = sphi 0, %s120
      %s138 = sphi 0, %s138
      %s140 = sphi 0, %s138
      %s141 = sphi 0, %s140
      %s155 = sphi 0, %s141
      %s161 = sphi 0, %s163
      %s164 = sphi 0, %s161
      %s165 = sphi 0, %s164
      %s181 = sphi 0, %s165
      %s187 = sphi 0, %s189
      %s190 = sphi 0, %s187
      %s191 = sphi 0, %s190
      %s207 = sphi 0, %s191
      %s213 = sphi 0, %s215
      %s216 = sphi 0, %s213
      %s217 = sphi 0, %s216
      %s233 = sphi 0, %s217
      %s239 = sphi 0, %s241
      %s242 = sphi 0, %s239
      %s243 = sphi 0, %s242
      %s259 = sphi 0, %s243
      %s265 = sphi 0, %s267
      %s268 = sphi 0, %s265
      %s269 = sphi 0, %s268
      %s285 = sphi 0, %s269
      %s291 = sphi 0, %s293
      %s294 = sphi 0, %s291
      %s295 = sphi 0, %s294
      %s311 = sphi 0, %s295
      %s315 = sphi 0, %s315
      %s317 = sphi 0, %s315
      %s318 = sphi 0, %s317
      %s332 = sphi 0, %s318
      %s336 = sphi 0, %s336
      %s338 = sphi 0, %s336
      %s339 = sphi 0, %s338
      %s353 = sphi 0, %s339
      %s357 = sphi 0, %s357
      %s359 = sphi 0, %s357
      %s360 = sphi 0, %s359
      %s374 = sphi 0, %s360
      %s378 = sphi 0, %s378
      %s380 = sphi 0, %s378
      %s381 = sphi 0, %s380
      %s395 = sphi 0, %s381
      %s399 = sphi 0, %s399
      %s401 = sphi 0, %s399
      %s402 = sphi 0, %s401
      %s416 = sphi 0, %s402
      %s420 = sphi 0, %s420
      %s422 = sphi 0, %s420
      %s423 = sphi 0, %s422
      %s437 = sphi 0, %s423
      %s441 = sphi 0, %s441
      %s443 = sphi 0, %s441
      %s444 = sphi 0, %s443
      %s458 = sphi 0, %s444
    $region4: #{cgcnn_forward.1} parent=1 // loop_header_branch
      %27 = sbr.rel (%p25) target = $region8
    $region5: #{cgcnn_forward.1} parent=1 // loop_body
      %s29 = ssub.s32 %s24, 1
      %s30 = ssub.s32 %s24, 2
      %s37 = sadd.s32 1, %s32
      %p38 = scmp.ge.s32.totalorder %s37, 1
      %s39 = scalar_select %p38, 0, %s37
      %s40 = sadd.s32 1, %s31
      %s41 = scalar_select %p38, %s40, %s31
      %p42 = scmp.ge.s32.totalorder %s41, 2
      %s43 = scalar_select %p42, 0, %s41
      %s44 = ssub.s32 %s32, %s39
      %p45 = scmp.eq.s32.totalorder %s44, 0
      %s47 = sadd.s32 %s46, 1
      %s48 = scalar_select %p45, %s46, %s47
      %p51 = pneg %p45
      %p52 = scmp.eq.s32.totalorder %s24, 1
      %p53 = por %p51, %p52
      %p54 = scmp.ne.s32.totalorder %s46, %s49
      %p55 = scmp.eq.s32.totalorder %s24, 0
      %p56 = por %p54, %p55
      %p57 = scmp.ne.s32.totalorder %s46, %s49
      %p58 = scmp.eq.s32.totalorder %s29, 1
      %p59 = por %p57, %p58
      %p60 = scmp.ne.s32.totalorder %s49, %s50
      %p61 = scmp.eq.s32.totalorder %s29, 0
      %p62 = por %p60, %p61
      %p63 = scmp.ne.s32.totalorder %s49, %s50
      %p64 = scmp.eq.s32.totalorder %s30, 1
      %p65 = por %p63, %p64
      %p67 = scmp.ne.s32.totalorder %s50, %s66
      %p68 = scmp.eq.s32.totalorder %s30, 0
      %p69 = por %p67, %p68
      %s70 = ssub.s32 %s32, %s39
      %p71 = scmp.eq.s32.totalorder %s70, 0
      %s73 = sadd.s32 %s72, 1
      %s74 = scalar_select %p71, %s72, %s73
      %p77 = pneg %p71
      %p78 = scmp.eq.s32.totalorder %s24, 1
      %p79 = por %p77, %p78
      %p80 = scmp.ne.s32.totalorder %s72, %s75
      %p81 = scmp.eq.s32.totalorder %s24, 0
      %p82 = por %p80, %p81
      %p83 = scmp.ne.s32.totalorder %s72, %s75
      %p84 = scmp.eq.s32.totalorder %s29, 1
      %p85 = por %p83, %p84
      %p86 = scmp.ne.s32.totalorder %s75, %s76
      %p87 = scmp.eq.s32.totalorder %s29, 0
      %p88 = por %p86, %p87
      %p89 = scmp.ne.s32.totalorder %s75, %s76
      %p90 = scmp.eq.s32.totalorder %s30, 1
      %p91 = por %p89, %p90
      %p93 = scmp.ne.s32.totalorder %s76, %s92
      %p94 = scmp.eq.s32.totalorder %s30, 0
      %p95 = por %p93, %p94
      %s97 = sadd.s32 %s96, 1
      %p100 = scmp.eq.s32.totalorder %s24, 1
      %p101 = scmp.ne.s32.totalorder %s96, %s98
      %p102 = scmp.eq.s32.totalorder %s24, 0
      %p103 = por %p101, %p102
      %p104 = scmp.ne.s32.totalorder %s96, %s98
      %p105 = scmp.eq.s32.totalorder %s29, 1
      %p106 = por %p104, %p105
      %p107 = scmp.ne.s32.totalorder %s98, %s99
      %p108 = scmp.eq.s32.totalorder %s29, 0
      %p109 = por %p107, %p108
      %p110 = scmp.ne.s32.totalorder %s98, %s99
      %p111 = scmp.eq.s32.totalorder %s30, 1
      %p112 = por %p110, %p111
      %p114 = scmp.ne.s32.totalorder %s99, %s113
      %p115 = scmp.eq.s32.totalorder %s30, 0
      %p116 = por %p114, %p115
      %s118 = sadd.s32 %s117, 1
      %p121 = scmp.eq.s32.totalorder %s24, 1
      %p122 = scmp.ne.s32.totalorder %s117, %s119
      %p123 = scmp.eq.s32.totalorder %s24, 0
      %p124 = por %p122, %p123
      %p125 = scmp.ne.s32.totalorder %s117, %s119
      %p126 = scmp.eq.s32.totalorder %s29, 1
      %p127 = por %p125, %p126
      %p128 = scmp.ne.s32.totalorder %s119, %s120
      %p129 = scmp.eq.s32.totalorder %s29, 0
      %p130 = por %p128, %p129
      %p131 = scmp.ne.s32.totalorder %s119, %s120
      %p132 = scmp.eq.s32.totalorder %s30, 1
      %p133 = por %p131, %p132
      %p135 = scmp.ne.s32.totalorder %s120, %s134
      %p136 = scmp.eq.s32.totalorder %s30, 0
      %p137 = por %p135, %p136
      %s139 = sadd.s32 %s138, 1
      %p142 = scmp.eq.s32.totalorder %s24, 1
      %p143 = scmp.ne.s32.totalorder %s138, %s140
      %p144 = scmp.eq.s32.totalorder %s24, 0
      %p145 = por %p143, %p144
      %p146 = scmp.ne.s32.totalorder %s138, %s140
      %p147 = scmp.eq.s32.totalorder %s29, 1
      %p148 = por %p146, %p147
      %p149 = scmp.ne.s32.totalorder %s140, %s141
      %p150 = scmp.eq.s32.totalorder %s29, 0
      %p151 = por %p149, %p150
      %p152 = scmp.ne.s32.totalorder %s140, %s141
      %p153 = scmp.eq.s32.totalorder %s30, 1
      %p154 = por %p152, %p153
      %p156 = scmp.ne.s32.totalorder %s141, %s155
      %p157 = scmp.eq.s32.totalorder %s30, 0
      %p158 = por %p156, %p157
      %s159 = ssub.s32 %s31, %s43
      %p160 = scmp.eq.s32.totalorder %s159, 0
      %s162 = sadd.s32 %s161, 1
      %s163 = scalar_select %p160, %s161, %s162
      %p166 = pneg %p160
      %p167 = scmp.eq.s32.totalorder %s24, 1
      %p168 = por %p166, %p167
      %p169 = scmp.ne.s32.totalorder %s161, %s164
      %p170 = scmp.eq.s32.totalorder %s24, 0
      %p171 = por %p169, %p170
      %p172 = scmp.ne.s32.totalorder %s161, %s164
      %p173 = scmp.eq.s32.totalorder %s29, 1
      %p174 = por %p172, %p173
      %p175 = scmp.ne.s32.totalorder %s164, %s165
      %p176 = scmp.eq.s32.totalorder %s29, 0
      %p177 = por %p175, %p176
      %p178 = scmp.ne.s32.totalorder %s164, %s165
      %p179 = scmp.eq.s32.totalorder %s30, 1
      %p180 = por %p178, %p179
      %p182 = scmp.ne.s32.totalorder %s165, %s181
      %p183 = scmp.eq.s32.totalorder %s30, 0
      %p184 = por %p182, %p183
      %s185 = ssub.s32 %s31, %s43
      %p186 = scmp.eq.s32.totalorder %s185, 0
      %s188 = sadd.s32 %s187, 1
      %s189 = scalar_select %p186, %s187, %s188
      %p192 = pneg %p186
      %p193 = scmp.eq.s32.totalorder %s24, 1
      %p194 = por %p192, %p193
      %p195 = scmp.ne.s32.totalorder %s187, %s190
      %p196 = scmp.eq.s32.totalorder %s24, 0
      %p197 = por %p195, %p196
      %p198 = scmp.ne.s32.totalorder %s187, %s190
      %p199 = scmp.eq.s32.totalorder %s29, 1
      %p200 = por %p198, %p199
      %p201 = scmp.ne.s32.totalorder %s190, %s191
      %p202 = scmp.eq.s32.totalorder %s29, 0
      %p203 = por %p201, %p202
      %p204 = scmp.ne.s32.totalorder %s190, %s191
      %p205 = scmp.eq.s32.totalorder %s30, 1
      %p206 = por %p204, %p205
      %p208 = scmp.ne.s32.totalorder %s191, %s207
      %p209 = scmp.eq.s32.totalorder %s30, 0
      %p210 = por %p208, %p209
      %s211 = ssub.s32 %s31, %s43
      %p212 = scmp.eq.s32.totalorder %s211, 0
      %s214 = sadd.s32 %s213, 1
      %s215 = scalar_select %p212, %s213, %s214
      %p218 = pneg %p212
      %p219 = scmp.eq.s32.totalorder %s24, 1
      %p220 = por %p218, %p219
      %p221 = scmp.ne.s32.totalorder %s213, %s216
      %p222 = scmp.eq.s32.totalorder %s24, 0
      %p223 = por %p221, %p222
      %p224 = scmp.ne.s32.totalorder %s213, %s216
      %p225 = scmp.eq.s32.totalorder %s29, 1
      %p226 = por %p224, %p225
      %p227 = scmp.ne.s32.totalorder %s216, %s217
      %p228 = scmp.eq.s32.totalorder %s29, 0
      %p229 = por %p227, %p228
      %p230 = scmp.ne.s32.totalorder %s216, %s217
      %p231 = scmp.eq.s32.totalorder %s30, 1
      %p232 = por %p230, %p231
      %p234 = scmp.ne.s32.totalorder %s217, %s233
      %p235 = scmp.eq.s32.totalorder %s30, 0
      %p236 = por %p234, %p235
      %s237 = ssub.s32 %s31, %s43
      %p238 = scmp.eq.s32.totalorder %s237, 0
      %s240 = sadd.s32 %s239, 1
      %s241 = scalar_select %p238, %s239, %s240
      %p244 = pneg %p238
      %p245 = scmp.eq.s32.totalorder %s24, 1
      %p246 = por %p244, %p245
      %p247 = scmp.ne.s32.totalorder %s239, %s242
      %p248 = scmp.eq.s32.totalorder %s24, 0
      %p249 = por %p247, %p248
      %p250 = scmp.ne.s32.totalorder %s239, %s242
      %p251 = scmp.eq.s32.totalorder %s29, 1
      %p252 = por %p250, %p251
      %p253 = scmp.ne.s32.totalorder %s242, %s243
      %p254 = scmp.eq.s32.totalorder %s29, 0
      %p255 = por %p253, %p254
      %p256 = scmp.ne.s32.totalorder %s242, %s243
      %p257 = scmp.eq.s32.totalorder %s30, 1
      %p258 = por %p256, %p257
      %p260 = scmp.ne.s32.totalorder %s243, %s259
      %p261 = scmp.eq.s32.totalorder %s30, 0
      %p262 = por %p260, %p261
      %s263 = ssub.s32 %s31, %s43
      %p264 = scmp.eq.s32.totalorder %s263, 0
      %s266 = sadd.s32 %s265, 1
      %s267 = scalar_select %p264, %s265, %s266
      %p270 = pneg %p264
      %p271 = scmp.eq.s32.totalorder %s24, 1
      %p272 = por %p270, %p271
      %p273 = scmp.ne.s32.totalorder %s265, %s268
      %p274 = scmp.eq.s32.totalorder %s24, 0
      %p275 = por %p273, %p274
      %p276 = scmp.ne.s32.totalorder %s265, %s268
      %p277 = scmp.eq.s32.totalorder %s29, 1
      %p278 = por %p276, %p277
      %p279 = scmp.ne.s32.totalorder %s268, %s269
      %p280 = scmp.eq.s32.totalorder %s29, 0
      %p281 = por %p279, %p280
      %p282 = scmp.ne.s32.totalorder %s268, %s269
      %p283 = scmp.eq.s32.totalorder %s30, 1
      %p284 = por %p282, %p283
      %p286 = scmp.ne.s32.totalorder %s269, %s285
      %p287 = scmp.eq.s32.totalorder %s30, 0
      %p288 = por %p286, %p287
      %s289 = ssub.s32 %s31, %s43
      %p290 = scmp.eq.s32.totalorder %s289, 0
      %s292 = sadd.s32 %s291, 1
      %s293 = scalar_select %p290, %s291, %s292
      %p296 = pneg %p290
      %p297 = scmp.eq.s32.totalorder %s24, 1
      %p298 = por %p296, %p297
      %p299 = scmp.ne.s32.totalorder %s291, %s294
      %p300 = scmp.eq.s32.totalorder %s24, 0
      %p301 = por %p299, %p300
      %p302 = scmp.ne.s32.totalorder %s291, %s294
      %p303 = scmp.eq.s32.totalorder %s29, 1
      %p304 = por %p302, %p303
      %p305 = scmp.ne.s32.totalorder %s294, %s295
      %p306 = scmp.eq.s32.totalorder %s29, 0
      %p307 = por %p305, %p306
      %p308 = scmp.ne.s32.totalorder %s294, %s295
      %p309 = scmp.eq.s32.totalorder %s30, 1
      %p310 = por %p308, %p309
      %p312 = scmp.ne.s32.totalorder %s295, %s311
      %p313 = scmp.eq.s32.totalorder %s30, 0
      %p314 = por %p312, %p313
      %s316 = sadd.s32 %s315, 1
      %p319 = scmp.eq.s32.totalorder %s24, 1
      %p320 = scmp.ne.s32.totalorder %s315, %s317
      %p321 = scmp.eq.s32.totalorder %s24, 0
      %p322 = por %p320, %p321
      %p323 = scmp.ne.s32.totalorder %s315, %s317
      %p324 = scmp.eq.s32.totalorder %s29, 1
      %p325 = por %p323, %p324
      %p326 = scmp.ne.s32.totalorder %s317, %s318
      %p327 = scmp.eq.s32.totalorder %s29, 0
      %p328 = por %p326, %p327
      %p329 = scmp.ne.s32.totalorder %s317, %s318
      %p330 = scmp.eq.s32.totalorder %s30, 1
      %p331 = por %p329, %p330
      %p333 = scmp.ne.s32.totalorder %s318, %s332
      %p334 = scmp.eq.s32.totalorder %s30, 0
      %p335 = por %p333, %p334
      %s337 = sadd.s32 %s336, 1
      %p340 = scmp.eq.s32.totalorder %s24, 1
      %p341 = scmp.ne.s32.totalorder %s336, %s338
      %p342 = scmp.eq.s32.totalorder %s24, 0
      %p343 = por %p341, %p342
      %p344 = scmp.ne.s32.totalorder %s336, %s338
      %p345 = scmp.eq.s32.totalorder %s29, 1
      %p346 = por %p344, %p345
      %p347 = scmp.ne.s32.totalorder %s338, %s339
      %p348 = scmp.eq.s32.totalorder %s29, 0
      %p349 = por %p347, %p348
      %p350 = scmp.ne.s32.totalorder %s338, %s339
      %p351 = scmp.eq.s32.totalorder %s30, 1
      %p352 = por %p350, %p351
      %p354 = scmp.ne.s32.totalorder %s339, %s353
      %p355 = scmp.eq.s32.totalorder %s30, 0
      %p356 = por %p354, %p355
      %s358 = sadd.s32 %s357, 1
      %p361 = scmp.eq.s32.totalorder %s24, 1
      %p362 = scmp.ne.s32.totalorder %s357, %s359
      %p363 = scmp.eq.s32.totalorder %s24, 0
      %p364 = por %p362, %p363
      %p365 = scmp.ne.s32.totalorder %s357, %s359
      %p366 = scmp.eq.s32.totalorder %s29, 1
      %p367 = por %p365, %p366
      %p368 = scmp.ne.s32.totalorder %s359, %s360
      %p369 = scmp.eq.s32.totalorder %s29, 0
      %p370 = por %p368, %p369
      %p371 = scmp.ne.s32.totalorder %s359, %s360
      %p372 = scmp.eq.s32.totalorder %s30, 1
      %p373 = por %p371, %p372
      %p375 = scmp.ne.s32.totalorder %s360, %s374
      %p376 = scmp.eq.s32.totalorder %s30, 0
      %p377 = por %p375, %p376
      %s379 = sadd.s32 %s378, 1
      %p382 = scmp.eq.s32.totalorder %s24, 1
      %p383 = scmp.ne.s32.totalorder %s378, %s380
      %p384 = scmp.eq.s32.totalorder %s24, 0
      %p385 = por %p383, %p384
      %p386 = scmp.ne.s32.totalorder %s378, %s380
      %p387 = scmp.eq.s32.totalorder %s29, 1
      %p388 = por %p386, %p387
      %p389 = scmp.ne.s32.totalorder %s380, %s381
      %p390 = scmp.eq.s32.totalorder %s29, 0
      %p391 = por %p389, %p390
      %p392 = scmp.ne.s32.totalorder %s380, %s381
      %p393 = scmp.eq.s32.totalorder %s30, 1
      %p394 = por %p392, %p393
      %p396 = scmp.ne.s32.totalorder %s381, %s395
      %p397 = scmp.eq.s32.totalorder %s30, 0
      %p398 = por %p396, %p397
      %s400 = sadd.s32 %s399, 1
      %p403 = scmp.eq.s32.totalorder %s24, 1
      %p404 = scmp.ne.s32.totalorder %s399, %s401
      %p405 = scmp.eq.s32.totalorder %s24, 0
      %p406 = por %p404, %p405
      %p407 = scmp.ne.s32.totalorder %s399, %s401
      %p408 = scmp.eq.s32.totalorder %s29, 1
      %p409 = por %p407, %p408
      %p410 = scmp.ne.s32.totalorder %s401, %s402
      %p411 = scmp.eq.s32.totalorder %s29, 0
      %p412 = por %p410, %p411
      %p413 = scmp.ne.s32.totalorder %s401, %s402
      %p414 = scmp.eq.s32.totalorder %s30, 1
      %p415 = por %p413, %p414
      %p417 = scmp.ne.s32.totalorder %s402, %s416
      %p418 = scmp.eq.s32.totalorder %s30, 0
      %p419 = por %p417, %p418
      %s421 = sadd.s32 %s420, 1
      %p424 = scmp.eq.s32.totalorder %s24, 1
      %p425 = scmp.ne.s32.totalorder %s420, %s422
      %p426 = scmp.eq.s32.totalorder %s24, 0
      %p427 = por %p425, %p426
      %p428 = scmp.ne.s32.totalorder %s420, %s422
      %p429 = scmp.eq.s32.totalorder %s29, 1
      %p430 = por %p428, %p429
      %p431 = scmp.ne.s32.totalorder %s422, %s423
      %p432 = scmp.eq.s32.totalorder %s29, 0
      %p433 = por %p431, %p432
      %p434 = scmp.ne.s32.totalorder %s422, %s423
      %p435 = scmp.eq.s32.totalorder %s30, 1
      %p436 = por %p434, %p435
      %p438 = scmp.ne.s32.totalorder %s423, %s437
      %p439 = scmp.eq.s32.totalorder %s30, 0
      %p440 = por %p438, %p439
      %s442 = sadd.s32 %s441, 1
      %p445 = scmp.eq.s32.totalorder %s24, 1
      %p446 = scmp.ne.s32.totalorder %s441, %s443
      %p447 = scmp.eq.s32.totalorder %s24, 0
      %p448 = por %p446, %p447
      %p449 = scmp.ne.s32.totalorder %s441, %s443
      %p450 = scmp.eq.s32.totalorder %s29, 1
      %p451 = por %p449, %p450
      %p452 = scmp.ne.s32.totalorder %s443, %s444
      %p453 = scmp.eq.s32.totalorder %s29, 0
      %p454 = por %p452, %p453
      %p455 = scmp.ne.s32.totalorder %s443, %s444
      %p456 = scmp.eq.s32.totalorder %s30, 1
      %p457 = por %p455, %p456
      %p459 = scmp.ne.s32.totalorder %s444, %s458
      %p460 = scmp.eq.s32.totalorder %s30, 0
      %p461 = por %p459, %p460
      %p462 = scmp.le.s32.totalorder 1, %s24
      %p463 = scmp.lt.s32.totalorder %s24, 3
      %p464 = pnand %p462, %p463
      %p465 = pneg %p464
      // Predicated region
      $region9: #{cgcnn_forward.1} parent=5 // pred_check
        _
      $region10: #{cgcnn_forward.1} parent=5 // pred_check_branch
        %467 = sbr.rel (%p464) target = $region12
      $region11: #{cgcnn_forward.1} parent=5 // pred_region
        %s468 = ssub.s32 %s24, 1
        // Predicated region
        $region13: #{cgcnn_forward.1} parent=11 // pred_check
          %p469 = pneg %p62
        $region14: #{cgcnn_forward.1} parent=11 // pred_check_branch
          %471 = sbr.rel (%p469) target = $region16
        $region15: #{cgcnn_forward.1} parent=11 // pred_region
          %p472 = scmp.lt.s32.totalorder %s34, 0
          %s473 = scalar_select %p472, %s34, 0
          %s474 = smul.addr %s473, 2
          %s475 = scalar_lea.vmem %s0, %s474
        $region16: #{cgcnn_forward.1} parent=11 // pred_fallthru
          _
        // Predicated region
        $region17: #{cgcnn_forward.1} parent=11 // pred_check
          %p476 = pneg %p88
        $region18: #{cgcnn_forward.1} parent=11 // pred_check_branch
          %478 = sbr.rel (%p476) target = $region20
        $region19: #{cgcnn_forward.1} parent=11 // pred_region
          %s479 = smul.u32 16, %s34
          %p480 = scmp.lt.s32.totalorder %s479, 15
          %s481 = scalar_select %p480, %s479, 15
          %s482 = smul.addr %s481, 8
          %s483 = scalar_lea.vmem %s1, %s482
          %s484 = smul.u32 16, %s34
        $region20: #{cgcnn_forward.1} parent=11 // pred_fallthru
          _
        // Predicated region
        $region21: #{cgcnn_forward.1} parent=11 // pred_check
          %p485 = pneg %p109
        $region22: #{cgcnn_forward.1} parent=11 // pred_check_branch
          %487 = sbr.rel (%p485) target = $region24
        $region23: #{cgcnn_forward.1} parent=11 // pred_region
          _
        $region24: #{cgcnn_forward.1} parent=11 // pred_fallthru
          _
        // Predicated region
        $region25: #{cgcnn_forward.1} parent=11 // pred_check
          %p488 = pneg %p130
        $region26: #{cgcnn_forward.1} parent=11 // pred_check_branch
          %490 = sbr.rel (%p488) target = $region28
        $region27: #{cgcnn_forward.1} parent=11 // pred_region
          _
        $region28: #{cgcnn_forward.1} parent=11 // pred_fallthru
          _
        // Predicated region
        $region29: #{cgcnn_forward.1} parent=11 // pred_check
          %p491 = pneg %p151
        $region30: #{cgcnn_forward.1} parent=11 // pred_check_branch
          %493 = sbr.rel (%p491) target = $region32
        $region31: #{cgcnn_forward.1} parent=11 // pred_region
          _
        $region32: #{cgcnn_forward.1} parent=11 // pred_fallthru
          _
        // Predicated region
        $region33: #{cgcnn_forward.1} parent=11 // pred_check
          %p494 = pneg %p328
        $region34: #{cgcnn_forward.1} parent=11 // pred_check_branch
          %496 = sbr.rel (%p494) target = $region36
        $region35: #{cgcnn_forward.1} parent=11 // pred_region
          _
        $region36: #{cgcnn_forward.1} parent=11 // pred_fallthru
          _
        // Predicated region
        $region37: #{cgcnn_forward.1} parent=11 // pred_check
          %p497 = pneg %p349
        $region38: #{cgcnn_forward.1} parent=11 // pred_check_branch
          %499 = sbr.rel (%p497) target = $region40
        $region39: #{cgcnn_forward.1} parent=11 // pred_region
          _
        $region40: #{cgcnn_forward.1} parent=11 // pred_fallthru
          _
        // Predicated region
        $region41: #{cgcnn_forward.1} parent=11 // pred_check
          %p500 = pneg %p370
        $region42: #{cgcnn_forward.1} parent=11 // pred_check_branch
          %502 = sbr.rel (%p500) target = $region44
        $region43: #{cgcnn_forward.1} parent=11 // pred_region
          _
        $region44: #{cgcnn_forward.1} parent=11 // pred_fallthru
          _
        // Predicated region
        $region45: #{cgcnn_forward.1} parent=11 // pred_check
          %p503 = pneg %p391
        $region46: #{cgcnn_forward.1} parent=11 // pred_check_branch
          %505 = sbr.rel (%p503) target = $region48
        $region47: #{cgcnn_forward.1} parent=11 // pred_region
          _
        $region48: #{cgcnn_forward.1} parent=11 // pred_fallthru
          _
        // Predicated region
        $region49: #{cgcnn_forward.1} parent=11 // pred_check
          %p506 = pneg %p412
        $region50: #{cgcnn_forward.1} parent=11 // pred_check_branch
          %508 = sbr.rel (%p506) target = $region52
        $region51: #{cgcnn_forward.1} parent=11 // pred_region
          _
        $region52: #{cgcnn_forward.1} parent=11 // pred_fallthru
          _
        // Predicated region
        $region53: #{cgcnn_forward.1} parent=11 // pred_check
          %p509 = pneg %p433
        $region54: #{cgcnn_forward.1} parent=11 // pred_check_branch
          %511 = sbr.rel (%p509) target = $region56
        $region55: #{cgcnn_forward.1} parent=11 // pred_region
          _
        $region56: #{cgcnn_forward.1} parent=11 // pred_fallthru
          _
      $region12: #{cgcnn_forward.1} parent=5 // pred_fallthru
        _
      %p512 = scmp.lt.s32.totalorder %s24, 2
      // Predicated region
      $region57: #{cgcnn_forward.1} parent=5 // pred_check
        %p513 = pneg %p512
      $region58: #{cgcnn_forward.1} parent=5 // pred_check_branch
        %515 = sbr.rel (%p513) target = $region60
      $region59: #{cgcnn_forward.1} parent=5 // pred_region
        // Predicated region
        $region61: #{cgcnn_forward.1} parent=59 // pred_check
          %p516 = pneg %p171
        $region62: #{cgcnn_forward.1} parent=59 // pred_check_branch
          %518 = sbr.rel (%p516) target = $region64
        $region63: #{cgcnn_forward.1} parent=59 // pred_region
          %p519 = scmp.lt.s32.totalorder %s31, 1
          %s520 = scalar_select %p519, %s31, 1
          %s521 = smul.addr %s520, 32
          %s522 = smul.addr %s521, 4
          %s523 = scalar_lea.vmem %s5, %s522
        $region64: #{cgcnn_forward.1} parent=59 // pred_fallthru
          _
        // Predicated region
        $region65: #{cgcnn_forward.1} parent=59 // pred_check
          %p524 = pneg %p197
        $region66: #{cgcnn_forward.1} parent=59 // pred_check_branch
          %526 = sbr.rel (%p524) target = $region68
        $region67: #{cgcnn_forward.1} parent=59 // pred_region
          %p527 = scmp.lt.s32.totalorder %s31, 1
          %s528 = scalar_select %p527, %s31, 1
          %s529 = smul.addr %s528, 32
          %s530 = smul.addr %s529, 4
          %s531 = scalar_lea.vmem %s6, %s530
        $region68: #{cgcnn_forward.1} parent=59 // pred_fallthru
          _
        // Predicated region
        $region69: #{cgcnn_forward.1} parent=59 // pred_check
          %p532 = pneg %p223
        $region70: #{cgcnn_forward.1} parent=59 // pred_check_branch
          %534 = sbr.rel (%p532) target = $region72
        $region71: #{cgcnn_forward.1} parent=59 // pred_region
          %p535 = scmp.lt.s32.totalorder %s31, 1
          %s536 = scalar_select %p535, %s31, 1
          %s537 = smul.addr %s536, 2
          %s538 = smul.addr %s537, 4
          %s539 = scalar_lea.vmem %s7, %s538
        $region72: #{cgcnn_forward.1} parent=59 // pred_fallthru
          _
        // Predicated region
        $region73: #{cgcnn_forward.1} parent=59 // pred_check
          %p540 = pneg %p249
        $region74: #{cgcnn_forward.1} parent=59 // pred_check_branch
          %542 = sbr.rel (%p540) target = $region76
        $region75: #{cgcnn_forward.1} parent=59 // pred_region
          %p543 = scmp.lt.s32.totalorder %s31, 1
          %s544 = scalar_select %p543, %s31, 1
          %s545 = smul.addr %s544, 2
          %s546 = scalar_lea.vmem %s8, %s545
        $region76: #{cgcnn_forward.1} parent=59 // pred_fallthru
          _
        // Predicated region
        $region77: #{cgcnn_forward.1} parent=59 // pred_check
          %p547 = pneg %p275
        $region78: #{cgcnn_forward.1} parent=59 // pred_check_branch
          %549 = sbr.rel (%p547) target = $region80
        $region79: #{cgcnn_forward.1} parent=59 // pred_region
          %p550 = scmp.lt.s32.totalorder %s31, 1
          %s551 = scalar_select %p550, %s31, 1
          %s552 = scalar_lea.vmem %s9, %s551
        $region80: #{cgcnn_forward.1} parent=59 // pred_fallthru
          _
        // Predicated region
        $region81: #{cgcnn_forward.1} parent=59 // pred_check
          %p553 = pneg %p301
        $region82: #{cgcnn_forward.1} parent=59 // pred_check_branch
          %555 = sbr.rel (%p553) target = $region84
        $region83: #{cgcnn_forward.1} parent=59 // pred_region
          %p556 = scmp.lt.s32.totalorder %s31, 1
          %s557 = scalar_select %p556, %s31, 1
          %s558 = scalar_lea.vmem %s10, %s557
        $region84: #{cgcnn_forward.1} parent=59 // pred_fallthru
          _
      $region60: #{cgcnn_forward.1} parent=5 // pred_fallthru
        _
      %p559 = scmp.le.s32.totalorder 1, %s24
      %p560 = scmp.lt.s32.totalorder %s24, 3
      %p561 = pnand %p559, %p560
      %p562 = pneg %p561
      // Predicated region
      $region85: #{cgcnn_forward.1} parent=5 // pred_check
        _
      $region86: #{cgcnn_forward.1} parent=5 // pred_check_branch
        %564 = sbr.rel (%p561) target = $region88
      $region87: #{cgcnn_forward.1} parent=5 // pred_region
        %s565 = ssub.s32 %s24, 1
        %p566 = scmp.lt.s32.totalorder %s34, 0
        %s567 = scalar_select %p566, %s34, 0
        %s568 = smul.addr %s567, 2
        %s569 = scalar_lea.vmem %s0, %s568
        %p570 = pneg %p62
        %p571 = pneg %p59
        %s572 = smul.u32 16, %s34
        %p573 = scmp.lt.s32.totalorder %s572, 15
        %s574 = scalar_select %p573, %s572, 15
        %s575 = smul.addr %s574, 8
        %s576 = scalar_lea.vmem %s1, %s575
        %p577 = pneg %p88
        %p578 = pneg %p85
        %p579 = pneg %p109
        %p580 = pneg %p106
        %p581 = pneg %p130
        %p582 = pneg %p127
        %p583 = pneg %p151
        %p584 = pneg %p148
        %p585 = scmp.lt.s32.totalorder %s33, 1
        %s586 = scalar_select %p585, %s33, 1
        %s587 = smul.addr %s586, 32
        %s588 = smul.addr %s587, 4
        %s589 = scalar_lea.vmem %s5, %s588
        %p590 = pneg %p177
        %p591 = pneg %p174
        %p592 = scmp.lt.s32.totalorder %s33, 1
        %s593 = scalar_select %p592, %s33, 1
        %s594 = smul.addr %s593, 32
        %s595 = smul.addr %s594, 4
        %s596 = scalar_lea.vmem %s6, %s595
        %p597 = pneg %p203
        %p598 = pneg %p200
        %p599 = scmp.lt.s32.totalorder %s33, 1
        %s600 = scalar_select %p599, %s33, 1
        %s601 = smul.addr %s600, 2
        %s602 = smul.addr %s601, 4
        %s603 = scalar_lea.vmem %s7, %s602
        %p604 = pneg %p229
        %p605 = pneg %p226
        %p606 = scmp.lt.s32.totalorder %s33, 1
        %s607 = scalar_select %p606, %s33, 1
        %s608 = smul.addr %s607, 2
        %s609 = scalar_lea.vmem %s8, %s608
        %p610 = pneg %p255
        %p611 = pneg %p252
        %p612 = scmp.lt.s32.totalorder %s33, 1
        %s613 = scalar_select %p612, %s33, 1
        %s614 = scalar_lea.vmem %s9, %s613
        %p615 = pneg %p281
        %p616 = pneg %p278
        %p617 = scmp.lt.s32.totalorder %s33, 1
        %s618 = scalar_select %p617, %s33, 1
        %s619 = scalar_lea.vmem %s10, %s618
        %p620 = pneg %p307
        %p621 = pneg %p304
        %p622 = pneg %p328
        %p623 = pneg %p325
        %p624 = pneg %p349
        %p625 = pneg %p346
        %p626 = pneg %p370
        %p627 = pneg %p367
        %p628 = pneg %p391
        %p629 = pneg %p388
        %p630 = pneg %p412
        %p631 = pneg %p409
        %p632 = pneg %p433
        %p633 = pneg %p430
        %p634 = pneg %p454
        %p635 = pneg %p451
        %p636 = scmp.lt.s32.totalorder %s34, 0
        %s637 = scalar_select %p636, %s34, 0
        %s638 = smul.addr %s637, 2
        %s639 = scalar_lea.vmem %s0, %s638
        %s640 = smul.u32 16, %s34
        %p641 = scmp.lt.s32.totalorder %s640, 15
        %s642 = scalar_select %p641, %s640, 15
        %s643 = smul.addr %s642, 8
        %s644 = scalar_lea.vmem %s1, %s643
        %s645 = smul.u32 16, %s34
        %p646 = scmp.lt.s32.totalorder %s33, 1
        %s647 = scalar_select %p646, %s33, 1
        %s648 = smul.addr %s647, 32
        %s649 = smul.addr %s648, 4
        %s650 = scalar_lea.vmem %s5, %s649
        %p651 = scmp.lt.s32.totalorder %s33, 1
        %s652 = scalar_select %p651, %s33, 1
        %s653 = smul.addr %s652, 32
        %s654 = smul.addr %s653, 4
        %s655 = scalar_lea.vmem %s6, %s654
        %p656 = scmp.lt.s32.totalorder %s33, 1
        %s657 = scalar_select %p656, %s33, 1
        %s658 = smul.addr %s657, 2
        %s659 = smul.addr %s658, 4
        %s660 = scalar_lea.vmem %s7, %s659
        %p661 = scmp.lt.s32.totalorder %s33, 1
        %s662 = scalar_select %p661, %s33, 1
        %s663 = smul.addr %s662, 2
        %s664 = scalar_lea.vmem %s8, %s663
        %p665 = scmp.lt.s32.totalorder %s33, 1
        %s666 = scalar_select %p665, %s33, 1
        %s667 = scalar_lea.vmem %s9, %s666
        %p668 = scmp.lt.s32.totalorder %s33, 1
        %s669 = scalar_select %p668, %s33, 1
        %s670 = scalar_lea.vmem %s10, %s669
        %p672 = scmp.eq.s32.totalorder %s33, 0
        %p673 = scmp.eq.s32.totalorder %s34, 0
        %p674 = pnand %p672, %p673
        %p675 = pneg %p674
        // Predicated region
        $region89: #{cgcnn_forward.1} parent=87 // pred_check
          _
        $region90: #{cgcnn_forward.1} parent=87 // pred_check_branch
          %677 = sbr.rel (%p674) target = $region92
        $region91: #{cgcnn_forward.1} parent=87 // pred_region
          %v678 = vld [vmem:[%s2] sm:$0xff]
          %v679 = vld [vmem:[%s2 + $0x8] sm:$0xff]
          %v680 = vpack.c.bf16 %v679, %v678
          %v681 = vld [vmem:[%s3] sm:$0xf]
          %v682 = vld [vmem:[%s4] sm:$0x1]
          %v684 = vlaneseq
          %v685 = vshrl.u32 %v684, 7
          %v686 = vsub.s32 0, %v685
          %v687 = vrot.slane %v682, %v686
          %vm689 = vcmask 64512
          %v691 = vsel %vm689, %v680, 0
          %vm693 = vcmask 1043456
          %v695 = vsel %vm693, %v681, 0
          %697 = vmatprep.subr.bf16.mxu0 0
          %698 = vmatpush1.bf16.msra.mxu0 %v695
          %699 = vmatprep.subr.bf16.mxu0 0
          %700 = vmatpush1.bf16.msra.mxu0 0
          %701 = vmatprep.subr.bf16.mxu0 0
          %702 = vmatpush1.bf16.msra.mxu0 0
          %703 = vmatprep.subr.bf16.mxu0 0
          %704 = vmatpush1.bf16.msra.mxu0 0
          %705 = vmatprep.subr.bf16.mxu0 0
          %706 = vmatpush1.bf16.msra.mxu0 0
          %707 = vmatprep.subr.bf16.mxu0 0
          %708 = vmatpush1.bf16.msra.mxu0 0
          %709 = vmatprep.subr.bf16.mxu0 0
          %710 = vmatpush1.bf16.msra.mxu0 0
          %711 = vmatprep.subr.bf16.mxu0 0
          %712 = vmatpush1.bf16.msra.mxu0 0
          %713 = vmatprep.subr.bf16.mxu0 0
          %714 = vmatpush1.bf16.msra.mxu0 0
          %715 = vmatprep.subr.bf16.mxu0 0
          %716 = vmatpush1.bf16.msra.mxu0 0
          %717 = vmatprep.subr.bf16.mxu0 0
          %718 = vmatpush1.bf16.msra.mxu0 0
          %719 = vmatprep.subr.bf16.mxu0 0
          %720 = vmatpush1.bf16.msra.mxu0 0
          %721 = vmatprep.subr.bf16.mxu0 0
          %722 = vmatpush1.bf16.msra.mxu0 0
          %723 = vmatprep.subr.bf16.mxu0 0
          %724 = vmatpush1.bf16.msra.mxu0 0
          %725 = vmatprep.subr.bf16.mxu0 0
          %726 = vmatpush1.bf16.msra.mxu0 0
          %727 = vmatprep.subr.bf16.mxu0 0
          %728 = vmatpush1.bf16.msra.mxu0 0
          %729 = vmatprep.mubr.bf16.mxu0 0
          %730 = vmatmul.mubr.bf16.gmra.mrb[0].mxu0 %v691
          %v731 = vpop.f32.mrb[0].mxu0
          %v732 = vadd.f32 %v687, %v731
          %v733 = vpop.f32.mrb[0].mxu0
          %v734 = vpop.f32.mrb[0].mxu0
          %v735 = vadd.f32 %v687, %v734
          %v736 = vpop.f32.mrb[0].mxu0
          %737 = vdwg.mxu0
          %v738 = vxor.u32 %v732, 2147483648
          %v739 = vxor.u32 %v735, 2147483648
          %v740 = vmul.f32 %v738, 1.442695
          %v741 = vpow.pop %v740
          %v742 = vmul.f32 %v739, 1.442695
          %v743 = vpow.pop %v742
          %v744 = vadd.f32 %v741, 1.0
          %v745 = vadd.f32 %v743, 1.0
          %v746 = vrcp.pop %v744
          %v747 = vmul.f32 1.0, %v746
          %v748 = vrcp.pop %v745
          %v749 = vmul.f32 1.0, %v748
          %v750 = vmul.f32 %v732, %v747
          %v751 = vmul.f32 %v735, %v749
          %v752 = vlaneseq
          %v753 = vshrl.u32 %v752, 7
          %v754 = vadd.s32 %v753, 8
          %vm755 = vcmp.lt.s32.totalorder %v753, 16
          %vm756 = vcmp.lt.s32.totalorder %v754, 16
          %v757 = vlaneseq
          %v758 = vand.u32 %v757, 127
          %vm759 = vcmp.lt.s32.totalorder %v758, 32
          %v760 = vsel %vm755, 1, 0
          %v761 = vsel %vm756, 1, 0
          %vm762 = vcmp.eq.s32.totalorder %v760, 1
          %vm763 = vcmp.eq.s32.totalorder %v761, 1
          %v764 = vsel %vm759, 1, 0
          %vm765 = vcmp.eq.s32.totalorder %v764, 1
          %vm766 = vmand %vm762, %vm765
          %vm767 = vmand %vm763, %vm765
          %v768 = vsel %vm766, 1, 0
          %v769 = vsel %vm767, 1, 0
          %v770 = vcvt.s32.f32 %v768
          %v771 = vcvt.s32.f32 %v769
          %v772 = vmul.f32 %v750, %v770
          %v773 = vmul.f32 %v751, %v771
          %774 = vst [vmem:[#allocation2] sm:$0xff] %v772
          %775 = vst [vmem:[#allocation2 + $0x8] sm:$0xff] %v773
        $region92: #{cgcnn_forward.1} parent=87 // pred_fallthru
          _
        // Predicated region
        $region93: #{cgcnn_forward.1} parent=87 // pred_check
          %p776 = pneg %p673
        $region94: #{cgcnn_forward.1} parent=87 // pred_check_branch
          %778 = sbr.rel (%p776) target = $region96
        $region95: #{cgcnn_forward.1} parent=87 // pred_region
          %779 = vst [vmem:[#allocation3] sm:$0xff] 0.0
          %780 = vst [vmem:[#allocation3 + $0x8] sm:$0xff] 0.0
          %v781 = vld [vmem:[#allocation2] sm:$0xff]
          %v782 = vld [vmem:[#allocation2 + $0x8] sm:$0xff]
          %v783 = vpack.c.bf16 %v782, %v781
          %v784 = vld [vmem:[%s650] sm:$0xff]
          %v785 = vld [vmem:[%s650 + $0x8] sm:$0xff]
          %v786 = vld [vmem:[%s650 + $0x10] sm:$0xff]
          %v787 = vld [vmem:[%s650 + $0x18] sm:$0xff]
          %v788 = vld [vmem:[%s650 + $0x20] sm:$0xff]
          %v789 = vld [vmem:[%s650 + $0x28] sm:$0xff]
          %v790 = vld [vmem:[%s650 + $0x30] sm:$0xff]
          %v791 = vld [vmem:[%s650 + $0x38] sm:$0xff]
          %v792 = vld [vmem:[%s650 + $0x40] sm:$0xff]
          %v793 = vld [vmem:[%s650 + $0x48] sm:$0xff]
          %v794 = vld [vmem:[%s650 + $0x50] sm:$0xff]
          %v795 = vld [vmem:[%s650 + $0x58] sm:$0xff]
          %v796 = vld [vmem:[%s650 + $0x60] sm:$0xff]
          %v797 = vld [vmem:[%s650 + $0x68] sm:$0xff]
          %v798 = vld [vmem:[%s650 + $0x70] sm:$0xff]
          %v799 = vld [vmem:[%s650 + $0x78] sm:$0xff]
          %v816 = vunpack.c.l.b16 %v784
          %v817 = vunpack.c.h.b16 %v784
          %v818 = vunpack.c.l.b16 %v785
          %v819 = vunpack.c.h.b16 %v785
          %v820 = vunpack.c.l.b16 %v786
          %v821 = vunpack.c.h.b16 %v786
          %v822 = vunpack.c.l.b16 %v787
          %v823 = vunpack.c.h.b16 %v787
          %v824 = vunpack.c.l.b16 %v788
          %v825 = vunpack.c.h.b16 %v788
          %v826 = vunpack.c.l.b16 %v789
          %v827 = vunpack.c.h.b16 %v789
          %v828 = vunpack.c.l.b16 %v790
          %v829 = vunpack.c.h.b16 %v790
          %v830 = vunpack.c.l.b16 %v791
          %v831 = vunpack.c.h.b16 %v791
          %v832 = vunpack.c.l.b16 %v792
          %v833 = vunpack.c.h.b16 %v792
          %v834 = vunpack.c.l.b16 %v793
          %v835 = vunpack.c.h.b16 %v793
          %v836 = vunpack.c.l.b16 %v794
          %v837 = vunpack.c.h.b16 %v794
          %v838 = vunpack.c.l.b16 %v795
          %v839 = vunpack.c.h.b16 %v795
          %v840 = vunpack.c.l.b16 %v796
          %v841 = vunpack.c.h.b16 %v796
          %v842 = vunpack.c.l.b16 %v797
          %v843 = vunpack.c.h.b16 %v797
          %v844 = vunpack.c.l.b16 %v798
          %v845 = vunpack.c.h.b16 %v798
          %v846 = vunpack.c.l.b16 %v799
          %v847 = vunpack.c.h.b16 %v799
          %v848 = vpack.c.b16 %v818, %v816
          %v849 = vpack.c.b16 %v819, %v817
          %v850 = vpack.c.b16 %v822, %v820
          %v851 = vpack.c.b16 %v823, %v821
          %v852 = vpack.c.b16 %v826, %v824
          %v853 = vpack.c.b16 %v827, %v825
          %v854 = vpack.c.b16 %v830, %v828
          %v855 = vpack.c.b16 %v831, %v829
          %v856 = vpack.c.b16 %v834, %v832
          %v857 = vpack.c.b16 %v835, %v833
          %v858 = vpack.c.b16 %v838, %v836
          %v859 = vpack.c.b16 %v839, %v837
          %v860 = vpack.c.b16 %v842, %v840
          %v861 = vpack.c.b16 %v843, %v841
          %v862 = vpack.c.b16 %v846, %v844
          %v863 = vpack.c.b16 %v847, %v845
          %880 = vmatprep.subr.bf16.mxu0 %v849
          %881 = vmatpush1.bf16.msra.mxu0 %v848
          %882 = vmatprep.subr.bf16.mxu0 %v851
          %883 = vmatpush1.bf16.msra.mxu0 %v850
          %884 = vmatprep.subr.bf16.mxu0 %v853
          %885 = vmatpush1.bf16.msra.mxu0 %v852
          %886 = vmatprep.subr.bf16.mxu0 %v855
          %887 = vmatpush1.bf16.msra.mxu0 %v854
          %888 = vmatprep.subr.bf16.mxu0 %v857
          %889 = vmatpush1.bf16.msra.mxu0 %v856
          %890 = vmatprep.subr.bf16.mxu0 %v859
          %891 = vmatpush1.bf16.msra.mxu0 %v858
          %892 = vmatprep.subr.bf16.mxu0 %v861
          %893 = vmatpush1.bf16.msra.mxu0 %v860
          %894 = vmatprep.subr.bf16.mxu0 %v863
          %895 = vmatpush1.bf16.msra.mxu0 %v862
          %896 = vmatprep.subr.bf16.mxu0 0
          %897 = vmatpush1.bf16.msra.mxu0 0
          %898 = vmatprep.subr.bf16.mxu0 0
          %899 = vmatpush1.bf16.msra.mxu0 0
          %900 = vmatprep.subr.bf16.mxu0 0
          %901 = vmatpush1.bf16.msra.mxu0 0
          %902 = vmatprep.subr.bf16.mxu0 0
          %903 = vmatpush1.bf16.msra.mxu0 0
          %904 = vmatprep.subr.bf16.mxu0 0
          %905 = vmatpush1.bf16.msra.mxu0 0
          %906 = vmatprep.subr.bf16.mxu0 0
          %907 = vmatpush1.bf16.msra.mxu0 0
          %908 = vmatprep.subr.bf16.mxu0 0
          %909 = vmatpush1.bf16.msra.mxu0 0
          %910 = vmatprep.subr.bf16.mxu0 0
          %911 = vmatpush1.bf16.msra.mxu0 0
          %912 = vmatprep.mubr.bf16.mxu0 0
          %913 = vmatmul.mubr.bf16.gmra.mrb[0].mxu0 %v783
          %v914 = vpop.f32.mrb[0].mxu0
          %v915 = vadd.f32 0.0, %v914
          %v916 = vpop.f32.mrb[0].mxu0
          %v917 = vadd.f32 0.0, %v916
          %v918 = vpop.f32.mrb[0].mxu0
          %v919 = vadd.f32 0.0, %v918
          %v920 = vpop.f32.mrb[0].mxu0
          %v921 = vadd.f32 0.0, %v920
          %922 = vdwg.mxu0
          %923 = vst [vmem:[#allocation4] sm:$0xff] %v915
          %924 = vst [vmem:[#allocation4 + $0x8] sm:$0xff] %v917
          %925 = vst [vmem:[#allocation4 + $0x10] sm:$0xff] %v919
          %926 = vst [vmem:[#allocation4 + $0x18] sm:$0xff] %v921
          %v927 = vld [vmem:[%s655] sm:$0xff]
          %v928 = vld [vmem:[%s655 + $0x8] sm:$0xff]
          %v929 = vld [vmem:[%s655 + $0x10] sm:$0xff]
          %v930 = vld [vmem:[%s655 + $0x18] sm:$0xff]
          %v931 = vld [vmem:[%s655 + $0x20] sm:$0xff]
          %v932 = vld [vmem:[%s655 + $0x28] sm:$0xff]
          %v933 = vld [vmem:[%s655 + $0x30] sm:$0xff]
          %v934 = vld [vmem:[%s655 + $0x38] sm:$0xff]
          %v935 = vld [vmem:[%s655 + $0x40] sm:$0xff]
          %v936 = vld [vmem:[%s655 + $0x48] sm:$0xff]
          %v937 = vld [vmem:[%s655 + $0x50] sm:$0xff]
          %v938 = vld [vmem:[%s655 + $0x58] sm:$0xff]
          %v939 = vld [vmem:[%s655 + $0x60] sm:$0xff]
          %v940 = vld [vmem:[%s655 + $0x68] sm:$0xff]
          %v941 = vld [vmem:[%s655 + $0x70] sm:$0xff]
          %v942 = vld [vmem:[%s655 + $0x78] sm:$0xff]
          %v959 = vunpack.c.l.b16 %v927
          %v960 = vunpack.c.h.b16 %v927
          %v961 = vunpack.c.l.b16 %v928
          %v962 = vunpack.c.h.b16 %v928
          %v963 = vunpack.c.l.b16 %v929
          %v964 = vunpack.c.h.b16 %v929
          %v965 = vunpack.c.l.b16 %v930
          %v966 = vunpack.c.h.b16 %v930
          %v967 = vunpack.c.l.b16 %v931
          %v968 = vunpack.c.h.b16 %v931
          %v969 = vunpack.c.l.b16 %v932
          %v970 = vunpack.c.h.b16 %v932
          %v971 = vunpack.c.l.b16 %v933
          %v972 = vunpack.c.h.b16 %v933
          %v973 = vunpack.c.l.b16 %v934
          %v974 = vunpack.c.h.b16 %v934
          %v975 = vunpack.c.l.b16 %v935
          %v976 = vunpack.c.h.b16 %v935
          %v977 = vunpack.c.l.b16 %v936
          %v978 = vunpack.c.h.b16 %v936
          %v979 = vunpack.c.l.b16 %v937
          %v980 = vunpack.c.h.b16 %v937
          %v981 = vunpack.c.l.b16 %v938
          %v982 = vunpack.c.h.b16 %v938
          %v983 = vunpack.c.l.b16 %v939
          %v984 = vunpack.c.h.b16 %v939
          %v985 = vunpack.c.l.b16 %v940
          %v986 = vunpack.c.h.b16 %v940
          %v987 = vunpack.c.l.b16 %v941
          %v988 = vunpack.c.h.b16 %v941
          %v989 = vunpack.c.l.b16 %v942
          %v990 = vunpack.c.h.b16 %v942
          %v991 = vpack.c.b16 %v961, %v959
          %v992 = vpack.c.b16 %v962, %v960
          %v993 = vpack.c.b16 %v965, %v963
          %v994 = vpack.c.b16 %v966, %v964
          %v995 = vpack.c.b16 %v969, %v967
          %v996 = vpack.c.b16 %v970, %v968
          %v997 = vpack.c.b16 %v973, %v971
          %v998 = vpack.c.b16 %v974, %v972
          %v999 = vpack.c.b16 %v977, %v975
          %v1000 = vpack.c.b16 %v978, %v976
          %v1001 = vpack.c.b16 %v981, %v979
          %v1002 = vpack.c.b16 %v982, %v980
          %v1003 = vpack.c.b16 %v985, %v983
          %v1004 = vpack.c.b16 %v986, %v984
          %v1005 = vpack.c.b16 %v989, %v987
          %v1006 = vpack.c.b16 %v990, %v988
          %1023 = vmatprep.subr.bf16.mxu0 %v992
          %1024 = vmatpush1.bf16.msra.mxu0 %v991
          %1025 = vmatprep.subr.bf16.mxu0 %v994
          %1026 = vmatpush1.bf16.msra.mxu0 %v993
          %1027 = vmatprep.subr.bf16.mxu0 %v996
          %1028 = vmatpush1.bf16.msra.mxu0 %v995
          %1029 = vmatprep.subr.bf16.mxu0 %v998
          %1030 = vmatpush1.bf16.msra.mxu0 %v997
          %1031 = vmatprep.subr.bf16.mxu0 %v1000
          %1032 = vmatpush1.bf16.msra.mxu0 %v999
          %1033 = vmatprep.subr.bf16.mxu0 %v1002
          %1034 = vmatpush1.bf16.msra.mxu0 %v1001
          %1035 = vmatprep.subr.bf16.mxu0 %v1004
          %1036 = vmatpush1.bf16.msra.mxu0 %v1003
          %1037 = vmatprep.subr.bf16.mxu0 %v1006
          %1038 = vmatpush1.bf16.msra.mxu0 %v1005
          %1039 = vmatprep.subr.bf16.mxu0 0
          %1040 = vmatpush1.bf16.msra.mxu0 0
          %1041 = vmatprep.subr.bf16.mxu0 0
          %1042 = vmatpush1.bf16.msra.mxu0 0
          %1043 = vmatprep.subr.bf16.mxu0 0
          %1044 = vmatpush1.bf16.msra.mxu0 0
          %1045 = vmatprep.subr.bf16.mxu0 0
          %1046 = vmatpush1.bf16.msra.mxu0 0
          %1047 = vmatprep.subr.bf16.mxu0 0
          %1048 = vmatpush1.bf16.msra.mxu0 0
          %1049 = vmatprep.subr.bf16.mxu0 0
          %1050 = vmatpush1.bf16.msra.mxu0 0
          %1051 = vmatprep.subr.bf16.mxu0 0
          %1052 = vmatpush1.bf16.msra.mxu0 0
          %1053 = vmatprep.subr.bf16.mxu0 0
          %1054 = vmatpush1.bf16.msra.mxu0 0
          %1055 = vmatprep.mubr.bf16.mxu0 0
          %1056 = vmatmul.mubr.bf16.gmra.mrb[0].mxu0 %v783
          %v1057 = vpop.f32.mrb[0].mxu0
          %v1058 = vadd.f32 0.0, %v1057
          %v1059 = vpop.f32.mrb[0].mxu0
          %v1060 = vadd.f32 0.0, %v1059
          %v1061 = vpop.f32.mrb[0].mxu0
          %v1062 = vadd.f32 0.0, %v1061
          %v1063 = vpop.f32.mrb[0].mxu0
          %v1064 = vadd.f32 0.0, %v1063
          %1065 = vdwg.mxu0
          %1066 = vst [vmem:[#allocation5] sm:$0xff] %v1058
          %1067 = vst [vmem:[#allocation5 + $0x8] sm:$0xff] %v1060
          %1068 = vst [vmem:[#allocation5 + $0x10] sm:$0xff] %v1062
          %1069 = vst [vmem:[#allocation5 + $0x18] sm:$0xff] %v1064
        $region96: #{cgcnn_forward.1} parent=87 // pred_fallthru
          _
        %v1070 = vld [vmem:[%s639] sm:$0x3]
        %v1071 = vlaneseq
        %v1072 = vshrl.u32 %v1071, 7
        %v1073 = vadd.s32 %v1072, 8
        %v1074 = vlaneseq
        %v1075 = vshrl.u32 %v1074, 7
        %v1076 = vsub.s32 0, %v1075
        %v1077 = vrot.slane %v1070, %v1076
        %vm1078 = vcmp.eq.s32.totalorder %v1072, %v1077
        %vm1079 = vcmp.eq.s32.totalorder %v1073, %v1077
        %v1080 = vlaneseq
        %v1081 = vshrl.u32 %v1080, 7
        %v1082 = vsub.s32 1, %v1081
        %v1083 = vrot.slane %v1070, %v1082
        %vm1084 = vcmp.eq.s32.totalorder %v1072, %v1083
        %vm1085 = vcmp.eq.s32.totalorder %v1073, %v1083
        %v1086 = vsel %vm1078, 1, 0
        %v1087 = vsel %vm1079, 1, 0
        %v1088 = vcvt.s32.f32 %v1086
        %v1089 = vcvt.s32.f32 %v1087
        %v1090 = vld [vmem:[#allocation4] sm:$0xff]
        %v1091 = vld [vmem:[#allocation4 + $0x8] sm:$0xff]
        %v1092 = vld [vmem:[#allocation4 + $0x10] sm:$0xff]
        %v1093 = vld [vmem:[#allocation4 + $0x18] sm:$0xff]
        %v1094 = vsel %vm1084, 1, 0
        %v1095 = vsel %vm1085, 1, 0
        %v1096 = vcvt.s32.f32 %v1094
        %v1097 = vcvt.s32.f32 %v1095
        %v1098 = vld [vmem:[#allocation5] sm:$0xff]
        %v1099 = vld [vmem:[#allocation5 + $0x8] sm:$0xff]
        %v1100 = vld [vmem:[#allocation5 + $0x10] sm:$0xff]
        %v1101 = vld [vmem:[#allocation5 + $0x18] sm:$0xff]
        %1102 = vxpose.xlu0.b32.start [1/16] %v1096, 128
        %1103 = vxpose.xlu0.b32.cont [2/16] %v1097, 128
        %1104 = vxpose.xlu0.b32.cont [3/16] 0.0, 128
        %1105 = vxpose.xlu0.b32.cont [4/16] 0.0, 128
        %1106 = vxpose.xlu0.b32.cont [5/16] 0.0, 128
        %1107 = vxpose.xlu0.b32.cont [6/16] 0.0, 128
        %1108 = vxpose.xlu0.b32.cont [7/16] 0.0, 128
        %1109 = vxpose.xlu0.b32.cont [8/16] 0.0, 128
        %1110 = vxpose.xlu0.b32.cont [9/16] 0.0, 128
        %1111 = vxpose.xlu0.b32.cont [10/16] 0.0, 128
        %1112 = vxpose.xlu0.b32.cont [11/16] 0.0, 128
        %1113 = vxpose.xlu0.b32.cont [12/16] 0.0, 128
        %1114 = vxpose.xlu0.b32.cont [13/16] 0.0, 128
        %1115 = vxpose.xlu0.b32.cont [14/16] 0.0, 128
        %1116 = vxpose.xlu0.b32.cont [15/16] 0.0, 128
        %1117 = vxpose.xlu0.b32.end [16/16] 0.0, 128
        %v1118 = vpop.trf.xlu0
        %v1119 = vpop.trf.xlu0
        %v1120 = vpop.trf.xlu0
        %v1121 = vpop.trf.xlu0
        %v1122 = vpop.trf.xlu0
        %v1123 = vpop.trf.xlu0
        %v1124 = vpop.trf.xlu0
        %v1125 = vpop.trf.xlu0
        %v1126 = vpop.trf.xlu0
        %v1127 = vpop.trf.xlu0
        %v1128 = vpop.trf.xlu0
        %v1129 = vpop.trf.xlu0
        %v1130 = vpop.trf.xlu0
        %v1131 = vpop.trf.xlu0
        %v1132 = vpop.trf.xlu0
        %v1133 = vpop.trf.xlu0
        %vm1134 = vcmask 130048
        %v1136 = vsel %vm1134, %v1118, 0
        %v1139 = vsel %vm1134, %v1119, 0
        %v1142 = vsel %vm1134, %v1120, 0
        %v1145 = vsel %vm1134, %v1121, 0
        %v1148 = vsel %vm1134, %v1122, 0
        %v1151 = vsel %vm1134, %v1123, 0
        %v1154 = vsel %vm1134, %v1124, 0
        %v1157 = vsel %vm1134, %v1125, 0
        %v1160 = vsel %vm1134, %v1126, 0
        %v1163 = vsel %vm1134, %v1127, 0
        %v1166 = vsel %vm1134, %v1128, 0
        %v1169 = vsel %vm1134, %v1129, 0
        %v1172 = vsel %vm1134, %v1130, 0
        %v1175 = vsel %vm1134, %v1131, 0
        %v1178 = vsel %vm1134, %v1132, 0
        %v1181 = vsel %vm1134, %v1133, 0
        %1183 = vmatprep.subr.mxu0 %v1099
        %1184 = vmatpush1.msra.mxu0 %v1098
        %1185 = vmatprep.subr.mxu0 %v1101
        %1186 = vmatpush1.msra.mxu0 %v1100
        %1187 = vmatprep.subr.mxu0 0.0
        %1188 = vmatpush1.msra.mxu0 0.0
        %1189 = vmatprep.subr.mxu0 0.0
        %1190 = vmatpush1.msra.mxu0 0.0
        %1191 = vmatprep.subr.mxu0 0.0
        %1192 = vmatpush1.msra.mxu0 0.0
        %1193 = vmatprep.subr.mxu0 0.0
        %1194 = vmatpush1.msra.mxu0 0.0
        %1195 = vmatprep.subr.mxu0 0.0
        %1196 = vmatpush1.msra.mxu0 0.0
        %1197 = vmatprep.subr.mxu0 0.0
        %1198 = vmatpush1.msra.mxu0 0.0
        %1199 = vmatprep.subr.mxu0 0.0
        %1200 = vmatpush1.msra.mxu0 0.0
        %1201 = vmatprep.subr.mxu0 0.0
        %1202 = vmatpush1.msra.mxu0 0.0
        %1203 = vmatprep.subr.mxu0 0.0
        %1204 = vmatpush1.msra.mxu0 0.0
        %1205 = vmatprep.subr.mxu0 0.0
        %1206 = vmatpush1.msra.mxu0 0.0
        %1207 = vmatprep.subr.mxu0 0.0
        %1208 = vmatpush1.msra.mxu0 0.0
        %1209 = vmatprep.subr.mxu0 0.0
        %1210 = vmatpush1.msra.mxu0 0.0
        %1211 = vmatprep.subr.mxu0 0.0
        %1212 = vmatpush1.msra.mxu0 0.0
        %1213 = vmatprep.subr.mxu0 0.0
        %1214 = vmatpush1.msra.mxu0 0.0
        %1215 = vmatprep.subr.mxu0 0.0
        %1216 = vmatpush1.msra.mxu0 0.0
        %1217 = vmatprep.subr.mxu0 0.0
        %1218 = vmatpush1.msra.mxu0 0.0
        %1219 = vmatprep.subr.mxu0 0.0
        %1220 = vmatpush1.msra.mxu0 0.0
        %1221 = vmatprep.subr.mxu0 0.0
        %1222 = vmatpush1.msra.mxu0 0.0
        %1223 = vmatprep.subr.mxu0 0.0
        %1224 = vmatpush1.msra.mxu0 0.0
        %1225 = vmatprep.subr.mxu0 0.0
        %1226 = vmatpush1.msra.mxu0 0.0
        %1227 = vmatprep.subr.mxu0 0.0
        %1228 = vmatpush1.msra.mxu0 0.0
        %1229 = vmatprep.subr.mxu0 0.0
        %1230 = vmatpush1.msra.mxu0 0.0
        %1231 = vmatprep.subr.mxu0 0.0
        %1232 = vmatpush1.msra.mxu0 0.0
        %1233 = vmatprep.subr.mxu0 0.0
        %1234 = vmatpush1.msra.mxu0 0.0
        %1235 = vmatprep.subr.mxu0 0.0
        %1236 = vmatpush1.msra.mxu0 0.0
        %1237 = vmatprep.subr.mxu0 0.0
        %1238 = vmatpush1.msra.mxu0 0.0
        %1239 = vmatprep.subr.mxu0 0.0
        %1240 = vmatpush1.msra.mxu0 0.0
        %1241 = vmatprep.subr.mxu0 0.0
        %1242 = vmatpush1.msra.mxu0 0.0
        %1243 = vmatprep.subr.mxu0 0.0
        %1244 = vmatpush1.msra.mxu0 0.0
        %1245 = vmatprep.subr.mxu0 0.0
        %1246 = vmatpush1.msra.mxu0 0.0
        %1247 = vmatprep.mubr.f32.mxu0 0.0
        %1248 = vmatmul.mubr.f32.gmra.mrb[0].mxu0 %v1136
        %v1249 = vpop.f32.mrb[0].mxu0
        %v1250 = vadd.f32 0.0, %v1249
        %v1251 = vpop.f32.mrb[0].mxu0
        %v1252 = vadd.f32 0.0, %v1251
        %1253 = vmatprep.mubr.f32.mxu0 0.0
        %1254 = vmatmul.mubr.f32.gmra.mrb[0].mxu0 %v1139
        %v1255 = vpop.f32.mrb[0].mxu0
        %v1256 = vadd.f32 0.0, %v1255
        %v1257 = vpop.f32.mrb[0].mxu0
        %v1258 = vadd.f32 0.0, %v1257
        %1259 = vmatprep.mubr.f32.mxu0 0.0
        %1260 = vmatmul.mubr.f32.gmra.mrb[0].mxu0 %v1142
        %v1261 = vpop.f32.mrb[0].mxu0
        %v1262 = vadd.f32 0.0, %v1261
        %v1263 = vpop.f32.mrb[0].mxu0
        %v1264 = vadd.f32 0.0, %v1263
        %1265 = vmatprep.mubr.f32.mxu0 0.0
        %1266 = vmatmul.mubr.f32.gmra.mrb[0].mxu0 %v1145
        %v1267 = vpop.f32.mrb[0].mxu0
        %v1268 = vadd.f32 0.0, %v1267
        %v1269 = vpop.f32.mrb[0].mxu0
        %v1270 = vadd.f32 0.0, %v1269
        %1271 = vmatprep.mubr.f32.mxu0 0.0
        %1272 = vmatmul.mubr.f32.gmra.mrb[0].mxu0 %v1148
        %v1273 = vpop.f32.mrb[0].mxu0
        %v1274 = vadd.f32 0.0, %v1273
        %v1275 = vpop.f32.mrb[0].mxu0
        %v1276 = vadd.f32 0.0, %v1275
        %1277 = vmatprep.mubr.f32.mxu0 0.0
        %1278 = vmatmul.mubr.f32.gmra.mrb[0].mxu0 %v1151
        %v1279 = vpop.f32.mrb[0].mxu0
        %v1280 = vadd.f32 0.0, %v1279
        %v1281 = vpop.f32.mrb[0].mxu0
        %v1282 = vadd.f32 0.0, %v1281
        %1283 = vmatprep.mubr.f32.mxu0 0.0
        %1284 = vmatmul.mubr.f32.gmra.mrb[0].mxu0 %v1154
        %v1285 = vpop.f32.mrb[0].mxu0
        %v1286 = vadd.f32 0.0, %v1285
        %v1287 = vpop.f32.mrb[0].mxu0
        %v1288 = vadd.f32 0.0, %v1287
        %1289 = vmatprep.mubr.f32.mxu0 0.0
        %1290 = vmatmul.mubr.f32.gmra.mrb[0].mxu0 %v1157
        %v1291 = vpop.f32.mrb[0].mxu0
        %v1292 = vadd.f32 0.0, %v1291
        %v1293 = vpop.f32.mrb[0].mxu0
        %v1294 = vadd.f32 0.0, %v1293
        %1295 = vmatprep.mubr.f32.mxu0 0.0
        %1296 = vmatmul.mubr.f32.gmra.mrb[0].mxu0 %v1160
        %v1297 = vpop.f32.mrb[0].mxu0
        %v1298 = vadd.f32 0.0, %v1297
        %v1299 = vpop.f32.mrb[0].mxu0
        %v1300 = vadd.f32 0.0, %v1299
        %1301 = vmatprep.mubr.f32.mxu0 0.0
        %1302 = vmatmul.mubr.f32.gmra.mrb[0].mxu0 %v1163
        %v1303 = vpop.f32.mrb[0].mxu0
        %v1304 = vadd.f32 0.0, %v1303
        %v1305 = vpop.f32.mrb[0].mxu0
        %v1306 = vadd.f32 0.0, %v1305
        %1307 = vmatprep.mubr.f32.mxu0 0.0
        %1308 = vmatmul.mubr.f32.gmra.mrb[0].mxu0 %v1166
        %v1309 = vpop.f32.mrb[0].mxu0
        %v1310 = vadd.f32 0.0, %v1309
        %v1311 = vpop.f32.mrb[0].mxu0
        %v1312 = vadd.f32 0.0, %v1311
        %1313 = vmatprep.mubr.f32.mxu0 0.0
        %1314 = vmatmul.mubr.f32.gmra.mrb[0].mxu0 %v1169
        %v1315 = vpop.f32.mrb[0].mxu0
        %v1316 = vadd.f32 0.0, %v1315
        %v1317 = vpop.f32.mrb[0].mxu0
        %v1318 = vadd.f32 0.0, %v1317
        %1319 = vmatprep.mubr.f32.mxu0 0.0
        %1320 = vmatmul.mubr.f32.gmra.mrb[0].mxu0 %v1172
        %v1321 = vpop.f32.mrb[0].mxu0
        %v1322 = vadd.f32 0.0, %v1321
        %v1323 = vpop.f32.mrb[0].mxu0
        %v1324 = vadd.f32 0.0, %v1323
        %1325 = vmatprep.mubr.f32.mxu0 0.0
        %1326 = vmatmul.mubr.f32.gmra.mrb[0].mxu0 %v1175
        %v1327 = vpop.f32.mrb[0].mxu0
        %v1328 = vadd.f32 0.0, %v1327
        %v1329 = vpop.f32.mrb[0].mxu0
        %v1330 = vadd.f32 0.0, %v1329
        %1331 = vmatprep.mubr.f32.mxu0 0.0
        %1332 = vmatmul.mubr.f32.gmra.mrb[0].mxu0 %v1178
        %v1333 = vpop.f32.mrb[0].mxu0
        %v1334 = vadd.f32 0.0, %v1333
        %v1335 = vpop.f32.mrb[0].mxu0
        %v1336 = vadd.f32 0.0, %v1335
        %1337 = vmatprep.mubr.f32.mxu0 0.0
        %1338 = vmatmul.mubr.f32.gmra.mrb[0].mxu0 %v1181
        %v1339 = vpop.f32.mrb[0].mxu0
        %v1340 = vadd.f32 0.0, %v1339
        %v1341 = vpop.f32.mrb[0].mxu0
        %v1342 = vadd.f32 0.0, %v1341
        %1343 = vdwg.mxu0
        %1344 = vxpose.xlu0.b32.start [1/16] %v1088, 128
        %1345 = vxpose.xlu0.b32.cont [2/16] %v1089, 128
        %1346 = vxpose.xlu0.b32.cont [3/16] 0.0, 128
        %1347 = vxpose.xlu0.b32.cont [4/16] 0.0, 128
        %1348 = vxpose.xlu0.b32.cont [5/16] 0.0, 128
        %1349 = vxpose.xlu0.b32.cont [6/16] 0.0, 128
        %1350 = vxpose.xlu0.b32.cont [7/16] 0.0, 128
        %1351 = vxpose.xlu0.b32.cont [8/16] 0.0, 128
        %1352 = vxpose.xlu0.b32.cont [9/16] 0.0, 128
        %1353 = vxpose.xlu0.b32.cont [10/16] 0.0, 128
        %1354 = vxpose.xlu0.b32.cont [11/16] 0.0, 128
        %1355 = vxpose.xlu0.b32.cont [12/16] 0.0, 128
        %1356 = vxpose.xlu0.b32.cont [13/16] 0.0, 128
        %1357 = vxpose.xlu0.b32.cont [14/16] 0.0, 128
        %1358 = vxpose.xlu0.b32.cont [15/16] 0.0, 128
        %1359 = vxpose.xlu0.b32.end [16/16] 0.0, 128
        %v1360 = vpop.trf.xlu0
        %v1361 = vpop.trf.xlu0
        %v1362 = vpop.trf.xlu0
        %v1363 = vpop.trf.xlu0
        %v1364 = vpop.trf.xlu0
        %v1365 = vpop.trf.xlu0
        %v1366 = vpop.trf.xlu0
        %v1367 = vpop.trf.xlu0
        %v1368 = vpop.trf.xlu0
        %v1369 = vpop.trf.xlu0
        %v1370 = vpop.trf.xlu0
        %v1371 = vpop.trf.xlu0
        %v1372 = vpop.trf.xlu0
        %v1373 = vpop.trf.xlu0
        %v1374 = vpop.trf.xlu0
        %v1375 = vpop.trf.xlu0
        %v1377 = vsel %vm1134, %v1360, 0
        %v1380 = vsel %vm1134, %v1361, 0
        %v1383 = vsel %vm1134, %v1362, 0
        %v1386 = vsel %vm1134, %v1363, 0
        %v1389 = vsel %vm1134, %v1364, 0
        %v1392 = vsel %vm1134, %v1365, 0
        %v1395 = vsel %vm1134, %v1366, 0
        %v1398 = vsel %vm1134, %v1367, 0
        %v1401 = vsel %vm1134, %v1368, 0
        %v1404 = vsel %vm1134, %v1369, 0
        %v1407 = vsel %vm1134, %v1370, 0
        %v1410 = vsel %vm1134, %v1371, 0
        %v1413 = vsel %vm1134, %v1372, 0
        %v1416 = vsel %vm1134, %v1373, 0
        %v1419 = vsel %vm1134, %v1374, 0
        %v1422 = vsel %vm1134, %v1375, 0
        %1424 = vmatprep.subr.mxu0 %v1091
        %1425 = vmatpush1.msra.mxu0 %v1090
        %1426 = vmatprep.subr.mxu0 %v1093
        %1427 = vmatpush1.msra.mxu0 %v1092
        %1428 = vmatprep.subr.mxu0 0.0
        %1429 = vmatpush1.msra.mxu0 0.0
        %1430 = vmatprep.subr.mxu0 0.0
        %1431 = vmatpush1.msra.mxu0 0.0
        %1432 = vmatprep.subr.mxu0 0.0
        %1433 = vmatpush1.msra.mxu0 0.0
        %1434 = vmatprep.subr.mxu0 0.0
        %1435 = vmatpush1.msra.mxu0 0.0
        %1436 = vmatprep.subr.mxu0 0.0
        %1437 = vmatpush1.msra.mxu0 0.0
        %1438 = vmatprep.subr.mxu0 0.0
        %1439 = vmatpush1.msra.mxu0 0.0
        %1440 = vmatprep.subr.mxu0 0.0
        %1441 = vmatpush1.msra.mxu0 0.0
        %1442 = vmatprep.subr.mxu0 0.0
        %1443 = vmatpush1.msra.mxu0 0.0
        %1444 = vmatprep.subr.mxu0 0.0
        %1445 = vmatpush1.msra.mxu0 0.0
        %1446 = vmatprep.subr.mxu0 0.0
        %1447 = vmatpush1.msra.mxu0 0.0
        %1448 = vmatprep.subr.mxu0 0.0
        %1449 = vmatpush1.msra.mxu0 0.0
        %1450 = vmatprep.subr.mxu0 0.0
        %1451 = vmatpush1.msra.mxu0 0.0
        %1452 = vmatprep.subr.mxu0 0.0
        %1453 = vmatpush1.msra.mxu0 0.0
        %1454 = vmatprep.subr.mxu0 0.0
        %1455 = vmatpush1.msra.mxu0 0.0
        %1456 = vmatprep.subr.mxu0 0.0
        %1457 = vmatpush1.msra.mxu0 0.0
        %1458 = vmatprep.subr.mxu0 0.0
        %1459 = vmatpush1.msra.mxu0 0.0
        %1460 = vmatprep.subr.mxu0 0.0
        %1461 = vmatpush1.msra.mxu0 0.0
        %1462 = vmatprep.subr.mxu0 0.0
        %1463 = vmatpush1.msra.mxu0 0.0
        %1464 = vmatprep.subr.mxu0 0.0
        %1465 = vmatpush1.msra.mxu0 0.0
        %1466 = vmatprep.subr.mxu0 0.0
        %1467 = vmatpush1.msra.mxu0 0.0
        %1468 = vmatprep.subr.mxu0 0.0
        %1469 = vmatpush1.msra.mxu0 0.0
        %1470 = vmatprep.subr.mxu0 0.0
        %1471 = vmatpush1.msra.mxu0 0.0
        %1472 = vmatprep.subr.mxu0 0.0
        %1473 = vmatpush1.msra.mxu0 0.0
        %1474 = vmatprep.subr.mxu0 0.0
        %1475 = vmatpush1.msra.mxu0 0.0
        %1476 = vmatprep.subr.mxu0 0.0
        %1477 = vmatpush1.msra.mxu0 0.0
        %1478 = vmatprep.subr.mxu0 0.0
        %1479 = vmatpush1.msra.mxu0 0.0
        %1480 = vmatprep.subr.mxu0 0.0
        %1481 = vmatpush1.msra.mxu0 0.0
        %1482 = vmatprep.subr.mxu0 0.0
        %1483 = vmatpush1.msra.mxu0 0.0
        %1484 = vmatprep.subr.mxu0 0.0
        %1485 = vmatpush1.msra.mxu0 0.0
        %1486 = vmatprep.subr.mxu0 0.0
        %1487 = vmatpush1.msra.mxu0 0.0
        %1488 = vmatprep.mubr.f32.mxu0 0.0
        %1489 = vmatmul.mubr.f32.gmra.mrb[0].mxu0 %v1377
        %v1490 = vpop.f32.mrb[0].mxu0
        %v1491 = vadd.f32 %v1250, %v1490
        %v1492 = vpop.f32.mrb[0].mxu0
        %v1493 = vadd.f32 %v1252, %v1492
        %1494 = vmatprep.mubr.f32.mxu0 0.0
        %1495 = vmatmul.mubr.f32.gmra.mrb[0].mxu0 %v1380
        %v1496 = vpop.f32.mrb[0].mxu0
        %v1497 = vadd.f32 %v1256, %v1496
        %v1498 = vpop.f32.mrb[0].mxu0
        %v1499 = vadd.f32 %v1258, %v1498
        %1500 = vmatprep.mubr.f32.mxu0 0.0
        %1501 = vmatmul.mubr.f32.gmra.mrb[0].mxu0 %v1383
        %v1502 = vpop.f32.mrb[0].mxu0
        %v1503 = vadd.f32 %v1262, %v1502
        %v1504 = vpop.f32.mrb[0].mxu0
        %v1505 = vadd.f32 %v1264, %v1504
        %1506 = vmatprep.mubr.f32.mxu0 0.0
        %1507 = vmatmul.mubr.f32.gmra.mrb[0].mxu0 %v1386
        %v1508 = vpop.f32.mrb[0].mxu0
        %v1509 = vadd.f32 %v1268, %v1508
        %v1510 = vpop.f32.mrb[0].mxu0
        %v1511 = vadd.f32 %v1270, %v1510
        %1512 = vmatprep.mubr.f32.mxu0 0.0
        %1513 = vmatmul.mubr.f32.gmra.mrb[0].mxu0 %v1389
        %v1514 = vpop.f32.mrb[0].mxu0
        %v1515 = vadd.f32 %v1274, %v1514
        %v1516 = vpop.f32.mrb[0].mxu0
        %v1517 = vadd.f32 %v1276, %v1516
        %1518 = vmatprep.mubr.f32.mxu0 0.0
        %1519 = vmatmul.mubr.f32.gmra.mrb[0].mxu0 %v1392
        %v1520 = vpop.f32.mrb[0].mxu0
        %v1521 = vadd.f32 %v1280, %v1520
        %v1522 = vpop.f32.mrb[0].mxu0
        %v1523 = vadd.f32 %v1282, %v1522
        %1524 = vmatprep.mubr.f32.mxu0 0.0
        %1525 = vmatmul.mubr.f32.gmra.mrb[0].mxu0 %v1395
        %v1526 = vpop.f32.mrb[0].mxu0
        %v1527 = vadd.f32 %v1286, %v1526
        %v1528 = vpop.f32.mrb[0].mxu0
        %v1529 = vadd.f32 %v1288, %v1528
        %1530 = vmatprep.mubr.f32.mxu0 0.0
        %1531 = vmatmul.mubr.f32.gmra.mrb[0].mxu0 %v1398
        %v1532 = vpop.f32.mrb[0].mxu0
        %v1533 = vadd.f32 %v1292, %v1532
        %v1534 = vpop.f32.mrb[0].mxu0
        %v1535 = vadd.f32 %v1294, %v1534
        %1536 = vmatprep.mubr.f32.mxu0 0.0
        %1537 = vmatmul.mubr.f32.gmra.mrb[0].mxu0 %v1401
        %v1538 = vpop.f32.mrb[0].mxu0
        %v1539 = vadd.f32 %v1298, %v1538
        %v1540 = vpop.f32.mrb[0].mxu0
        %v1541 = vadd.f32 %v1300, %v1540
        %1542 = vmatprep.mubr.f32.mxu0 0.0
        %1543 = vmatmul.mubr.f32.gmra.mrb[0].mxu0 %v1404
        %v1544 = vpop.f32.mrb[0].mxu0
        %v1545 = vadd.f32 %v1304, %v1544
        %v1546 = vpop.f32.mrb[0].mxu0
        %v1547 = vadd.f32 %v1306, %v1546
        %1548 = vmatprep.mubr.f32.mxu0 0.0
        %1549 = vmatmul.mubr.f32.gmra.mrb[0].mxu0 %v1407
        %v1550 = vpop.f32.mrb[0].mxu0
        %v1551 = vadd.f32 %v1310, %v1550
        %v1552 = vpop.f32.mrb[0].mxu0
        %v1553 = vadd.f32 %v1312, %v1552
        %1554 = vmatprep.mubr.f32.mxu0 0.0
        %1555 = vmatmul.mubr.f32.gmra.mrb[0].mxu0 %v1410
        %v1556 = vpop.f32.mrb[0].mxu0
        %v1557 = vadd.f32 %v1316, %v1556
        %v1558 = vpop.f32.mrb[0].mxu0
        %v1559 = vadd.f32 %v1318, %v1558
        %1560 = vmatprep.mubr.f32.mxu0 0.0
        %1561 = vmatmul.mubr.f32.gmra.mrb[0].mxu0 %v1413
        %v1562 = vpop.f32.mrb[0].mxu0
        %v1563 = vadd.f32 %v1322, %v1562
        %v1564 = vpop.f32.mrb[0].mxu0
        %v1565 = vadd.f32 %v1324, %v1564
        %1566 = vmatprep.mubr.f32.mxu0 0.0
        %1567 = vmatmul.mubr.f32.gmra.mrb[0].mxu0 %v1416
        %v1568 = vpop.f32.mrb[0].mxu0
        %v1569 = vadd.f32 %v1328, %v1568
        %v1570 = vpop.f32.mrb[0].mxu0
        %v1571 = vadd.f32 %v1330, %v1570
        %1572 = vmatprep.mubr.f32.mxu0 0.0
        %1573 = vmatmul.mubr.f32.gmra.mrb[0].mxu0 %v1419
        %v1574 = vpop.f32.mrb[0].mxu0
        %v1575 = vadd.f32 %v1334, %v1574
        %v1576 = vpop.f32.mrb[0].mxu0
        %v1577 = vadd.f32 %v1336, %v1576
        %1578 = vmatprep.mubr.f32.mxu0 0.0
        %1579 = vmatmul.mubr.f32.gmra.mrb[0].mxu0 %v1422
        %v1580 = vpop.f32.mrb[0].mxu0
        %v1581 = vadd.f32 %v1340, %v1580
        %v1582 = vpop.f32.mrb[0].mxu0
        %v1583 = vadd.f32 %v1342, %v1582
        %1584 = vdwg.mxu0
        %v1585 = vld [vmem:[%s644] sm:$0xff]
        %v1586 = vld [vmem:[%s644 + $0x8] sm:$0xff]
        %v1587 = vld [vmem:[%s644 + $0x10] sm:$0xff]
        %v1588 = vld [vmem:[%s644 + $0x18] sm:$0xff]
        %v1589 = vld [vmem:[%s644 + $0x20] sm:$0xff]
        %v1590 = vld [vmem:[%s644 + $0x28] sm:$0xff]
        %v1591 = vld [vmem:[%s644 + $0x30] sm:$0xff]
        %v1592 = vld [vmem:[%s644 + $0x38] sm:$0xff]
        %v1593 = vld [vmem:[%s644 + $0x40] sm:$0xff]
        %v1594 = vld [vmem:[%s644 + $0x48] sm:$0xff]
        %v1595 = vld [vmem:[%s644 + $0x50] sm:$0xff]
        %v1596 = vld [vmem:[%s644 + $0x58] sm:$0xff]
        %v1597 = vld [vmem:[%s644 + $0x60] sm:$0xff]
        %v1598 = vld [vmem:[%s644 + $0x68] sm:$0xff]
        %v1599 = vld [vmem:[%s644 + $0x70] sm:$0xff]
        %v1600 = vld [vmem:[%s644 + $0x78] sm:$0xff]
        %v1601 = vpack.c.bf16 %v1586, %v1585
        %v1602 = vpack.c.bf16 %v1588, %v1587
        %v1603 = vpack.c.bf16 %v1590, %v1589
        %v1604 = vpack.c.bf16 %v1592, %v1591
        %v1605 = vpack.c.bf16 %v1594, %v1593
        %v1606 = vpack.c.bf16 %v1596, %v1595
        %v1607 = vpack.c.bf16 %v1598, %v1597
        %v1608 = vpack.c.bf16 %v1600, %v1599
        %v1609 = vld [vmem:[%s660] sm:$0xff]
        %v1611 = vunpack.c.l.b16 %v1609
        %v1612 = vunpack.c.h.b16 %v1609
        %v1613 = vpack.c.b16 %v1611, %v1611
        %v1614 = vpack.c.b16 %v1612, %v1612
        %vm1615 = vcmask 64512
        %v1617 = vsel %vm1615, %v1601, 0
        %v1620 = vsel %vm1615, %v1602, 0
        %v1623 = vsel %vm1615, %v1603, 0
        %v1626 = vsel %vm1615, %v1604, 0
        %v1629 = vsel %vm1615, %v1605, 0
        %v1632 = vsel %vm1615, %v1606, 0
        %v1635 = vsel %vm1615, %v1607, 0
        %v1638 = vsel %vm1615, %v1608, 0
        %vm1640 = vcmask 1043456
        %v1642 = vsel %vm1640, %v1613, 0
        %v1645 = vsel %vm1640, %v1614, 0
        %1647 = vmatprep.subr.bf16.mxu0 %v1645
        %1648 = vmatpush1.bf16.msra.mxu0 %v1642
        %1649 = vmatprep.subr.bf16.mxu0 0
        %1650 = vmatpush1.bf16.msra.mxu0 0
        %1651 = vmatprep.subr.bf16.mxu0 0
        %1652 = vmatpush1.bf16.msra.mxu0 0
        %1653 = vmatprep.subr.bf16.mxu0 0
        %1654 = vmatpush1.bf16.msra.mxu0 0
        %1655 = vmatprep.subr.bf16.mxu0 0
        %1656 = vmatpush1.bf16.msra.mxu0 0
        %1657 = vmatprep.subr.bf16.mxu0 0
        %1658 = vmatpush1.bf16.msra.mxu0 0
        %1659 = vmatprep.subr.bf16.mxu0 0
        %1660 = vmatpush1.bf16.msra.mxu0 0
        %1661 = vmatprep.subr.bf16.mxu0 0
        %1662 = vmatpush1.bf16.msra.mxu0 0
        %1663 = vmatprep.subr.bf16.mxu0 0
        %1664 = vmatpush1.bf16.msra.mxu0 0
        %1665 = vmatprep.subr.bf16.mxu0 0
        %1666 = vmatpush1.bf16.msra.mxu0 0
        %1667 = vmatprep.subr.bf16.mxu0 0
        %1668 = vmatpush1.bf16.msra.mxu0 0
        %1669 = vmatprep.subr.bf16.mxu0 0
        %1670 = vmatpush1.bf16.msra.mxu0 0
        %1671 = vmatprep.subr.bf16.mxu0 0
        %1672 = vmatpush1.bf16.msra.mxu0 0
        %1673 = vmatprep.subr.bf16.mxu0 0
        %1674 = vmatpush1.bf16.msra.mxu0 0
        %1675 = vmatprep.subr.bf16.mxu0 0
        %1676 = vmatpush1.bf16.msra.mxu0 0
        %1677 = vmatprep.subr.bf16.mxu0 0
        %1678 = vmatpush1.bf16.msra.mxu0 0
        %1679 = vmatprep.mubr.bf16.mxu0 0
        %1680 = vmatmul.mubr.bf16.gmra.mrb[0].mxu0 %v1617
        %v1681 = vpop.f32.mrb[0].mxu0
        %v1682 = vadd.f32 0.0, %v1681
        %v1683 = vpop.f32.mrb[0].mxu0
        %v1684 = vadd.f32 0.0, %v1683
        %v1685 = vpop.f32.mrb[0].mxu0
        %v1686 = vadd.f32 0.0, %v1685
        %v1687 = vpop.f32.mrb[0].mxu0
        %v1688 = vadd.f32 0.0, %v1687
        %1689 = vmatprep.mubr.bf16.mxu0 0
        %1690 = vmatmul.mubr.bf16.gmra.mrb[0].mxu0 %v1620
        %v1691 = vpop.f32.mrb[0].mxu0
        %v1692 = vadd.f32 0.0, %v1691
        %v1693 = vpop.f32.mrb[0].mxu0
        %v1694 = vadd.f32 0.0, %v1693
        %v1695 = vpop.f32.mrb[0].mxu0
        %v1696 = vadd.f32 0.0, %v1695
        %v1697 = vpop.f32.mrb[0].mxu0
        %v1698 = vadd.f32 0.0, %v1697
        %1699 = vmatprep.mubr.bf16.mxu0 0
        %1700 = vmatmul.mubr.bf16.gmra.mrb[0].mxu0 %v1623
        %v1701 = vpop.f32.mrb[0].mxu0
        %v1702 = vadd.f32 0.0, %v1701
        %v1703 = vpop.f32.mrb[0].mxu0
        %v1704 = vadd.f32 0.0, %v1703
        %v1705 = vpop.f32.mrb[0].mxu0
        %v1706 = vadd.f32 0.0, %v1705
        %v1707 = vpop.f32.mrb[0].mxu0
        %v1708 = vadd.f32 0.0, %v1707
        %1709 = vmatprep.mubr.bf16.mxu0 0
        %1710 = vmatmul.mubr.bf16.gmra.mrb[0].mxu0 %v1626
        %v1711 = vpop.f32.mrb[0].mxu0
        %v1712 = vadd.f32 0.0, %v1711
        %v1713 = vpop.f32.mrb[0].mxu0
        %v1714 = vadd.f32 0.0, %v1713
        %v1715 = vpop.f32.mrb[0].mxu0
        %v1716 = vadd.f32 0.0, %v1715
        %v1717 = vpop.f32.mrb[0].mxu0
        %v1718 = vadd.f32 0.0, %v1717
        %1719 = vmatprep.mubr.bf16.mxu0 0
        %1720 = vmatmul.mubr.bf16.gmra.mrb[0].mxu0 %v1629
        %v1721 = vpop.f32.mrb[0].mxu0
        %v1722 = vadd.f32 0.0, %v1721
        %v1723 = vpop.f32.mrb[0].mxu0
        %v1724 = vadd.f32 0.0, %v1723
        %v1725 = vpop.f32.mrb[0].mxu0
        %v1726 = vadd.f32 0.0, %v1725
        %v1727 = vpop.f32.mrb[0].mxu0
        %v1728 = vadd.f32 0.0, %v1727
        %1729 = vmatprep.mubr.bf16.mxu0 0
        %1730 = vmatmul.mubr.bf16.gmra.mrb[0].mxu0 %v1632
        %v1731 = vpop.f32.mrb[0].mxu0
        %v1732 = vadd.f32 0.0, %v1731
        %v1733 = vpop.f32.mrb[0].mxu0
        %v1734 = vadd.f32 0.0, %v1733
        %v1735 = vpop.f32.mrb[0].mxu0
        %v1736 = vadd.f32 0.0, %v1735
        %v1737 = vpop.f32.mrb[0].mxu0
        %v1738 = vadd.f32 0.0, %v1737
        %1739 = vmatprep.mubr.bf16.mxu0 0
        %1740 = vmatmul.mubr.bf16.gmra.mrb[0].mxu0 %v1635
        %v1741 = vpop.f32.mrb[0].mxu0
        %v1742 = vadd.f32 0.0, %v1741
        %v1743 = vpop.f32.mrb[0].mxu0
        %v1744 = vadd.f32 0.0, %v1743
        %v1745 = vpop.f32.mrb[0].mxu0
        %v1746 = vadd.f32 0.0, %v1745
        %v1747 = vpop.f32.mrb[0].mxu0
        %v1748 = vadd.f32 0.0, %v1747
        %1749 = vmatprep.mubr.bf16.mxu0 0
        %1750 = vmatmul.mubr.bf16.gmra.mrb[0].mxu0 %v1638
        %v1751 = vpop.f32.mrb[0].mxu0
        %v1752 = vadd.f32 0.0, %v1751
        %v1753 = vpop.f32.mrb[0].mxu0
        %v1754 = vadd.f32 0.0, %v1753
        %v1755 = vpop.f32.mrb[0].mxu0
        %v1756 = vadd.f32 0.0, %v1755
        %v1757 = vpop.f32.mrb[0].mxu0
        %v1758 = vadd.f32 0.0, %v1757
        %1759 = vdwg.mxu0
        %v1760 = vadd.f32 %v1491, %v1682
        %v1761 = vadd.f32 %v1493, %v1684
        %v1762 = vadd.f32 %v1497, %v1686
        %v1763 = vadd.f32 %v1499, %v1688
        %v1764 = vadd.f32 %v1503, %v1692
        %v1765 = vadd.f32 %v1505, %v1694
        %v1766 = vadd.f32 %v1509, %v1696
        %v1767 = vadd.f32 %v1511, %v1698
        %v1768 = vadd.f32 %v1515, %v1702
        %v1769 = vadd.f32 %v1517, %v1704
        %v1770 = vadd.f32 %v1521, %v1706
        %v1771 = vadd.f32 %v1523, %v1708
        %v1772 = vadd.f32 %v1527, %v1712
        %v1773 = vadd.f32 %v1529, %v1714
        %v1774 = vadd.f32 %v1533, %v1716
        %v1775 = vadd.f32 %v1535, %v1718
        %v1776 = vadd.f32 %v1539, %v1722
        %v1777 = vadd.f32 %v1541, %v1724
        %v1778 = vadd.f32 %v1545, %v1726
        %v1779 = vadd.f32 %v1547, %v1728
        %v1780 = vadd.f32 %v1551, %v1732
        %v1781 = vadd.f32 %v1553, %v1734
        %v1782 = vadd.f32 %v1557, %v1736
        %v1783 = vadd.f32 %v1559, %v1738
        %v1784 = vadd.f32 %v1563, %v1742
        %v1785 = vadd.f32 %v1565, %v1744
        %v1786 = vadd.f32 %v1569, %v1746
        %v1787 = vadd.f32 %v1571, %v1748
        %v1788 = vadd.f32 %v1575, %v1752
        %v1789 = vadd.f32 %v1577, %v1754
        %v1790 = vadd.f32 %v1581, %v1756
        %v1791 = vadd.f32 %v1583, %v1758
        %v1792 = vld [vmem:[%s664] sm:$0x3]
        %v1794 = vlaneseq
        %v1795 = vshrl.u32 %v1794, 7
        %v1796 = vsub.s32 0, %v1795
        %v1797 = vrot.slane %v1792, %v1796
        %v1798 = vlaneseq
        %v1799 = vshrl.u32 %v1798, 7
        %v1800 = vsub.s32 1, %v1799
        %v1801 = vrot.slane %v1792, %v1800
        %v1804 = vadd.f32 %v1760, %v1797
        %v1805 = vadd.f32 %v1761, %v1801
        %v1806 = vadd.f32 %v1762, %v1797
        %v1807 = vadd.f32 %v1763, %v1801
        %v1808 = vadd.f32 %v1764, %v1797
        %v1809 = vadd.f32 %v1765, %v1801
        %v1810 = vadd.f32 %v1766, %v1797
        %v1811 = vadd.f32 %v1767, %v1801
        %v1812 = vadd.f32 %v1768, %v1797
        %v1813 = vadd.f32 %v1769, %v1801
        %v1814 = vadd.f32 %v1770, %v1797
        %v1815 = vadd.f32 %v1771, %v1801
        %v1816 = vadd.f32 %v1772, %v1797
        %v1817 = vadd.f32 %v1773, %v1801
        %v1818 = vadd.f32 %v1774, %v1797
        %v1819 = vadd.f32 %v1775, %v1801
        %v1820 = vadd.f32 %v1776, %v1797
        %v1821 = vadd.f32 %v1777, %v1801
        %v1822 = vadd.f32 %v1778, %v1797
        %v1823 = vadd.f32 %v1779, %v1801
        %v1824 = vadd.f32 %v1780, %v1797
        %v1825 = vadd.f32 %v1781, %v1801
        %v1826 = vadd.f32 %v1782, %v1797
        %v1827 = vadd.f32 %v1783, %v1801
        %v1828 = vadd.f32 %v1784, %v1797
        %v1829 = vadd.f32 %v1785, %v1801
        %v1830 = vadd.f32 %v1786, %v1797
        %v1831 = vadd.f32 %v1787, %v1801
        %v1832 = vadd.f32 %v1788, %v1797
        %v1833 = vadd.f32 %v1789, %v1801
        %v1834 = vadd.f32 %v1790, %v1797
        %v1835 = vadd.f32 %v1791, %v1801
        %v1836 = vxor.u32 %v1804, 2147483648
        %v1837 = vxor.u32 %v1806, 2147483648
        %v1838 = vxor.u32 %v1808, 2147483648
        %v1839 = vxor.u32 %v1810, 2147483648
        %v1840 = vxor.u32 %v1812, 2147483648
        %v1841 = vxor.u32 %v1814, 2147483648
        %v1842 = vxor.u32 %v1816, 2147483648
        %v1843 = vxor.u32 %v1818, 2147483648
        %v1844 = vxor.u32 %v1820, 2147483648
        %v1845 = vxor.u32 %v1822, 2147483648
        %v1846 = vxor.u32 %v1824, 2147483648
        %v1847 = vxor.u32 %v1826, 2147483648
        %v1848 = vxor.u32 %v1828, 2147483648
        %v1849 = vxor.u32 %v1830, 2147483648
        %v1850 = vxor.u32 %v1832, 2147483648
        %v1851 = vxor.u32 %v1834, 2147483648
        %v1852 = vmul.f32 %v1836, 1.442695
        %v1853 = vpow.pop %v1852
        %v1854 = vmul.f32 %v1837, 1.442695
        %v1855 = vpow.pop %v1854
        %v1856 = vmul.f32 %v1838, 1.442695
        %v1857 = vpow.pop %v1856
        %v1858 = vmul.f32 %v1839, 1.442695
        %v1859 = vpow.pop %v1858
        %v1860 = vmul.f32 %v1840, 1.442695
        %v1861 = vpow.pop %v1860
        %v1862 = vmul.f32 %v1841, 1.442695
        %v1863 = vpow.pop %v1862
        %v1864 = vmul.f32 %v1842, 1.442695
        %v1865 = vpow.pop %v1864
        %v1866 = vmul.f32 %v1843, 1.442695
        %v1867 = vpow.pop %v1866
        %v1868 = vmul.f32 %v1844, 1.442695
        %v1869 = vpow.pop %v1868
        %v1870 = vmul.f32 %v1845, 1.442695
        %v1871 = vpow.pop %v1870
        %v1872 = vmul.f32 %v1846, 1.442695
        %v1873 = vpow.pop %v1872
        %v1874 = vmul.f32 %v1847, 1.442695
        %v1875 = vpow.pop %v1874
        %v1876 = vmul.f32 %v1848, 1.442695
        %v1877 = vpow.pop %v1876
        %v1878 = vmul.f32 %v1849, 1.442695
        %v1879 = vpow.pop %v1878
        %v1880 = vmul.f32 %v1850, 1.442695
        %v1881 = vpow.pop %v1880
        %v1882 = vmul.f32 %v1851, 1.442695
        %v1883 = vpow.pop %v1882
        %v1884 = vadd.f32 %v1853, 1.0
        %v1885 = vadd.f32 %v1855, 1.0
        %v1886 = vadd.f32 %v1857, 1.0
        %v1887 = vadd.f32 %v1859, 1.0
        %v1888 = vadd.f32 %v1861, 1.0
        %v1889 = vadd.f32 %v1863, 1.0
        %v1890 = vadd.f32 %v1865, 1.0
        %v1891 = vadd.f32 %v1867, 1.0
        %v1892 = vadd.f32 %v1869, 1.0
        %v1893 = vadd.f32 %v1871, 1.0
        %v1894 = vadd.f32 %v1873, 1.0
        %v1895 = vadd.f32 %v1875, 1.0
        %v1896 = vadd.f32 %v1877, 1.0
        %v1897 = vadd.f32 %v1879, 1.0
        %v1898 = vadd.f32 %v1881, 1.0
        %v1899 = vadd.f32 %v1883, 1.0
        %v1900 = vrcp.pop %v1884
        %v1901 = vmul.f32 1.0, %v1900
        %v1902 = vrcp.pop %v1885
        %v1903 = vmul.f32 1.0, %v1902
        %v1904 = vrcp.pop %v1886
        %v1905 = vmul.f32 1.0, %v1904
        %v1906 = vrcp.pop %v1887
        %v1907 = vmul.f32 1.0, %v1906
        %v1908 = vrcp.pop %v1888
        %v1909 = vmul.f32 1.0, %v1908
        %v1910 = vrcp.pop %v1889
        %v1911 = vmul.f32 1.0, %v1910
        %v1912 = vrcp.pop %v1890
        %v1913 = vmul.f32 1.0, %v1912
        %v1914 = vrcp.pop %v1891
        %v1915 = vmul.f32 1.0, %v1914
        %v1916 = vrcp.pop %v1892
        %v1917 = vmul.f32 1.0, %v1916
        %v1918 = vrcp.pop %v1893
        %v1919 = vmul.f32 1.0, %v1918
        %v1920 = vrcp.pop %v1894
        %v1921 = vmul.f32 1.0, %v1920
        %v1922 = vrcp.pop %v1895
        %v1923 = vmul.f32 1.0, %v1922
        %v1924 = vrcp.pop %v1896
        %v1925 = vmul.f32 1.0, %v1924
        %v1926 = vrcp.pop %v1897
        %v1927 = vmul.f32 1.0, %v1926
        %v1928 = vrcp.pop %v1898
        %v1929 = vmul.f32 1.0, %v1928
        %v1930 = vrcp.pop %v1899
        %v1931 = vmul.f32 1.0, %v1930
        %vm1932 = vcmp.gt.f32.partialorder %v1805, 20.0
        %vm1933 = vcmp.gt.f32.partialorder %v1807, 20.0
        %vm1934 = vcmp.gt.f32.partialorder %v1809, 20.0
        %vm1935 = vcmp.gt.f32.partialorder %v1811, 20.0
        %vm1936 = vcmp.gt.f32.partialorder %v1813, 20.0
        %vm1937 = vcmp.gt.f32.partialorder %v1815, 20.0
        %vm1938 = vcmp.gt.f32.partialorder %v1817, 20.0
        %vm1939 = vcmp.gt.f32.partialorder %v1819, 20.0
        %vm1940 = vcmp.gt.f32.partialorder %v1821, 20.0
        %vm1941 = vcmp.gt.f32.partialorder %v1823, 20.0
        %vm1942 = vcmp.gt.f32.partialorder %v1825, 20.0
        %vm1943 = vcmp.gt.f32.partialorder %v1827, 20.0
        %vm1944 = vcmp.gt.f32.partialorder %v1829, 20.0
        %vm1945 = vcmp.gt.f32.partialorder %v1831, 20.0
        %vm1946 = vcmp.gt.f32.partialorder %v1833, 20.0
        %vm1947 = vcmp.gt.f32.partialorder %v1835, 20.0
        %v1948 = vmin.f32 %v1805, 20.0
        %v1949 = vmin.f32 %v1807, 20.0
        %v1950 = vmin.f32 %v1809, 20.0
        %v1951 = vmin.f32 %v1811, 20.0
        %v1952 = vmin.f32 %v1813, 20.0
        %v1953 = vmin.f32 %v1815, 20.0
        %v1954 = vmin.f32 %v1817, 20.0
        %v1955 = vmin.f32 %v1819, 20.0
        %v1956 = vmin.f32 %v1821, 20.0
        %v1957 = vmin.f32 %v1823, 20.0
        %v1958 = vmin.f32 %v1825, 20.0
        %v1959 = vmin.f32 %v1827, 20.0
        %v1960 = vmin.f32 %v1829, 20.0
        %v1961 = vmin.f32 %v1831, 20.0
        %v1962 = vmin.f32 %v1833, 20.0
        %v1963 = vmin.f32 %v1835, 20.0
        %v1964 = vmul.f32 %v1948, 1.442695
        %v1965 = vpow.pop %v1964
        %v1966 = vmul.f32 %v1949, 1.442695
        %v1967 = vpow.pop %v1966
        %v1968 = vmul.f32 %v1950, 1.442695
        %v1969 = vpow.pop %v1968
        %v1970 = vmul.f32 %v1951, 1.442695
        %v1971 = vpow.pop %v1970
        %v1972 = vmul.f32 %v1952, 1.442695
        %v1973 = vpow.pop %v1972
        %v1974 = vmul.f32 %v1953, 1.442695
        %v1975 = vpow.pop %v1974
        %v1976 = vmul.f32 %v1954, 1.442695
        %v1977 = vpow.pop %v1976
        %v1978 = vmul.f32 %v1955, 1.442695
        %v1979 = vpow.pop %v1978
        %v1980 = vmul.f32 %v1956, 1.442695
        %v1981 = vpow.pop %v1980
        %v1982 = vmul.f32 %v1957, 1.442695
        %v1983 = vpow.pop %v1982
        %v1984 = vmul.f32 %v1958, 1.442695
        %v1985 = vpow.pop %v1984
        %v1986 = vmul.f32 %v1959, 1.442695
        %v1987 = vpow.pop %v1986
        %v1988 = vmul.f32 %v1960, 1.442695
        %v1989 = vpow.pop %v1988
        %v1990 = vmul.f32 %v1961, 1.442695
        %v1991 = vpow.pop %v1990
        %v1992 = vmul.f32 %v1962, 1.442695
        %v1993 = vpow.pop %v1992
        %v1994 = vmul.f32 %v1963, 1.442695
        %v1995 = vpow.pop %v1994
        %v1996 = vadd.f32 %v1965, 1.0
        %v1997 = vlog2.pop %v1996
        %v1998 = vmul.f32 %v1997, 0.6931472
        %v1999 = vmul.f32 -0.5, %v1965
        %v2000 = vadd.f32 %v1999, 1.0
        %v2001 = vmul.f32 %v2000, %v1965
        %v2002 = vand.u32 2147483647, %v1965
        %vm2003 = vcmp.lt.f32.partialorder %v2002, 0.0004427343
        %v2004 = vsel %vm2003, %v2001, %v1998
        %v2005 = vadd.f32 %v1967, 1.0
        %v2006 = vlog2.pop %v2005
        %v2007 = vmul.f32 %v2006, 0.6931472
        %v2008 = vmul.f32 -0.5, %v1967
        %v2009 = vadd.f32 %v2008, 1.0
        %v2010 = vmul.f32 %v2009, %v1967
        %v2011 = vand.u32 2147483647, %v1967
        %vm2012 = vcmp.lt.f32.partialorder %v2011, 0.0004427343
        %v2013 = vsel %vm2012, %v2010, %v2007
        %v2014 = vadd.f32 %v1969, 1.0
        %v2015 = vlog2.pop %v2014
        %v2016 = vmul.f32 %v2015, 0.6931472
        %v2017 = vmul.f32 -0.5, %v1969
        %v2018 = vadd.f32 %v2017, 1.0
        %v2019 = vmul.f32 %v2018, %v1969
        %v2020 = vand.u32 2147483647, %v1969
        %vm2021 = vcmp.lt.f32.partialorder %v2020, 0.0004427343
        %v2022 = vsel %vm2021, %v2019, %v2016
        %v2023 = vadd.f32 %v1971, 1.0
        %v2024 = vlog2.pop %v2023
        %v2025 = vmul.f32 %v2024, 0.6931472
        %v2026 = vmul.f32 -0.5, %v1971
        %v2027 = vadd.f32 %v2026, 1.0
        %v2028 = vmul.f32 %v2027, %v1971
        %v2029 = vand.u32 2147483647, %v1971
        %vm2030 = vcmp.lt.f32.partialorder %v2029, 0.0004427343
        %v2031 = vsel %vm2030, %v2028, %v2025
        %v2032 = vadd.f32 %v1973, 1.0
        %v2033 = vlog2.pop %v2032
        %v2034 = vmul.f32 %v2033, 0.6931472
        %v2035 = vmul.f32 -0.5, %v1973
        %v2036 = vadd.f32 %v2035, 1.0
        %v2037 = vmul.f32 %v2036, %v1973
        %v2038 = vand.u32 2147483647, %v1973
        %vm2039 = vcmp.lt.f32.partialorder %v2038, 0.0004427343
        %v2040 = vsel %vm2039, %v2037, %v2034
        %v2041 = vadd.f32 %v1975, 1.0
        %v2042 = vlog2.pop %v2041
        %v2043 = vmul.f32 %v2042, 0.6931472
        %v2044 = vmul.f32 -0.5, %v1975
        %v2045 = vadd.f32 %v2044, 1.0
        %v2046 = vmul.f32 %v2045, %v1975
        %v2047 = vand.u32 2147483647, %v1975
        %vm2048 = vcmp.lt.f32.partialorder %v2047, 0.0004427343
        %v2049 = vsel %vm2048, %v2046, %v2043
        %v2050 = vadd.f32 %v1977, 1.0
        %v2051 = vlog2.pop %v2050
        %v2052 = vmul.f32 %v2051, 0.6931472
        %v2053 = vmul.f32 -0.5, %v1977
        %v2054 = vadd.f32 %v2053, 1.0
        %v2055 = vmul.f32 %v2054, %v1977
        %v2056 = vand.u32 2147483647, %v1977
        %vm2057 = vcmp.lt.f32.partialorder %v2056, 0.0004427343
        %v2058 = vsel %vm2057, %v2055, %v2052
        %v2059 = vadd.f32 %v1979, 1.0
        %v2060 = vlog2.pop %v2059
        %v2061 = vmul.f32 %v2060, 0.6931472
        %v2062 = vmul.f32 -0.5, %v1979
        %v2063 = vadd.f32 %v2062, 1.0
        %v2064 = vmul.f32 %v2063, %v1979
        %v2065 = vand.u32 2147483647, %v1979
        %vm2066 = vcmp.lt.f32.partialorder %v2065, 0.0004427343
        %v2067 = vsel %vm2066, %v2064, %v2061
        %v2068 = vadd.f32 %v1981, 1.0
        %v2069 = vlog2.pop %v2068
        %v2070 = vmul.f32 %v2069, 0.6931472
        %v2071 = vmul.f32 -0.5, %v1981
        %v2072 = vadd.f32 %v2071, 1.0
        %v2073 = vmul.f32 %v2072, %v1981
        %v2074 = vand.u32 2147483647, %v1981
        %vm2075 = vcmp.lt.f32.partialorder %v2074, 0.0004427343
        %v2076 = vsel %vm2075, %v2073, %v2070
        %v2077 = vadd.f32 %v1983, 1.0
        %v2078 = vlog2.pop %v2077
        %v2079 = vmul.f32 %v2078, 0.6931472
        %v2080 = vmul.f32 -0.5, %v1983
        %v2081 = vadd.f32 %v2080, 1.0
        %v2082 = vmul.f32 %v2081, %v1983
        %v2083 = vand.u32 2147483647, %v1983
        %vm2084 = vcmp.lt.f32.partialorder %v2083, 0.0004427343
        %v2085 = vsel %vm2084, %v2082, %v2079
        %v2086 = vadd.f32 %v1985, 1.0
        %v2087 = vlog2.pop %v2086
        %v2088 = vmul.f32 %v2087, 0.6931472
        %v2089 = vmul.f32 -0.5, %v1985
        %v2090 = vadd.f32 %v2089, 1.0
        %v2091 = vmul.f32 %v2090, %v1985
        %v2092 = vand.u32 2147483647, %v1985
        %vm2093 = vcmp.lt.f32.partialorder %v2092, 0.0004427343
        %v2094 = vsel %vm2093, %v2091, %v2088
        %v2095 = vadd.f32 %v1987, 1.0
        %v2096 = vlog2.pop %v2095
        %v2097 = vmul.f32 %v2096, 0.6931472
        %v2098 = vmul.f32 -0.5, %v1987
        %v2099 = vadd.f32 %v2098, 1.0
        %v2100 = vmul.f32 %v2099, %v1987
        %v2101 = vand.u32 2147483647, %v1987
        %vm2102 = vcmp.lt.f32.partialorder %v2101, 0.0004427343
        %v2103 = vsel %vm2102, %v2100, %v2097
        %v2104 = vadd.f32 %v1989, 1.0
        %v2105 = vlog2.pop %v2104
        %v2106 = vmul.f32 %v2105, 0.6931472
        %v2107 = vmul.f32 -0.5, %v1989
        %v2108 = vadd.f32 %v2107, 1.0
        %v2109 = vmul.f32 %v2108, %v1989
        %v2110 = vand.u32 2147483647, %v1989
        %vm2111 = vcmp.lt.f32.partialorder %v2110, 0.0004427343
        %v2112 = vsel %vm2111, %v2109, %v2106
        %v2113 = vadd.f32 %v1991, 1.0
        %v2114 = vlog2.pop %v2113
        %v2115 = vmul.f32 %v2114, 0.6931472
        %v2116 = vmul.f32 -0.5, %v1991
        %v2117 = vadd.f32 %v2116, 1.0
        %v2118 = vmul.f32 %v2117, %v1991
        %v2119 = vand.u32 2147483647, %v1991
        %vm2120 = vcmp.lt.f32.partialorder %v2119, 0.0004427343
        %v2121 = vsel %vm2120, %v2118, %v2115
        %v2122 = vadd.f32 %v1993, 1.0
        %v2123 = vlog2.pop %v2122
        %v2124 = vmul.f32 %v2123, 0.6931472
        %v2125 = vmul.f32 -0.5, %v1993
        %v2126 = vadd.f32 %v2125, 1.0
        %v2127 = vmul.f32 %v2126, %v1993
        %v2128 = vand.u32 2147483647, %v1993
        %vm2129 = vcmp.lt.f32.partialorder %v2128, 0.0004427343
        %v2130 = vsel %vm2129, %v2127, %v2124
        %v2131 = vadd.f32 %v1995, 1.0
        %v2132 = vlog2.pop %v2131
        %v2133 = vmul.f32 %v2132, 0.6931472
        %v2134 = vmul.f32 -0.5, %v1995
        %v2135 = vadd.f32 %v2134, 1.0
        %v2136 = vmul.f32 %v2135, %v1995
        %v2137 = vand.u32 2147483647, %v1995
        %vm2138 = vcmp.lt.f32.partialorder %v2137, 0.0004427343
        %v2139 = vsel %vm2138, %v2136, %v2133
        %v2140 = vsel %vm1932, %v1805, %v2004
        %v2141 = vsel %vm1933, %v1807, %v2013
        %v2142 = vsel %vm1934, %v1809, %v2022
        %v2143 = vsel %vm1935, %v1811, %v2031
        %v2144 = vsel %vm1936, %v1813, %v2040
        %v2145 = vsel %vm1937, %v1815, %v2049
        %v2146 = vsel %vm1938, %v1817, %v2058
        %v2147 = vsel %vm1939, %v1819, %v2067
        %v2148 = vsel %vm1940, %v1821, %v2076
        %v2149 = vsel %vm1941, %v1823, %v2085
        %v2150 = vsel %vm1942, %v1825, %v2094
        %v2151 = vsel %vm1943, %v1827, %v2103
        %v2152 = vsel %vm1944, %v1829, %v2112
        %v2153 = vsel %vm1945, %v1831, %v2121
        %v2154 = vsel %vm1946, %v1833, %v2130
        %v2155 = vsel %vm1947, %v1835, %v2139
        %v2156 = vmul.f32 %v1901, %v2140
        %v2157 = vmul.f32 %v1903, %v2141
        %v2158 = vmul.f32 %v1905, %v2142
        %v2159 = vmul.f32 %v1907, %v2143
        %v2160 = vmul.f32 %v1909, %v2144
        %v2161 = vmul.f32 %v1911, %v2145
        %v2162 = vmul.f32 %v1913, %v2146
        %v2163 = vmul.f32 %v1915, %v2147
        %v2164 = vmul.f32 %v1917, %v2148
        %v2165 = vmul.f32 %v1919, %v2149
        %v2166 = vmul.f32 %v1921, %v2150
        %v2167 = vmul.f32 %v1923, %v2151
        %v2168 = vmul.f32 %v1925, %v2152
        %v2169 = vmul.f32 %v1927, %v2153
        %v2170 = vmul.f32 %v1929, %v2154
        %v2171 = vmul.f32 %v1931, %v2155
        %v2172 = vld [vmem:[#allocation3] sm:$0xff]
        %v2173 = vld [vmem:[#allocation3 + $0x8] sm:$0xff]
        %v2174 = vpack.c.bf16 %v1097, %v1096
        %v2175 = vpack.c.bf16 %v2157, %v2156
        %v2176 = vpack.c.bf16 %v2159, %v2158
        %v2177 = vpack.c.bf16 %v2161, %v2160
        %v2178 = vpack.c.bf16 %v2163, %v2162
        %v2179 = vpack.c.bf16 %v2165, %v2164
        %v2180 = vpack.c.bf16 %v2167, %v2166
        %v2181 = vpack.c.bf16 %v2169, %v2168
        %v2182 = vpack.c.bf16 %v2171, %v2170
        %2183 = vmatprep.subr.bf16.mxu0 0
        %2184 = vmatpush1.bf16.msra.mxu0 %v2175
        %2185 = vmatprep.subr.bf16.mxu0 0
        %2186 = vmatpush1.bf16.msra.mxu0 %v2176
        %2187 = vmatprep.subr.bf16.mxu0 0
        %2188 = vmatpush1.bf16.msra.mxu0 %v2177
        %2189 = vmatprep.subr.bf16.mxu0 0
        %2190 = vmatpush1.bf16.msra.mxu0 %v2178
        %2191 = vmatprep.subr.bf16.mxu0 0
        %2192 = vmatpush1.bf16.msra.mxu0 %v2179
        %2193 = vmatprep.subr.bf16.mxu0 0
        %2194 = vmatpush1.bf16.msra.mxu0 %v2180
        %2195 = vmatprep.subr.bf16.mxu0 0
        %2196 = vmatpush1.bf16.msra.mxu0 %v2181
        %2197 = vmatprep.subr.bf16.mxu0 0
        %2198 = vmatpush1.bf16.msra.mxu0 %v2182
        %2199 = vmatprep.subr.bf16.mxu0 0
        %2200 = vmatpush1.bf16.msra.mxu0 0
        %2201 = vmatprep.subr.bf16.mxu0 0
        %2202 = vmatpush1.bf16.msra.mxu0 0
        %2203 = vmatprep.subr.bf16.mxu0 0
        %2204 = vmatpush1.bf16.msra.mxu0 0
        %2205 = vmatprep.subr.bf16.mxu0 0
        %2206 = vmatpush1.bf16.msra.mxu0 0
        %2207 = vmatprep.subr.bf16.mxu0 0
        %2208 = vmatpush1.bf16.msra.mxu0 0
        %2209 = vmatprep.subr.bf16.mxu0 0
        %2210 = vmatpush1.bf16.msra.mxu0 0
        %2211 = vmatprep.subr.bf16.mxu0 0
        %2212 = vmatpush1.bf16.msra.mxu0 0
        %2213 = vmatprep.subr.bf16.mxu0 0
        %2214 = vmatpush1.bf16.msra.mxu0 0
        %2215 = vmatprep.mubr.bf16.mxu0 0
        %2216 = vmatmul.mubr.bf16.gmra.mrb[0].mxu0 %v2174
        %v2217 = vpop.f32.mrb[0].mxu0
        %v2218 = vadd.f32 0.0, %v2217
        %v2219 = vpop.f32.mrb[0].mxu0
        %v2220 = vpop.f32.mrb[0].mxu0
        %v2221 = vadd.f32 0.0, %v2220
        %v2222 = vpop.f32.mrb[0].mxu0
        %2223 = vdwg.mxu0
        %v2224 = vadd.f32 %v2172, %v2218
        %v2225 = vadd.f32 %v2173, %v2221
        %2226 = vst [vmem:[#allocation3] sm:$0xff] %v2224
        %2227 = vst [vmem:[#allocation3 + $0x8] sm:$0xff] %v2225
        // Predicated region
        $region97: #{cgcnn_forward.1} parent=87 // pred_check
          %p2228 = pneg %p673
        $region98: #{cgcnn_forward.1} parent=87 // pred_check_branch
          %2230 = sbr.rel (%p2228) target = $region100
        $region99: #{cgcnn_forward.1} parent=87 // pred_region
          %v2231 = vld [vmem:[#allocation3] sm:$0xff]
          %v2232 = vld [vmem:[#allocation3 + $0x8] sm:$0xff]
          %v2233 = vld [vmem:[%s667] sm:$0x1]
          %v2235 = vlaneseq
          %v2236 = vshrl.u32 %v2235, 7
          %v2237 = vsub.s32 0, %v2236
          %v2238 = vrot.slane %v2233, %v2237
          %v2240 = vmul.f32 %v2231, %v2238
          %v2241 = vmul.f32 %v2232, %v2238
          %v2242 = vld [vmem:[%s670] sm:$0x1]
          %v2244 = vlaneseq
          %v2245 = vshrl.u32 %v2244, 7
          %v2246 = vsub.s32 0, %v2245
          %v2247 = vrot.slane %v2242, %v2246
          %v2249 = vadd.f32 %v2240, %v2247
          %v2250 = vadd.f32 %v2241, %v2247
          %v2251 = vld [vmem:[#allocation2] sm:$0xff]
          %v2252 = vld [vmem:[#allocation2 + $0x8] sm:$0xff]
          %v2253 = vadd.f32 %v2249, %v2251
          %v2254 = vadd.f32 %v2250, %v2252
          %vm2255 = vcmp.gt.f32.partialorder %v2253, 20.0
          %vm2256 = vcmp.gt.f32.partialorder %v2254, 20.0
          %v2257 = vmin.f32 %v2253, 20.0
          %v2258 = vmin.f32 %v2254, 20.0
          %v2259 = vmul.f32 %v2257, 1.442695
          %v2260 = vpow.pop %v2259
          %v2261 = vmul.f32 %v2258, 1.442695
          %v2262 = vpow.pop %v2261
          %v2263 = vadd.f32 %v2260, 1.0
          %v2264 = vlog2.pop %v2263
          %v2265 = vmul.f32 %v2264, 0.6931472
          %v2266 = vmul.f32 -0.5, %v2260
          %v2267 = vadd.f32 %v2266, 1.0
          %v2268 = vmul.f32 %v2267, %v2260
          %v2269 = vand.u32 2147483647, %v2260
          %vm2270 = vcmp.lt.f32.partialorder %v2269, 0.0004427343
          %v2271 = vsel %vm2270, %v2268, %v2265
          %v2272 = vadd.f32 %v2262, 1.0
          %v2273 = vlog2.pop %v2272
          %v2274 = vmul.f32 %v2273, 0.6931472
          %v2275 = vmul.f32 -0.5, %v2262
          %v2276 = vadd.f32 %v2275, 1.0
          %v2277 = vmul.f32 %v2276, %v2262
          %v2278 = vand.u32 2147483647, %v2262
          %vm2279 = vcmp.lt.f32.partialorder %v2278, 0.0004427343
          %v2280 = vsel %vm2279, %v2277, %v2274
          %v2281 = vsel %vm2255, %v2253, %v2271
          %v2282 = vsel %vm2256, %v2254, %v2280
          %vm2283 = vcmp.lt.s32.totalorder %v1072, 16
          %vm2284 = vcmp.lt.s32.totalorder %v1073, 16
          %v2285 = vlaneseq
          %v2286 = vand.u32 %v2285, 127
          %vm2287 = vcmp.lt.s32.totalorder %v2286, 32
          %v2288 = vsel %vm2283, 1, 0
          %v2289 = vsel %vm2284, 1, 0
          %vm2290 = vcmp.eq.s32.totalorder %v2288, 1
          %vm2291 = vcmp.eq.s32.totalorder %v2289, 1
          %v2292 = vsel %vm2287, 1, 0
          %vm2293 = vcmp.eq.s32.totalorder %v2292, 1
          %vm2294 = vmand %vm2290, %vm2293
          %vm2295 = vmand %vm2291, %vm2293
          %v2296 = vsel %vm2294, 1, 0
          %v2297 = vsel %vm2295, 1, 0
          %v2298 = vcvt.s32.f32 %v2296
          %v2299 = vcvt.s32.f32 %v2297
          %v2300 = vmul.f32 %v2281, %v2298
          %v2301 = vmul.f32 %v2282, %v2299
          %2302 = vst [vmem:[#allocation2] sm:$0xff] %v2300
          %2303 = vst [vmem:[#allocation2 + $0x8] sm:$0xff] %v2301
        $region100: #{cgcnn_forward.1} parent=87 // pred_fallthru
          _
        %p2304 = scmp.eq.s32.totalorder %s33, 1
        %p2305 = pnand %p2304, %p673
        %p2306 = pneg %p2305
        // Predicated region
        $region101: #{cgcnn_forward.1} parent=87 // pred_check
          _
        $region102: #{cgcnn_forward.1} parent=87 // pred_check_branch
          %2308 = sbr.rel (%p2305) target = $region104
        $region103: #{cgcnn_forward.1} parent=87 // pred_region
          %v2309 = vld [vmem:[#allocation2] sm:$0xff]
          %v2310 = vld [vmem:[#allocation2 + $0x8] sm:$0xff]
          %v2311 = vadd.f32 %v2309, %v2310
          %v2312 = vrot.slane %v2311, 4
          %v2313 = vadd.f32 %v2311, %v2312
          %v2314 = vrot.slane %v2313, 2
          %v2315 = vadd.f32 %v2313, %v2314
          %v2316 = vrot.slane %v2315, 1
          %v2317 = vadd.f32 %v2315, %v2316
          %v2318 = vmul.f32 %v2317, 0.0625
          %v2319 = vpack.c.bf16 %v2318, %v2318
          %v2320 = vld [vmem:[%s11] sm:$0xf]
          %v2321 = vld [vmem:[%s11 + $0x4] sm:$0xf]
          %v2322 = vld [vmem:[%s11 + $0x8] sm:$0xf]
          %v2323 = vld [vmem:[%s11 + $0xc] sm:$0xf]
          %v2324 = vld [vmem:[%s11 + $0x10] sm:$0xf]
          %v2325 = vld [vmem:[%s11 + $0x14] sm:$0xf]
          %v2326 = vld [vmem:[%s11 + $0x18] sm:$0xf]
          %v2327 = vld [vmem:[%s11 + $0x1c] sm:$0xf]
          %v2328 = vld [vmem:[%s11 + $0x20] sm:$0xf]
          %v2329 = vld [vmem:[%s11 + $0x24] sm:$0xf]
          %v2330 = vld [vmem:[%s11 + $0x28] sm:$0xf]
          %v2331 = vld [vmem:[%s11 + $0x2c] sm:$0xf]
          %v2332 = vld [vmem:[%s11 + $0x30] sm:$0xf]
          %v2333 = vld [vmem:[%s11 + $0x34] sm:$0xf]
          %v2334 = vld [vmem:[%s11 + $0x38] sm:$0xf]
          %v2335 = vld [vmem:[%s11 + $0x3c] sm:$0xf]
          %v2336 = vld [vmem:[%s12] sm:$0x1]
          %v2353 = vunpack.c.l.b16 %v2320
          %v2354 = vunpack.c.l.b16 %v2321
          %v2355 = vunpack.c.l.b16 %v2322
          %v2356 = vunpack.c.l.b16 %v2323
          %v2357 = vunpack.c.l.b16 %v2324
          %v2358 = vunpack.c.l.b16 %v2325
          %v2359 = vunpack.c.l.b16 %v2326
          %v2360 = vunpack.c.l.b16 %v2327
          %v2361 = vunpack.c.l.b16 %v2328
          %v2362 = vunpack.c.l.b16 %v2329
          %v2363 = vunpack.c.l.b16 %v2330
          %v2364 = vunpack.c.l.b16 %v2331
          %v2365 = vunpack.c.l.b16 %v2332
          %v2366 = vunpack.c.l.b16 %v2333
          %v2367 = vunpack.c.l.b16 %v2334
          %v2368 = vunpack.c.l.b16 %v2335
          %v2369 = vpack.c.b16 %v2354, %v2353
          %v2370 = vpack.c.b16 %v2356, %v2355
          %v2371 = vpack.c.b16 %v2358, %v2357
          %v2372 = vpack.c.b16 %v2360, %v2359
          %v2373 = vpack.c.b16 %v2362, %v2361
          %v2374 = vpack.c.b16 %v2364, %v2363
          %v2375 = vpack.c.b16 %v2366, %v2365
          %v2376 = vpack.c.b16 %v2368, %v2367
          %2385 = vmatprep.subr.bf16.mxu0 0
          %2386 = vmatpush1.bf16.msra.mxu0 %v2369
          %2387 = vmatprep.subr.bf16.mxu0 0
          %2388 = vmatpush1.bf16.msra.mxu0 %v2370
          %2389 = vmatprep.subr.bf16.mxu0 0
          %2390 = vmatpush1.bf16.msra.mxu0 %v2371
          %2391 = vmatprep.subr.bf16.mxu0 0
          %2392 = vmatpush1.bf16.msra.mxu0 %v2372
          %2393 = vmatprep.subr.bf16.mxu0 0
          %2394 = vmatpush1.bf16.msra.mxu0 %v2373
          %2395 = vmatprep.subr.bf16.mxu0 0
          %2396 = vmatpush1.bf16.msra.mxu0 %v2374
          %2397 = vmatprep.subr.bf16.mxu0 0
          %2398 = vmatpush1.bf16.msra.mxu0 %v2375
          %2399 = vmatprep.subr.bf16.mxu0 0
          %2400 = vmatpush1.bf16.msra.mxu0 %v2376
          %2401 = vmatprep.subr.bf16.mxu0 0
          %2402 = vmatpush1.bf16.msra.mxu0 0
          %2403 = vmatprep.subr.bf16.mxu0 0
          %2404 = vmatpush1.bf16.msra.mxu0 0
          %2405 = vmatprep.subr.bf16.mxu0 0
          %2406 = vmatpush1.bf16.msra.mxu0 0
          %2407 = vmatprep.subr.bf16.mxu0 0
          %2408 = vmatpush1.bf16.msra.mxu0 0
          %2409 = vmatprep.subr.bf16.mxu0 0
          %2410 = vmatpush1.bf16.msra.mxu0 0
          %2411 = vmatprep.subr.bf16.mxu0 0
          %2412 = vmatpush1.bf16.msra.mxu0 0
          %2413 = vmatprep.subr.bf16.mxu0 0
          %2414 = vmatpush1.bf16.msra.mxu0 0
          %2415 = vmatprep.subr.bf16.mxu0 0
          %2416 = vmatpush1.bf16.msra.mxu0 0
          %2417 = vmatprep.mubr.bf16.mxu0 0
          %2418 = vmatmul.mubr.bf16.gmra.mrb[0].mxu0 %v2319
          %v2419 = vpop.f32.mrb[0].mxu0
          %v2420 = vadd.f32 %v2336, %v2419
          %v2421 = vpop.f32.mrb[0].mxu0
          %v2422 = vpop.f32.mrb[0].mxu0
          %v2423 = vpop.f32.mrb[0].mxu0
          %2424 = vdwg.mxu0
          %v2425 = vxor.u32 %v2420, 2147483648
          %v2426 = vmul.f32 %v2425, 1.442695
          %v2427 = vpow.pop %v2426
          %v2428 = vadd.f32 %v2427, 1.0
          %v2429 = vrcp.pop %v2428
          %v2430 = vmul.f32 1.0, %v2429
          %v2431 = vmul.f32 %v2420, %v2430
          %v2432 = vpack.c.bf16 %v2431, %v2431
          %v2433 = vld [vmem:[%s13] sm:$0xf]
          %v2434 = vld [vmem:[%s13 + $0x4] sm:$0xf]
          %v2435 = vld [vmem:[%s13 + $0x8] sm:$0xf]
          %v2436 = vld [vmem:[%s13 + $0xc] sm:$0xf]
          %v2437 = vld [vmem:[%s13 + $0x10] sm:$0xf]
          %v2438 = vld [vmem:[%s13 + $0x14] sm:$0xf]
          %v2439 = vld [vmem:[%s13 + $0x18] sm:$0xf]
          %v2440 = vld [vmem:[%s13 + $0x1c] sm:$0xf]
          %v2441 = vld [vmem:[%s13 + $0x20] sm:$0xf]
          %v2442 = vld [vmem:[%s13 + $0x24] sm:$0xf]
          %v2443 = vld [vmem:[%s13 + $0x28] sm:$0xf]
          %v2444 = vld [vmem:[%s13 + $0x2c] sm:$0xf]
          %v2445 = vld [vmem:[%s13 + $0x30] sm:$0xf]
          %v2446 = vld [vmem:[%s13 + $0x34] sm:$0xf]
          %v2447 = vld [vmem:[%s13 + $0x38] sm:$0xf]
          %v2448 = vld [vmem:[%s13 + $0x3c] sm:$0xf]
          %v2449 = vld [vmem:[%s14] sm:$0x1]
          %v2466 = vunpack.c.l.b16 %v2433
          %v2467 = vunpack.c.l.b16 %v2434
          %v2468 = vunpack.c.l.b16 %v2435
          %v2469 = vunpack.c.l.b16 %v2436
          %v2470 = vunpack.c.l.b16 %v2437
          %v2471 = vunpack.c.l.b16 %v2438
          %v2472 = vunpack.c.l.b16 %v2439
          %v2473 = vunpack.c.l.b16 %v2440
          %v2474 = vunpack.c.l.b16 %v2441
          %v2475 = vunpack.c.l.b16 %v2442
          %v2476 = vunpack.c.l.b16 %v2443
          %v2477 = vunpack.c.l.b16 %v2444
          %v2478 = vunpack.c.l.b16 %v2445
          %v2479 = vunpack.c.l.b16 %v2446
          %v2480 = vunpack.c.l.b16 %v2447
          %v2481 = vunpack.c.l.b16 %v2448
          %v2482 = vpack.c.b16 %v2467, %v2466
          %v2483 = vpack.c.b16 %v2469, %v2468
          %v2484 = vpack.c.b16 %v2471, %v2470
          %v2485 = vpack.c.b16 %v2473, %v2472
          %v2486 = vpack.c.b16 %v2475, %v2474
          %v2487 = vpack.c.b16 %v2477, %v2476
          %v2488 = vpack.c.b16 %v2479, %v2478
          %v2489 = vpack.c.b16 %v2481, %v2480
          %2498 = vmatprep.subr.bf16.mxu0 0
          %2499 = vmatpush1.bf16.msra.mxu0 %v2482
          %2500 = vmatprep.subr.bf16.mxu0 0
          %2501 = vmatpush1.bf16.msra.mxu0 %v2483
          %2502 = vmatprep.subr.bf16.mxu0 0
          %2503 = vmatpush1.bf16.msra.mxu0 %v2484
          %2504 = vmatprep.subr.bf16.mxu0 0
          %2505 = vmatpush1.bf16.msra.mxu0 %v2485
          %2506 = vmatprep.subr.bf16.mxu0 0
          %2507 = vmatpush1.bf16.msra.mxu0 %v2486
          %2508 = vmatprep.subr.bf16.mxu0 0
          %2509 = vmatpush1.bf16.msra.mxu0 %v2487
          %2510 = vmatprep.subr.bf16.mxu0 0
          %2511 = vmatpush1.bf16.msra.mxu0 %v2488
          %2512 = vmatprep.subr.bf16.mxu0 0
          %2513 = vmatpush1.bf16.msra.mxu0 %v2489
          %2514 = vmatprep.subr.bf16.mxu0 0
          %2515 = vmatpush1.bf16.msra.mxu0 0
          %2516 = vmatprep.subr.bf16.mxu0 0
          %2517 = vmatpush1.bf16.msra.mxu0 0
          %2518 = vmatprep.subr.bf16.mxu0 0
          %2519 = vmatpush1.bf16.msra.mxu0 0
          %2520 = vmatprep.subr.bf16.mxu0 0
          %2521 = vmatpush1.bf16.msra.mxu0 0
          %2522 = vmatprep.subr.bf16.mxu0 0
          %2523 = vmatpush1.bf16.msra.mxu0 0
          %2524 = vmatprep.subr.bf16.mxu0 0
          %2525 = vmatpush1.bf16.msra.mxu0 0
          %2526 = vmatprep.subr.bf16.mxu0 0
          %2527 = vmatpush1.bf16.msra.mxu0 0
          %2528 = vmatprep.subr.bf16.mxu0 0
          %2529 = vmatpush1.bf16.msra.mxu0 0
          %2530 = vmatprep.mubr.bf16.mxu0 0
          %2531 = vmatmul.mubr.bf16.gmra.mrb[0].mxu0 %v2432
          %v2532 = vpop.f32.mrb[0].mxu0
          %v2533 = vadd.f32 %v2449, %v2532
          %v2534 = vpop.f32.mrb[0].mxu0
          %v2535 = vpop.f32.mrb[0].mxu0
          %v2536 = vpop.f32.mrb[0].mxu0
          %2537 = vdwg.mxu0
          %v2538 = vxor.u32 %v2533, 2147483648
          %v2539 = vmul.f32 %v2538, 1.442695
          %v2540 = vpow.pop %v2539
          %v2541 = vadd.f32 %v2540, 1.0
          %v2542 = vrcp.pop %v2541
          %v2543 = vmul.f32 1.0, %v2542
          %v2544 = vmul.f32 %v2533, %v2543
          %v2545 = vpack.c.bf16 %v2544, %v2544
          %v2546 = vld [vmem:[%s15] sm:$0xf]
          %v2547 = vld [vmem:[%s15 + $0x4] sm:$0xf]
          %v2548 = vld [vmem:[%s15 + $0x8] sm:$0xf]
          %v2549 = vld [vmem:[%s15 + $0xc] sm:$0xf]
          %v2550 = vld [vmem:[%s15 + $0x10] sm:$0xf]
          %v2551 = vld [vmem:[%s15 + $0x14] sm:$0xf]
          %v2552 = vld [vmem:[%s15 + $0x18] sm:$0xf]
          %v2553 = vld [vmem:[%s15 + $0x1c] sm:$0xf]
          %v2554 = vld [vmem:[%s15 + $0x20] sm:$0xf]
          %v2555 = vld [vmem:[%s15 + $0x24] sm:$0xf]
          %v2556 = vld [vmem:[%s15 + $0x28] sm:$0xf]
          %v2557 = vld [vmem:[%s15 + $0x2c] sm:$0xf]
          %v2558 = vld [vmem:[%s15 + $0x30] sm:$0xf]
          %v2559 = vld [vmem:[%s15 + $0x34] sm:$0xf]
          %v2560 = vld [vmem:[%s15 + $0x38] sm:$0xf]
          %v2561 = vld [vmem:[%s15 + $0x3c] sm:$0xf]
          %v2562 = vld [vmem:[%s16] sm:$0x1]
          %v2579 = vunpack.c.l.b16 %v2546
          %v2580 = vunpack.c.l.b16 %v2547
          %v2581 = vunpack.c.l.b16 %v2548
          %v2582 = vunpack.c.l.b16 %v2549
          %v2583 = vunpack.c.l.b16 %v2550
          %v2584 = vunpack.c.l.b16 %v2551
          %v2585 = vunpack.c.l.b16 %v2552
          %v2586 = vunpack.c.l.b16 %v2553
          %v2587 = vunpack.c.l.b16 %v2554
          %v2588 = vunpack.c.l.b16 %v2555
          %v2589 = vunpack.c.l.b16 %v2556
          %v2590 = vunpack.c.l.b16 %v2557
          %v2591 = vunpack.c.l.b16 %v2558
          %v2592 = vunpack.c.l.b16 %v2559
          %v2593 = vunpack.c.l.b16 %v2560
          %v2594 = vunpack.c.l.b16 %v2561
          %v2595 = vpack.c.b16 %v2580, %v2579
          %v2596 = vpack.c.b16 %v2582, %v2581
          %v2597 = vpack.c.b16 %v2584, %v2583
          %v2598 = vpack.c.b16 %v2586, %v2585
          %v2599 = vpack.c.b16 %v2588, %v2587
          %v2600 = vpack.c.b16 %v2590, %v2589
          %v2601 = vpack.c.b16 %v2592, %v2591
          %v2602 = vpack.c.b16 %v2594, %v2593
          %2611 = vmatprep.subr.bf16.mxu0 0
          %2612 = vmatpush1.bf16.msra.mxu0 %v2595
          %2613 = vmatprep.subr.bf16.mxu0 0
          %2614 = vmatpush1.bf16.msra.mxu0 %v2596
          %2615 = vmatprep.subr.bf16.mxu0 0
          %2616 = vmatpush1.bf16.msra.mxu0 %v2597
          %2617 = vmatprep.subr.bf16.mxu0 0
          %2618 = vmatpush1.bf16.msra.mxu0 %v2598
          %2619 = vmatprep.subr.bf16.mxu0 0
          %2620 = vmatpush1.bf16.msra.mxu0 %v2599
          %2621 = vmatprep.subr.bf16.mxu0 0
          %2622 = vmatpush1.bf16.msra.mxu0 %v2600
          %2623 = vmatprep.subr.bf16.mxu0 0
          %2624 = vmatpush1.bf16.msra.mxu0 %v2601
          %2625 = vmatprep.subr.bf16.mxu0 0
          %2626 = vmatpush1.bf16.msra.mxu0 %v2602
          %2627 = vmatprep.subr.bf16.mxu0 0
          %2628 = vmatpush1.bf16.msra.mxu0 0
          %2629 = vmatprep.subr.bf16.mxu0 0
          %2630 = vmatpush1.bf16.msra.mxu0 0
          %2631 = vmatprep.subr.bf16.mxu0 0
          %2632 = vmatpush1.bf16.msra.mxu0 0
          %2633 = vmatprep.subr.bf16.mxu0 0
          %2634 = vmatpush1.bf16.msra.mxu0 0
          %2635 = vmatprep.subr.bf16.mxu0 0
          %2636 = vmatpush1.bf16.msra.mxu0 0
          %2637 = vmatprep.subr.bf16.mxu0 0
          %2638 = vmatpush1.bf16.msra.mxu0 0
          %2639 = vmatprep.subr.bf16.mxu0 0
          %2640 = vmatpush1.bf16.msra.mxu0 0
          %2641 = vmatprep.subr.bf16.mxu0 0
          %2642 = vmatpush1.bf16.msra.mxu0 0
          %2643 = vmatprep.mubr.bf16.mxu0 0
          %2644 = vmatmul.mubr.bf16.gmra.mrb[0].mxu0 %v2545
          %v2645 = vpop.f32.mrb[0].mxu0
          %v2646 = vadd.f32 %v2562, %v2645
          %v2647 = vpop.f32.mrb[0].mxu0
          %v2648 = vpop.f32.mrb[0].mxu0
          %v2649 = vpop.f32.mrb[0].mxu0
          %2650 = vdwg.mxu0
          %2651 = vst [vmem:[#allocation6] sm:$0x1] %v2646
        $region104: #{cgcnn_forward.1} parent=87 // pred_fallthru
          _
        // Predicated region
        $region105: #{cgcnn_forward.1} parent=87 // pred_check
          %p2652 = pneg %p451
        $region106: #{cgcnn_forward.1} parent=87 // pred_check_branch
          %2654 = sbr.rel (%p2652) target = $region108
        $region107: #{cgcnn_forward.1} parent=87 // pred_region
          %s2656 = ssub.s32 16, 16
          %2657 = vsyncadd [#allocation7], %s2656
          %s2659 = sshll.u32 [#allocation6], 4
          %s2660 = int_to_ptr.vmem [resolvable:$true] %s2659
          %2662 = dma.vmem_to_hbm [thread:$0]  %s2660, 16, %s17, [#allocation7]
        $region108: #{cgcnn_forward.1} parent=87 // pred_fallthru
          _
        // Predicated region
        $region109: #{cgcnn_forward.1} parent=87 // pred_check
          %p2663 = pneg %p451
        $region110: #{cgcnn_forward.1} parent=87 // pred_check_branch
          %2665 = sbr.rel (%p2663) target = $region112
        $region111: #{cgcnn_forward.1} parent=87 // pred_region
          %2666 = dma.done [#allocation7], 16
        $region112: #{cgcnn_forward.1} parent=87 // pred_fallthru
          _
      $region88: #{cgcnn_forward.1} parent=5 // pred_fallthru
        _
      %p2667 = scmp.le.s32.totalorder 2, %s24
      // Predicated region
      $region113: #{cgcnn_forward.1} parent=5 // pred_check
        %p2668 = pneg %p2667
      $region114: #{cgcnn_forward.1} parent=5 // pred_check_branch
        %2670 = sbr.rel (%p2668) target = $region116
      $region115: #{cgcnn_forward.1} parent=5 // pred_region
        %s2671 = ssub.s32 %s24, 2
      $region116: #{cgcnn_forward.1} parent=5 // pred_fallthru
        _
    $region6: #{cgcnn_forward.1} parent=1 // loop_footer
      %s28 = sadd.s32 1, %s24
    $region7: #{cgcnn_forward.1} parent=1 // loop_footer_branch
      %23 = sbr.rel target = $region3
    $region8: #{cgcnn_forward.1} parent=1 // loop_exit
      _
    %2672 = vsyncpa [#allocation7], 1
    %s2673 = scalar_lea.sflag [#allocation7], 1
    %2674 = vsyncpa %s2673, 1

// kernel: cgcnn_forward.1
$region0: #{cgcnn_forward.1}
  #allocation0 [shape = 'u32[]', space=smem, size = 0x4, offset = 0x4, fixed_abs, tag = 'smem constant byte address 0x4 - core index']
  #allocation1 [shape = 'u32[144,128]{1,0:T(1,128)}', space=vmem, size = 0x12000, scoped, tag = 'internal scratch']
  #allocation2 [shape = 'f32[16,128]{1,0:T(8,128)}', space=vmem, size = 0x2000, scoped, tag = 'scratch operand']
  #allocation3 [shape = 'f32[16,128]{1,0:T(8,128)}', space=vmem, size = 0x2000, scoped, tag = 'scratch operand']
  #allocation4 [shape = 'f32[16,256]{1,0:T(8,128)}', space=vmem, size = 0x4000, scoped, tag = 'scratch operand']
  #allocation5 [shape = 'f32[16,256]{1,0:T(8,128)}', space=vmem, size = 0x4000, scoped, tag = 'scratch operand']
  %s0 = inlined_call_operand.vmem [shape: s32[2,128], index: 0, kind: input, shape index: {}]
  %s1 = inlined_call_operand.vmem [shape: f32[128,8], index: 1, kind: input, shape index: {}]
  %s2 = inlined_call_operand.vmem [shape: f32[16,8], index: 2, kind: input, shape index: {}]
  %s3 = inlined_call_operand.vmem [shape: bf16[8,128], index: 3, kind: input, shape index: {}]
  %s4 = inlined_call_operand.vmem [shape: f32[1,128], index: 4, kind: input, shape index: {}]
  %s5 = inlined_call_operand.vmem [shape: bf16[2,128,256], index: 5, kind: input, shape index: {}]
  %s6 = inlined_call_operand.vmem [shape: bf16[2,128,256], index: 6, kind: input, shape index: {}]
  %s7 = inlined_call_operand.vmem [shape: bf16[2,8,256], index: 7, kind: input, shape index: {}]
  %s8 = inlined_call_operand.vmem [shape: f32[2,1,256], index: 8, kind: input, shape index: {}]
  %s9 = inlined_call_operand.vmem [shape: f32[2,1,128], index: 9, kind: input, shape index: {}]
  %s10 = inlined_call_operand.vmem [shape: f32[2,1,128], index: 10, kind: input, shape index: {}]
  %s11 = inlined_call_operand.vmem [shape: bf16[128,128], index: 11, kind: input, shape index: {}]
  %s12 = inlined_call_operand.vmem [shape: f32[1,128], index: 12, kind: input, shape index: {}]
  %s13 = inlined_call_operand.vmem [shape: bf16[128,128], index: 13, kind: input, shape index: {}]
  %s14 = inlined_call_operand.vmem [shape: f32[1,128], index: 14, kind: input, shape index: {}]
  %s15 = inlined_call_operand.vmem [shape: bf16[128,128], index: 15, kind: input, shape index: {}]
  %s16 = inlined_call_operand.vmem [shape: f32[1,128], index: 16, kind: input, shape index: {}]
  %s17 = inlined_call_operand.hbm [shape: f32[1,128], index: 17, kind: output, shape index: {}]
  %s18 = sld [smem:[#allocation0]]
  $region117: #{cgcnn_forward.1} parent=0
    _
  %s20 = ssub.s32 1, %s18
  %s21 = scalar_select 0, %s20, %s18
  $region1: #{cgcnn_forward.1} parent=0
    #allocation6 [shape = 'u8[512]{0}', space=vmem, size = 0x400, scoped, tag = 'output window, operand 0, single buffered']
    #allocation7 [shape = 's32[2]{0}', space=sflag, size = 0x8, scoped, tag = 'scoped memory for cgcnn_forward.1']
    %22 = vsyncpa [#allocation7], 0
    loop: start=0, step=1, limit=4
    $region2: #{cgcnn_forward.1} parent=1 // loop_pre_header
      _
    $region3: #{cgcnn_forward.1} parent=1 // loop_header
      %s24 = sphi 0, %s28
      %p25 = scmp.ge.s32.totalorder %s24, 4
      %s31 = sphi 0, %s43
      %s32 = sphi 0, %s39
      %s33 = sphi 0, %s31
      %s34 = sphi 0, %s32
      %s35 = sphi 0, %s33
      %s36 = sphi 0, %s34
      %s46 = sphi 0, %s48
      %s49 = sphi 0, %s46
      %s50 = sphi 0, %s49
      %s66 = sphi 0, %s50
      %s72 = sphi 0, %s74
      %s75 = sphi 0, %s72
      %s76 = sphi 0, %s75
      %s92 = sphi 0, %s76
      %s96 = sphi 0, %s96
      %s98 = sphi 0, %s96
      %s99 = sphi 0, %s98
      %s113 = sphi 0, %s99
      %s117 = sphi 0, %s117
      %s119 = sphi 0, %s117
      %s120 = sphi 0, %s119
      %s134 = sphi 0, %s120
      %s138 = sphi 0, %s138
      %s140 = sphi 0, %s138
      %s141 = sphi 0, %s140
      %s155 = sphi 0, %s141
      %s161 = sphi 0, %s163
      %s164 = sphi 0, %s161
      %s165 = sphi 0, %s164
      %s181 = sphi 0, %s165
      %s187 = sphi 0, %s189
      %s190 = sphi 0, %s187
      %s191 = sphi 0, %s190
      %s207 = sphi 0, %s191
      %s213 = sphi 0, %s215
      %s216 = sphi 0, %s213
      %s217 = sphi 0, %s216
      %s233 = sphi 0, %s217
      %s239 = sphi 0, %s241
      %s242 = sphi 0, %s239
      %s243 = sphi 0, %s242
      %s259 = sphi 0, %s243
      %s265 = sphi 0, %s267
      %s268 = sphi 0, %s265
      %s269 = sphi 0, %s268
      %s285 = sphi 0, %s269
      %s291 = sphi 0, %s293
      %s294 = sphi 0, %s291
      %s295 = sphi 0, %s294
      %s311 = sphi 0, %s295
      %s315 = sphi 0, %s315
      %s317 = sphi 0, %s315
      %s318 = sphi 0, %s317
      %s332 = sphi 0, %s318
      %s336 = sphi 0, %s336
      %s338 = sphi 0, %s336
      %s339 = sphi 0, %s338
      %s353 = sphi 0, %s339
      %s357 = sphi 0, %s357
      %s359 = sphi 0, %s357
      %s360 = sphi 0, %s359
      %s374 = sphi 0, %s360
      %s378 = sphi 0, %s378
      %s380 = sphi 0, %s378
      %s381 = sphi 0, %s380
      %s395 = sphi 0, %s381
      %s399 = sphi 0, %s399
      %s401 = sphi 0, %s399
      %s402 = sphi 0, %s401
      %s416 = sphi 0, %s402
      %s420 = sphi 0, %s420
      %s422 = sphi 0, %s420
      %s423 = sphi 0, %s422
      %s437 = sphi 0, %s423
      %s441 = sphi 0, %s441
      %s443 = sphi 0, %s441
      %s444 = sphi 0, %s443
      %s458 = sphi 0, %s444
    $region4: #{cgcnn_forward.1} parent=1 // loop_header_branch
      %27 = sbr.rel (%p25) target = $region8
    $region5: #{cgcnn_forward.1} parent=1 // loop_body
      %s29 = ssub.s32 %s24, 1
      %s30 = ssub.s32 %s24, 2
      %s37 = sadd.s32 1, %s32
      %p38 = scmp.ge.s32.totalorder %s37, 1
      %s39 = scalar_select %p38, 0, %s37
      %s40 = sadd.s32 1, %s31
      %s41 = scalar_select %p38, %s40, %s31
      %p42 = scmp.ge.s32.totalorder %s41, 2
      %s43 = scalar_select %p42, 0, %s41
      %s44 = ssub.s32 %s32, %s39
      %p45 = scmp.eq.s32.totalorder %s44, 0
      %s47 = sadd.s32 %s46, 1
      %s48 = scalar_select %p45, %s46, %s47
      %p51 = pneg %p45
      %p52 = scmp.eq.s32.totalorder %s24, 1
      %p53 = por %p51, %p52
      %p54 = scmp.ne.s32.totalorder %s46, %s49
      %p55 = scmp.eq.s32.totalorder %s24, 0
      %p56 = por %p54, %p55
      %p57 = scmp.ne.s32.totalorder %s46, %s49
      %p58 = scmp.eq.s32.totalorder %s29, 1
      %p59 = por %p57, %p58
      %p60 = scmp.ne.s32.totalorder %s49, %s50
      %p61 = scmp.eq.s32.totalorder %s29, 0
      %p62 = por %p60, %p61
      %p63 = scmp.ne.s32.totalorder %s49, %s50
      %p64 = scmp.eq.s32.totalorder %s30, 1
      %p65 = por %p63, %p64
      %p67 = scmp.ne.s32.totalorder %s50, %s66
      %p68 = scmp.eq.s32.totalorder %s30, 0
      %p69 = por %p67, %p68
      %s70 = ssub.s32 %s32, %s39
      %p71 = scmp.eq.s32.totalorder %s70, 0
      %s73 = sadd.s32 %s72, 1
      %s74 = scalar_select %p71, %s72, %s73
      %p77 = pneg %p71
      %p78 = scmp.eq.s32.totalorder %s24, 1
      %p79 = por %p77, %p78
      %p80 = scmp.ne.s32.totalorder %s72, %s75
      %p81 = scmp.eq.s32.totalorder %s24, 0
      %p82 = por %p80, %p81
      %p83 = scmp.ne.s32.totalorder %s72, %s75
      %p84 = scmp.eq.s32.totalorder %s29, 1
      %p85 = por %p83, %p84
      %p86 = scmp.ne.s32.totalorder %s75, %s76
      %p87 = scmp.eq.s32.totalorder %s29, 0
      %p88 = por %p86, %p87
      %p89 = scmp.ne.s32.totalorder %s75, %s76
      %p90 = scmp.eq.s32.totalorder %s30, 1
      %p91 = por %p89, %p90
      %p93 = scmp.ne.s32.totalorder %s76, %s92
      %p94 = scmp.eq.s32.totalorder %s30, 0
      %p95 = por %p93, %p94
      %s97 = sadd.s32 %s96, 1
      %p100 = scmp.eq.s32.totalorder %s24, 1
      %p101 = scmp.ne.s32.totalorder %s96, %s98
      %p102 = scmp.eq.s32.totalorder %s24, 0
      %p103 = por %p101, %p102
      %p104 = scmp.ne.s32.totalorder %s96, %s98
      %p105 = scmp.eq.s32.totalorder %s29, 1
      %p106 = por %p104, %p105
      %p107 = scmp.ne.s32.totalorder %s98, %s99
      %p108 = scmp.eq.s32.totalorder %s29, 0
      %p109 = por %p107, %p108
      %p110 = scmp.ne.s32.totalorder %s98, %s99
      %p111 = scmp.eq.s32.totalorder %s30, 1
      %p112 = por %p110, %p111
      %p114 = scmp.ne.s32.totalorder %s99, %s113
      %p115 = scmp.eq.s32.totalorder %s30, 0
      %p116 = por %p114, %p115
      %s118 = sadd.s32 %s117, 1
      %p121 = scmp.eq.s32.totalorder %s24, 1
      %p122 = scmp.ne.s32.totalorder %s117, %s119
      %p123 = scmp.eq.s32.totalorder %s24, 0
      %p124 = por %p122, %p123
      %p125 = scmp.ne.s32.totalorder %s117, %s119
      %p126 = scmp.eq.s32.totalorder %s29, 1
      %p127 = por %p125, %p126
      %p128 = scmp.ne.s32.totalorder %s119, %s120
      %p129 = scmp.eq.s32.totalorder %s29, 0
      %p130 = por %p128, %p129
      %p131 = scmp.ne.s32.totalorder %s119, %s120
      %p132 = scmp.eq.s32.totalorder %s30, 1
      %p133 = por %p131, %p132
      %p135 = scmp.ne.s32.totalorder %s120, %s134
      %p136 = scmp.eq.s32.totalorder %s30, 0
      %p137 = por %p135, %p136
      %s139 = sadd.s32 %s138, 1
      %p142 = scmp.eq.s32.totalorder %s24, 1
      %p143 = scmp.ne.s32.totalorder %s138, %s140
      %p144 = scmp.eq.s32.totalorder %s24, 0
      %p145 = por %p143, %p144
      %p146 = scmp.ne.s32.totalorder %s138, %s140
      %p147 = scmp.eq.s32.totalorder %s29, 1
      %p148 = por %p146, %p147
      %p149 = scmp.ne.s32.totalorder %s140, %s141
      %p150 = scmp.eq.s32.totalorder %s29, 0
      %p151 = por %p149, %p150
      %p152 = scmp.ne.s32.totalorder %s140, %s141
      %p153 = scmp.eq.s32.totalorder %s30, 1
      %p154 = por %p152, %p153
      %p156 = scmp.ne.s32.totalorder %s141, %s155
      %p157 = scmp.eq.s32.totalorder %s30, 0
      %p158 = por %p156, %p157
      %s159 = ssub.s32 %s31, %s43
      %p160 = scmp.eq.s32.totalorder %s159, 0
      %s162 = sadd.s32 %s161, 1
      %s163 = scalar_select %p160, %s161, %s162
      %p166 = pneg %p160
      %p167 = scmp.eq.s32.totalorder %s24, 1
      %p168 = por %p166, %p167
      %p169 = scmp.ne.s32.totalorder %s161, %s164
      %p170 = scmp.eq.s32.totalorder %s24, 0
      %p171 = por %p169, %p170
      %p172 = scmp.ne.s32.totalorder %s161, %s164
      %p173 = scmp.eq.s32.totalorder %s29, 1
      %p174 = por %p172, %p173
      %p175 = scmp.ne.s32.totalorder %s164, %s165
      %p176 = scmp.eq.s32.totalorder %s29, 0
      %p177 = por %p175, %p176
      %p178 = scmp.ne.s32.totalorder %s164, %s165
      %p179 = scmp.eq.s32.totalorder %s30, 1
      %p180 = por %p178, %p179
      %p182 = scmp.ne.s32.totalorder %s165, %s181
      %p183 = scmp.eq.s32.totalorder %s30, 0
      %p184 = por %p182, %p183
      %s185 = ssub.s32 %s31, %s43
      %p186 = scmp.eq.s32.totalorder %s185, 0
      %s188 = sadd.s32 %s187, 1
      %s189 = scalar_select %p186, %s187, %s188
      %p192 = pneg %p186
      %p193 = scmp.eq.s32.totalorder %s24, 1
      %p194 = por %p192, %p193
      %p195 = scmp.ne.s32.totalorder %s187, %s190
      %p196 = scmp.eq.s32.totalorder %s24, 0
      %p197 = por %p195, %p196
      %p198 = scmp.ne.s32.totalorder %s187, %s190
      %p199 = scmp.eq.s32.totalorder %s29, 1
      %p200 = por %p198, %p199
      %p201 = scmp.ne.s32.totalorder %s190, %s191
      %p202 = scmp.eq.s32.totalorder %s29, 0
      %p203 = por %p201, %p202
      %p204 = scmp.ne.s32.totalorder %s190, %s191
      %p205 = scmp.eq.s32.totalorder %s30, 1
      %p206 = por %p204, %p205
      %p208 = scmp.ne.s32.totalorder %s191, %s207
      %p209 = scmp.eq.s32.totalorder %s30, 0
      %p210 = por %p208, %p209
      %s211 = ssub.s32 %s31, %s43
      %p212 = scmp.eq.s32.totalorder %s211, 0
      %s214 = sadd.s32 %s213, 1
      %s215 = scalar_select %p212, %s213, %s214
      %p218 = pneg %p212
      %p219 = scmp.eq.s32.totalorder %s24, 1
      %p220 = por %p218, %p219
      %p221 = scmp.ne.s32.totalorder %s213, %s216
      %p222 = scmp.eq.s32.totalorder %s24, 0
      %p223 = por %p221, %p222
      %p224 = scmp.ne.s32.totalorder %s213, %s216
      %p225 = scmp.eq.s32.totalorder %s29, 1
      %p226 = por %p224, %p225
      %p227 = scmp.ne.s32.totalorder %s216, %s217
      %p228 = scmp.eq.s32.totalorder %s29, 0
      %p229 = por %p227, %p228
      %p230 = scmp.ne.s32.totalorder %s216, %s217
      %p231 = scmp.eq.s32.totalorder %s30, 1
      %p232 = por %p230, %p231
      %p234 = scmp.ne.s32.totalorder %s217, %s233
      %p235 = scmp.eq.s32.totalorder %s30, 0
      %p236 = por %p234, %p235
      %s237 = ssub.s32 %s31, %s43
      %p238 = scmp.eq.s32.totalorder %s237, 0
      %s240 = sadd.s32 %s239, 1
      %s241 = scalar_select %p238, %s239, %s240
      %p244 = pneg %p238
      %p245 = scmp.eq.s32.totalorder %s24, 1
      %p246 = por %p244, %p245
      %p247 = scmp.ne.s32.totalorder %s239, %s242
      %p248 = scmp.eq.s32.totalorder %s24, 0
      %p249 = por %p247, %p248
      %p250 = scmp.ne.s32.totalorder %s239, %s242
      %p251 = scmp.eq.s32.totalorder %s29, 1
      %p252 = por %p250, %p251
      %p253 = scmp.ne.s32.totalorder %s242, %s243
      %p254 = scmp.eq.s32.totalorder %s29, 0
      %p255 = por %p253, %p254
      %p256 = scmp.ne.s32.totalorder %s242, %s243
      %p257 = scmp.eq.s32.totalorder %s30, 1
      %p258 = por %p256, %p257
      %p260 = scmp.ne.s32.totalorder %s243, %s259
      %p261 = scmp.eq.s32.totalorder %s30, 0
      %p262 = por %p260, %p261
      %s263 = ssub.s32 %s31, %s43
      %p264 = scmp.eq.s32.totalorder %s263, 0
      %s266 = sadd.s32 %s265, 1
      %s267 = scalar_select %p264, %s265, %s266
      %p270 = pneg %p264
      %p271 = scmp.eq.s32.totalorder %s24, 1
      %p272 = por %p270, %p271
      %p273 = scmp.ne.s32.totalorder %s265, %s268
      %p274 = scmp.eq.s32.totalorder %s24, 0
      %p275 = por %p273, %p274
      %p276 = scmp.ne.s32.totalorder %s265, %s268
      %p277 = scmp.eq.s32.totalorder %s29, 1
      %p278 = por %p276, %p277
      %p279 = scmp.ne.s32.totalorder %s268, %s269
      %p280 = scmp.eq.s32.totalorder %s29, 0
      %p281 = por %p279, %p280
      %p282 = scmp.ne.s32.totalorder %s268, %s269
      %p283 = scmp.eq.s32.totalorder %s30, 1
      %p284 = por %p282, %p283
      %p286 = scmp.ne.s32.totalorder %s269, %s285
      %p287 = scmp.eq.s32.totalorder %s30, 0
      %p288 = por %p286, %p287
      %s289 = ssub.s32 %s31, %s43
      %p290 = scmp.eq.s32.totalorder %s289, 0
      %s292 = sadd.s32 %s291, 1
      %s293 = scalar_select %p290, %s291, %s292
      %p296 = pneg %p290
      %p297 = scmp.eq.s32.totalorder %s24, 1
      %p298 = por %p296, %p297
      %p299 = scmp.ne.s32.totalorder %s291, %s294
      %p300 = scmp.eq.s32.totalorder %s24, 0
      %p301 = por %p299, %p300
      %p302 = scmp.ne.s32.totalorder %s291, %s294
      %p303 = scmp.eq.s32.totalorder %s29, 1
      %p304 = por %p302, %p303
      %p305 = scmp.ne.s32.totalorder %s294, %s295
      %p306 = scmp.eq.s32.totalorder %s29, 0
      %p307 = por %p305, %p306
      %p308 = scmp.ne.s32.totalorder %s294, %s295
      %p309 = scmp.eq.s32.totalorder %s30, 1
      %p310 = por %p308, %p309
      %p312 = scmp.ne.s32.totalorder %s295, %s311
      %p313 = scmp.eq.s32.totalorder %s30, 0
      %p314 = por %p312, %p313
      %s316 = sadd.s32 %s315, 1
      %p319 = scmp.eq.s32.totalorder %s24, 1
      %p320 = scmp.ne.s32.totalorder %s315, %s317
      %p321 = scmp.eq.s32.totalorder %s24, 0
      %p322 = por %p320, %p321
      %p323 = scmp.ne.s32.totalorder %s315, %s317
      %p324 = scmp.eq.s32.totalorder %s29, 1
      %p325 = por %p323, %p324
      %p326 = scmp.ne.s32.totalorder %s317, %s318
      %p327 = scmp.eq.s32.totalorder %s29, 0
      %p328 = por %p326, %p327
      %p329 = scmp.ne.s32.totalorder %s317, %s318
      %p330 = scmp.eq.s32.totalorder %s30, 1
      %p331 = por %p329, %p330
      %p333 = scmp.ne.s32.totalorder %s318, %s332
      %p334 = scmp.eq.s32.totalorder %s30, 0
      %p335 = por %p333, %p334
      %s337 = sadd.s32 %s336, 1
      %p340 = scmp.eq.s32.totalorder %s24, 1
      %p341 = scmp.ne.s32.totalorder %s336, %s338
      %p342 = scmp.eq.s32.totalorder %s24, 0
      %p343 = por %p341, %p342
      %p344 = scmp.ne.s32.totalorder %s336, %s338
      %p345 = scmp.eq.s32.totalorder %s29, 1
      %p346 = por %p344, %p345
      %p347 = scmp.ne.s32.totalorder %s338, %s339
      %p348 = scmp.eq.s32.totalorder %s29, 0
      %p349 = por %p347, %p348
      %p350 = scmp.ne.s32.totalorder %s338, %s339
      %p351 = scmp.eq.s32.totalorder %s30, 1
      %p352 = por %p350, %p351
      %p354 = scmp.ne.s32.totalorder %s339, %s353
      %p355 = scmp.eq.s32.totalorder %s30, 0
      %p356 = por %p354, %p355
      %s358 = sadd.s32 %s357, 1
      %p361 = scmp.eq.s32.totalorder %s24, 1
      %p362 = scmp.ne.s32.totalorder %s357, %s359
      %p363 = scmp.eq.s32.totalorder %s24, 0
      %p364 = por %p362, %p363
      %p365 = scmp.ne.s32.totalorder %s357, %s359
      %p366 = scmp.eq.s32.totalorder %s29, 1
      %p367 = por %p365, %p366
      %p368 = scmp.ne.s32.totalorder %s359, %s360
      %p369 = scmp.eq.s32.totalorder %s29, 0
      %p370 = por %p368, %p369
      %p371 = scmp.ne.s32.totalorder %s359, %s360
      %p372 = scmp.eq.s32.totalorder %s30, 1
      %p373 = por %p371, %p372
      %p375 = scmp.ne.s32.totalorder %s360, %s374
      %p376 = scmp.eq.s32.totalorder %s30, 0
      %p377 = por %p375, %p376
      %s379 = sadd.s32 %s378, 1
      %p382 = scmp.eq.s32.totalorder %s24, 1
      %p383 = scmp.ne.s32.totalorder %s378, %s380
      %p384 = scmp.eq.s32.totalorder %s24, 0
      %p385 = por %p383, %p384
      %p386 = scmp.ne.s32.totalorder %s378, %s380
      %p387 = scmp.eq.s32.totalorder %s29, 1
      %p388 = por %p386, %p387
      %p389 = scmp.ne.s32.totalorder %s380, %s381
      %p390 = scmp.eq.s32.totalorder %s29, 0
      %p391 = por %p389, %p390
      %p392 = scmp.ne.s32.totalorder %s380, %s381
      %p393 = scmp.eq.s32.totalorder %s30, 1
      %p394 = por %p392, %p393
      %p396 = scmp.ne.s32.totalorder %s381, %s395
      %p397 = scmp.eq.s32.totalorder %s30, 0
      %p398 = por %p396, %p397
      %s400 = sadd.s32 %s399, 1
      %p403 = scmp.eq.s32.totalorder %s24, 1
      %p404 = scmp.ne.s32.totalorder %s399, %s401
      %p405 = scmp.eq.s32.totalorder %s24, 0
      %p406 = por %p404, %p405
      %p407 = scmp.ne.s32.totalorder %s399, %s401
      %p408 = scmp.eq.s32.totalorder %s29, 1
      %p409 = por %p407, %p408
      %p410 = scmp.ne.s32.totalorder %s401, %s402
      %p411 = scmp.eq.s32.totalorder %s29, 0
      %p412 = por %p410, %p411
      %p413 = scmp.ne.s32.totalorder %s401, %s402
      %p414 = scmp.eq.s32.totalorder %s30, 1
      %p415 = por %p413, %p414
      %p417 = scmp.ne.s32.totalorder %s402, %s416
      %p418 = scmp.eq.s32.totalorder %s30, 0
      %p419 = por %p417, %p418
      %s421 = sadd.s32 %s420, 1
      %p424 = scmp.eq.s32.totalorder %s24, 1
      %p425 = scmp.ne.s32.totalorder %s420, %s422
      %p426 = scmp.eq.s32.totalorder %s24, 0
      %p427 = por %p425, %p426
      %p428 = scmp.ne.s32.totalorder %s420, %s422
      %p429 = scmp.eq.s32.totalorder %s29, 1
      %p430 = por %p428, %p429
      %p431 = scmp.ne.s32.totalorder %s422, %s423
      %p432 = scmp.eq.s32.totalorder %s29, 0
      %p433 = por %p431, %p432
      %p434 = scmp.ne.s32.totalorder %s422, %s423
      %p435 = scmp.eq.s32.totalorder %s30, 1
      %p436 = por %p434, %p435
      %p438 = scmp.ne.s32.totalorder %s423, %s437
      %p439 = scmp.eq.s32.totalorder %s30, 0
      %p440 = por %p438, %p439
      %s442 = sadd.s32 %s441, 1
      %p445 = scmp.eq.s32.totalorder %s24, 1
      %p446 = scmp.ne.s32.totalorder %s441, %s443
      %p447 = scmp.eq.s32.totalorder %s24, 0
      %p448 = por %p446, %p447
      %p449 = scmp.ne.s32.totalorder %s441, %s443
      %p450 = scmp.eq.s32.totalorder %s29, 1
      %p451 = por %p449, %p450
      %p452 = scmp.ne.s32.totalorder %s443, %s444
      %p453 = scmp.eq.s32.totalorder %s29, 0
      %p454 = por %p452, %p453
      %p455 = scmp.ne.s32.totalorder %s443, %s444
      %p456 = scmp.eq.s32.totalorder %s30, 1
      %p457 = por %p455, %p456
      %p459 = scmp.ne.s32.totalorder %s444, %s458
      %p460 = scmp.eq.s32.totalorder %s30, 0
      %p461 = por %p459, %p460
      %p462 = scmp.le.s32.totalorder 1, %s24
      %p463 = scmp.lt.s32.totalorder %s24, 3
      %p464 = pnand %p462, %p463
      %p465 = pneg %p464
      // Predicated region
      $region9: #{cgcnn_forward.1} parent=5 // pred_check
        _
      $region10: #{cgcnn_forward.1} parent=5 // pred_check_branch
        %467 = sbr.rel (%p464) target = $region12
      $region11: #{cgcnn_forward.1} parent=5 // pred_region
        %s468 = ssub.s32 %s24, 1
        // Predicated region
        $region13: #{cgcnn_forward.1} parent=11 // pred_check
          %p469 = pneg %p62
        $region14: #{cgcnn_forward.1} parent=11 // pred_check_branch
          %471 = sbr.rel (%p469) target = $region16
        $region15: #{cgcnn_forward.1} parent=11 // pred_region
          %p472 = scmp.lt.s32.totalorder %s34, 0
          %s473 = scalar_select %p472, %s34, 0
          %s474 = smul.addr %s473, 2
          %s475 = scalar_lea.vmem %s0, %s474
        $region16: #{cgcnn_forward.1} parent=11 // pred_fallthru
          _
        // Predicated region
        $region17: #{cgcnn_forward.1} parent=11 // pred_check
          %p476 = pneg %p88
        $region18: #{cgcnn_forward.1} parent=11 // pred_check_branch
          %478 = sbr.rel (%p476) target = $region20
        $region19: #{cgcnn_forward.1} parent=11 // pred_region
          %s479 = smul.u32 16, %s34
          %p480 = scmp.lt.s32.totalorder %s479, 15
          %s481 = scalar_select %p480, %s479, 15
          %s482 = smul.addr %s481, 8
          %s483 = scalar_lea.vmem %s1, %s482
          %s484 = smul.u32 16, %s34
        $region20: #{cgcnn_forward.1} parent=11 // pred_fallthru
          _
        // Predicated region
        $region21: #{cgcnn_forward.1} parent=11 // pred_check
          %p485 = pneg %p109
        $region22: #{cgcnn_forward.1} parent=11 // pred_check_branch
          %487 = sbr.rel (%p485) target = $region24
        $region23: #{cgcnn_forward.1} parent=11 // pred_region
          _
        $region24: #{cgcnn_forward.1} parent=11 // pred_fallthru
          _
        // Predicated region
        $region25: #{cgcnn_forward.1} parent=11 // pred_check
          %p488 = pneg %p130
        $region26: #{cgcnn_forward.1} parent=11 // pred_check_branch
          %490 = sbr.rel (%p488) target = $region28
        $region27: #{cgcnn_forward.1} parent=11 // pred_region
          _
        $region28: #{cgcnn_forward.1} parent=11 // pred_fallthru
          _
        // Predicated region
        $region29: #{cgcnn_forward.1} parent=11 // pred_check
          %p491 = pneg %p151
        $region30: #{cgcnn_forward.1} parent=11 // pred_check_branch
          %493 = sbr.rel (%p491) target = $region32
        $region31: #{cgcnn_forward.1} parent=11 // pred_region
          _
        $region32: #{cgcnn_forward.1} parent=11 // pred_fallthru
          _
        // Predicated region
        $region33: #{cgcnn_forward.1} parent=11 // pred_check
          %p494 = pneg %p328
        $region34: #{cgcnn_forward.1} parent=11 // pred_check_branch
          %496 = sbr.rel (%p494) target = $region36
        $region35: #{cgcnn_forward.1} parent=11 // pred_region
          _
        $region36: #{cgcnn_forward.1} parent=11 // pred_fallthru
          _
        // Predicated region
        $region37: #{cgcnn_forward.1} parent=11 // pred_check
          %p497 = pneg %p349
        $region38: #{cgcnn_forward.1} parent=11 // pred_check_branch
          %499 = sbr.rel (%p497) target = $region40
        $region39: #{cgcnn_forward.1} parent=11 // pred_region
          _
        $region40: #{cgcnn_forward.1} parent=11 // pred_fallthru
          _
        // Predicated region
        $region41: #{cgcnn_forward.1} parent=11 // pred_check
          %p500 = pneg %p370
        $region42: #{cgcnn_forward.1} parent=11 // pred_check_branch
          %502 = sbr.rel (%p500) target = $region44
        $region43: #{cgcnn_forward.1} parent=11 // pred_region
          _
        $region44: #{cgcnn_forward.1} parent=11 // pred_fallthru
          _
        // Predicated region
        $region45: #{cgcnn_forward.1} parent=11 // pred_check
          %p503 = pneg %p391
        $region46: #{cgcnn_forward.1} parent=11 // pred_check_branch
          %505 = sbr.rel (%p503) target = $region48
        $region47: #{cgcnn_forward.1} parent=11 // pred_region
          _
        $region48: #{cgcnn_forward.1} parent=11 // pred_fallthru
          _
        // Predicated region
        $region49: #{cgcnn_forward.1} parent=11 // pred_check
          %p506 = pneg %p412
        $region50: #{cgcnn_forward.1} parent=11 // pred_check_branch
          %508 = sbr.rel (%p506) target = $region52
        $region51: #{cgcnn_forward.1} parent=11 // pred_region
          _
        $region52: #{cgcnn_forward.1} parent=11 // pred_fallthru
          _
        // Predicated region
        $region53: #{cgcnn_forward.1} parent=11 // pred_check
          %p509 = pneg %p433
        $region54: #{cgcnn_forward.1} parent=11 // pred_check_branch
          %511 = sbr.rel (%p509) target = $region56
        $region55: #{cgcnn_forward.1} parent=11 // pred_region
          _
        $region56: #{cgcnn_forward.1} parent=11 // pred_fallthru
          _
      $region12: #{cgcnn_forward.1} parent=5 // pred_fallthru
        _
      %p512 = scmp.lt.s32.totalorder %s24, 2
      // Predicated region
      $region57: #{cgcnn_forward.1} parent=5 // pred_check
        %p513 = pneg %p512
      $region58: #{cgcnn_forward.1} parent=5 // pred_check_branch
        %515 = sbr.rel (%p513) target = $region60
      $region59: #{cgcnn_forward.1} parent=5 // pred_region
        // Predicated region
        $region61: #{cgcnn_forward.1} parent=59 // pred_check
          %p516 = pneg %p171
        $region62: #{cgcnn_forward.1} parent=59 // pred_check_branch
          %518 = sbr.rel (%p516) target = $region64
        $region63: #{cgcnn_forward.1} parent=59 // pred_region
          %p519 = scmp.lt.s32.totalorder %s31, 1
          %s520 = scalar_select %p519, %s31, 1
          %s521 = smul.addr %s520, 32
          %s522 = smul.addr %s521, 4
          %s523 = scalar_lea.vmem %s5, %s522
        $region64: #{cgcnn_forward.1} parent=59 // pred_fallthru
          _
        // Predicated region
        $region65: #{cgcnn_forward.1} parent=59 // pred_check
          %p524 = pneg %p197
        $region66: #{cgcnn_forward.1} parent=59 // pred_check_branch
          %526 = sbr.rel (%p524) target = $region68
        $region67: #{cgcnn_forward.1} parent=59 // pred_region
          %p527 = scmp.lt.s32.totalorder %s31, 1
          %s528 = scalar_select %p527, %s31, 1
          %s529 = smul.addr %s528, 32
          %s530 = smul.addr %s529, 4
          %s531 = scalar_lea.vmem %s6, %s530
        $region68: #{cgcnn_forward.1} parent=59 // pred_fallthru
          _
        // Predicated region
        $region69: #{cgcnn_forward.1} parent=59 // pred_check
          %p532 = pneg %p223
        $region70: #{cgcnn_forward.1} parent=59 // pred_check_branch
          %534 = sbr.rel (%p532) target = $region72
        $region71: #{cgcnn_forward.1} parent=59 // pred_region
          %p535 = scmp.lt.s32.totalorder %s31, 1
          %s536 = scalar_select %p535, %s31, 1
          %s537 = smul.addr %s536, 2
          %s538 = smul.addr %s537, 4
          %s539 = scalar_lea.vmem %s7, %s538
        $region72: #{cgcnn_forward.1} parent=59 // pred_fallthru
          _
        // Predicated region
        $region73: #{cgcnn_forward.1} parent=59 // pred_check
          %p540 = pneg %p249
        $region74: #{cgcnn_forward.1} parent=59 // pred_check_branch
          %542 = sbr.rel (%p540) target = $region76
        $region75: #{cgcnn_forward.1} parent=59 // pred_region
          %p543 = scmp.lt.s32.totalorder %s31, 1
          %s544 = scalar_select %p543, %s31, 1
          %s545 = smul.addr %s544, 2
          %s546 = scalar_lea.vmem %s8, %s545
        $region76: #{cgcnn_forward.1} parent=59 // pred_fallthru
          _
        // Predicated region
        $region77: #{cgcnn_forward.1} parent=59 // pred_check
          %p547 = pneg %p275
        $region78: #{cgcnn_forward.1} parent=59 // pred_check_branch
          %549 = sbr.rel (%p547) target = $region80
        $region79: #{cgcnn_forward.1} parent=59 // pred_region
          %p550 = scmp.lt.s32.totalorder %s31, 1
          %s551 = scalar_select %p550, %s31, 1
          %s552 = scalar_lea.vmem %s9, %s551
        $region80: #{cgcnn_forward.1} parent=59 // pred_fallthru
          _
        // Predicated region
        $region81: #{cgcnn_forward.1} parent=59 // pred_check
          %p553 = pneg %p301
        $region82: #{cgcnn_forward.1} parent=59 // pred_check_branch
          %555 = sbr.rel (%p553) target = $region84
        $region83: #{cgcnn_forward.1} parent=59 // pred_region
          %p556 = scmp.lt.s32.totalorder %s31, 1
          %s557 = scalar_select %p556, %s31, 1
          %s558 = scalar_lea.vmem %s10, %s557
        $region84: #{cgcnn_forward.1} parent=59 // pred_fallthru
          _
      $region60: #{cgcnn_forward.1} parent=5 // pred_fallthru
        _
      %p559 = scmp.le.s32.totalorder 1, %s24
      %p560 = scmp.lt.s32.totalorder %s24, 3
      %p561 = pnand %p559, %p560
      %p562 = pneg %p561
      // Predicated region
      $region85: #{cgcnn_forward.1} parent=5 // pred_check
        _
      $region86: #{cgcnn_forward.1} parent=5 // pred_check_branch
        %564 = sbr.rel (%p561) target = $region88
      $region87: #{cgcnn_forward.1} parent=5 // pred_region
        %s565 = ssub.s32 %s24, 1
        %p566 = scmp.lt.s32.totalorder %s34, 0
        %s567 = scalar_select %p566, %s34, 0
        %s568 = smul.addr %s567, 2
        %s569 = scalar_lea.vmem %s0, %s568
        %p570 = pneg %p62
        %p571 = pneg %p59
        %s572 = smul.u32 16, %s34
        %p573 = scmp.lt.s32.totalorder %s572, 15
        %s574 = scalar_select %p573, %s572, 15
        %s575 = smul.addr %s574, 8
        %s576 = scalar_lea.vmem %s1, %s575
        %p577 = pneg %p88
        %p578 = pneg %p85
        %p579 = pneg %p109
        %p580 = pneg %p106
        %p581 = pneg %p130
        %p582 = pneg %p127
        %p583 = pneg %p151
        %p584 = pneg %p148
        %p585 = scmp.lt.s32.totalorder %s33, 1
        %s586 = scalar_select %p585, %s33, 1
        %s587 = smul.addr %s586, 32
        %s588 = smul.addr %s587, 4
        %s589 = scalar_lea.vmem %s5, %s588
        %p590 = pneg %p177
        %p591 = pneg %p174
        %p592 = scmp.lt.s32.totalorder %s33, 1
        %s593 = scalar_select %p592, %s33, 1
        %s594 = smul.addr %s593, 32
        %s595 = smul.addr %s594, 4
        %s596 = scalar_lea.vmem %s6, %s595
        %p597 = pneg %p203
        %p598 = pneg %p200
        %p599 = scmp.lt.s32.totalorder %s33, 1
        %s600 = scalar_select %p599, %s33, 1
        %s601 = smul.addr %s600, 2
        %s602 = smul.addr %s601, 4
        %s603 = scalar_lea.vmem %s7, %s602
        %p604 = pneg %p229
        %p605 = pneg %p226
        %p606 = scmp.lt.s32.totalorder %s33, 1
        %s607 = scalar_select %p606, %s33, 1
        %s608 = smul.addr %s607, 2
        %s609 = scalar_lea.vmem %s8, %s608
        %p610 = pneg %p255
        %p611 = pneg %p252
        %p612 = scmp.lt.s32.totalorder %s33, 1
        %s613 = scalar_select %p612, %s33, 1
        %s614 = scalar_lea.vmem %s9, %s613
        %p615 = pneg %p281
        %p616 = pneg %p278
        %p617 = scmp.lt.s32.totalorder %s33, 1
        %s618 = scalar_select %p617, %s33, 1
        %s619 = scalar_lea.vmem %s10, %s618
        %p620 = pneg %p307
        %p621 = pneg %p304
        %p622 = pneg %p328
        %p623 = pneg %p325
        %p624 = pneg %p349
        %p625 = pneg %p346
        %p626 = pneg %p370
        %p627 = pneg %p367
        %p628 = pneg %p391
        %p629 = pneg %p388
        %p630 = pneg %p412
        %p631 = pneg %p409
        %p632 = pneg %p433
        %p633 = pneg %p430
        %p634 = pneg %p454
        %p635 = pneg %p451
        %p636 = scmp.lt.s32.totalorder %s34, 0
        %s637 = scalar_select %p636, %s34, 0
        %s638 = smul.addr %s637, 2
        %s639 = scalar_lea.vmem %s0, %s638
        %s640 = smul.u32 16, %s34
        %p641 = scmp.lt.s32.totalorder %s640, 15
        %s642 = scalar_select %p641, %s640, 15
        %s643 = smul.addr %s642, 8
        %s644 = scalar_lea.vmem %s1, %s643
        %s645 = smul.u32 16, %s34
        %p646 = scmp.lt.s32.totalorder %s33, 1
        %s647 = scalar_select %p646, %s33, 1
        %s648 = smul.addr %s647, 32
        %s649 = smul.addr %s648, 4
        %s650 = scalar_lea.vmem %s5, %s649
        %p651 = scmp.lt.s32.totalorder %s33, 1
        %s652 = scalar_select %p651, %s33, 1
        %s653 = smul.addr %s652, 32
        %s654 = smul.addr %s653, 4
        %s655 = scalar_lea.vmem %s6, %s654
        %p656 = scmp.lt.s32.totalorder %s33, 1
        %s657 = scalar_select %p656, %s33, 1
        %s658 = smul.addr %s657, 2
        %s659 = smul.addr %s658, 4
        %s660 = scalar_lea.vmem %s7, %s659
        %p661 = scmp.lt.s32.totalorder %s33, 1
        %s662 = scalar_select %p661, %s33, 1
        %s663 = smul.addr %s662, 2
        %s664 = scalar_lea.vmem %s8, %s663
        %p665 = scmp.lt.s32.totalorder %s33, 1
        %s666 = scalar_select %p665, %s33, 1
        %s667 = scalar_lea.vmem %s9, %s666
        %p668 = scmp.lt.s32.totalorder %s33, 1
        %s669 = scalar_select %p668, %s33, 1
        %s670 = scalar_lea.vmem %s10, %s669
        %p672 = scmp.eq.s32.totalorder %s33, 0
        %p673 = scmp.eq.s32.totalorder %s34, 0
        %p674 = pnand %p672, %p673
        %p675 = pneg %p674
        // Predicated region
        $region89: #{cgcnn_forward.1} parent=87 // pred_check
          _
        $region90: #{cgcnn_forward.1} parent=87 // pred_check_branch
          %677 = sbr.rel (%p674) target = $region92
        $region91: #{cgcnn_forward.1} parent=87 // pred_region
          %v678 = vld [vmem:[%s2] sm:$0xff]
          %v679 = vld [vmem:[%s2 + $0x8] sm:$0xff]
          %v680 = vpack.c.bf16 %v679, %v678
          %v681 = vld [vmem:[%s3] sm:$0xf]
          %v682 = vld [vmem:[%s4] sm:$0x1]
          %v684 = vlaneseq
          %v685 = vshrl.u32 %v684, 7
          %v686 = vsub.s32 0, %v685
          %v687 = vrot.slane %v682, %v686
          %vm689 = vcmask 64512
          %v691 = vsel %vm689, %v680, 0
          %vm693 = vcmask 1043456
          %v695 = vsel %vm693, %v681, 0
          %697 = vmatprep.subr.bf16.mxu0 0
          %698 = vmatpush1.bf16.msra.mxu0 %v695
          %699 = vmatprep.subr.bf16.mxu0 0
          %700 = vmatpush1.bf16.msra.mxu0 0
          %701 = vmatprep.subr.bf16.mxu0 0
          %702 = vmatpush1.bf16.msra.mxu0 0
          %703 = vmatprep.subr.bf16.mxu0 0
          %704 = vmatpush1.bf16.msra.mxu0 0
          %705 = vmatprep.subr.bf16.mxu0 0
          %706 = vmatpush1.bf16.msra.mxu0 0
          %707 = vmatprep.subr.bf16.mxu0 0
          %708 = vmatpush1.bf16.msra.mxu0 0
          %709 = vmatprep.subr.bf16.mxu0 0
          %710 = vmatpush1.bf16.msra.mxu0 0
          %711 = vmatprep.subr.bf16.mxu0 0
          %712 = vmatpush1.bf16.msra.mxu0 0
          %713 = vmatprep.subr.bf16.mxu0 0
          %714 = vmatpush1.bf16.msra.mxu0 0
          %715 = vmatprep.subr.bf16.mxu0 0
          %716 = vmatpush1.bf16.msra.mxu0 0
          %717 = vmatprep.subr.bf16.mxu0 0
          %718 = vmatpush1.bf16.msra.mxu0 0
          %719 = vmatprep.subr.bf16.mxu0 0
          %720 = vmatpush1.bf16.msra.mxu0 0
          %721 = vmatprep.subr.bf16.mxu0 0
          %722 = vmatpush1.bf16.msra.mxu0 0
          %723 = vmatprep.subr.bf16.mxu0 0
          %724 = vmatpush1.bf16.msra.mxu0 0
          %725 = vmatprep.subr.bf16.mxu0 0
          %726 = vmatpush1.bf16.msra.mxu0 0
          %727 = vmatprep.subr.bf16.mxu0 0
          %728 = vmatpush1.bf16.msra.mxu0 0
          %729 = vmatprep.mubr.bf16.mxu0 0
          %730 = vmatmul.mubr.bf16.gmra.mrb[0].mxu0 %v691
          %v731 = vpop.f32.mrb[0].mxu0
          %v732 = vadd.f32 %v687, %v731
          %v733 = vpop.f32.mrb[0].mxu0
          %v734 = vpop.f32.mrb[0].mxu0
          %v735 = vadd.f32 %v687, %v734
          %v736 = vpop.f32.mrb[0].mxu0
          %737 = vdwg.mxu0
          %v738 = vxor.u32 %v732, 2147483648
          %v739 = vxor.u32 %v735, 2147483648
          %v740 = vmul.f32 %v738, 1.442695
          %v741 = vpow.pop %v740
          %v742 = vmul.f32 %v739, 1.442695
          %v743 = vpow.pop %v742
          %v744 = vadd.f32 %v741, 1.0
          %v745 = vadd.f32 %v743, 1.0
          %v746 = vrcp.pop %v744
          %v747 = vmul.f32 1.0, %v746
          %v748 = vrcp.pop %v745
          %v749 = vmul.f32 1.0, %v748
          %v750 = vmul.f32 %v732, %v747
          %v751 = vmul.f32 %v735, %v749
          %v752 = vlaneseq
          %v753 = vshrl.u32 %v752, 7
          %v754 = vadd.s32 %v753, 8
          %vm755 = vcmp.lt.s32.totalorder %v753, 16
          %vm756 = vcmp.lt.s32.totalorder %v754, 16
          %v757 = vlaneseq
          %v758 = vand.u32 %v757, 127
          %vm759 = vcmp.lt.s32.totalorder %v758, 32
          %v760 = vsel %vm755, 1, 0
          %v761 = vsel %vm756, 1, 0
          %vm762 = vcmp.eq.s32.totalorder %v760, 1
          %vm763 = vcmp.eq.s32.totalorder %v761, 1
          %v764 = vsel %vm759, 1, 0
          %vm765 = vcmp.eq.s32.totalorder %v764, 1
          %vm766 = vmand %vm762, %vm765
          %vm767 = vmand %vm763, %vm765
          %v768 = vsel %vm766, 1, 0
          %v769 = vsel %vm767, 1, 0
          %v770 = vcvt.s32.f32 %v768
          %v771 = vcvt.s32.f32 %v769
          %v772 = vmul.f32 %v750, %v770
          %v773 = vmul.f32 %v751, %v771
          %774 = vst [vmem:[#allocation2] sm:$0xff] %v772
          %775 = vst [vmem:[#allocation2 + $0x8] sm:$0xff] %v773
        $region92: #{cgcnn_forward.1} parent=87 // pred_fallthru
          _
        // Predicated region
        $region93: #{cgcnn_forward.1} parent=87 // pred_check
          %p776 = pneg %p673
        $region94: #{cgcnn_forward.1} parent=87 // pred_check_branch
          %778 = sbr.rel (%p776) target = $region96
        $region95: #{cgcnn_forward.1} parent=87 // pred_region
          %779 = vst [vmem:[#allocation3] sm:$0xff] 0.0
          %780 = vst [vmem:[#allocation3 + $0x8] sm:$0xff] 0.0
          %v781 = vld [vmem:[#allocation2] sm:$0xff]
          %v782 = vld [vmem:[#allocation2 + $0x8] sm:$0xff]
          %v783 = vpack.c.bf16 %v782, %v781
          %v784 = vld [vmem:[%s650] sm:$0xff]
          %v785 = vld [vmem:[%s650 + $0x8] sm:$0xff]
          %v786 = vld [vmem:[%s650 + $0x10] sm:$0xff]
          %v787 = vld [vmem:[%s650 + $0x18] sm:$0xff]
          %v788 = vld [vmem:[%s650 + $0x20] sm:$0xff]
          %v789 = vld [vmem:[%s650 + $0x28] sm:$0xff]
          %v790 = vld [vmem:[%s650 + $0x30] sm:$0xff]
          %v791 = vld [vmem:[%s650 + $0x38] sm:$0xff]
          %v792 = vld [vmem:[%s650 + $0x40] sm:$0xff]
          %v793 = vld [vmem:[%s650 + $0x48] sm:$0xff]
          %v794 = vld [vmem:[%s650 + $0x50] sm:$0xff]
          %v795 = vld [vmem:[%s650 + $0x58] sm:$0xff]
          %v796 = vld [vmem:[%s650 + $0x60] sm:$0xff]
          %v797 = vld [vmem:[%s650 + $0x68] sm:$0xff]
          %v798 = vld [vmem:[%s650 + $0x70] sm:$0xff]
          %v799 = vld [vmem:[%s650 + $0x78] sm:$0xff]
          %v816 = vunpack.c.l.b16 %v784
          %v817 = vunpack.c.h.b16 %v784
          %v818 = vunpack.c.l.b16 %v785
          %v819 = vunpack.c.h.b16 %v785
          %v820 = vunpack.c.l.b16 %v786
          %v821 = vunpack.c.h.b16 %v786
          %v822 = vunpack.c.l.b16 %v787
          %v823 = vunpack.c.h.b16 %v787
          %v824 = vunpack.c.l.b16 %v788
          %v825 = vunpack.c.h.b16 %v788
          %v826 = vunpack.c.l.b16 %v789
          %v827 = vunpack.c.h.b16 %v789
          %v828 = vunpack.c.l.b16 %v790
          %v829 = vunpack.c.h.b16 %v790
          %v830 = vunpack.c.l.b16 %v791
          %v831 = vunpack.c.h.b16 %v791
          %v832 = vunpack.c.l.b16 %v792
          %v833 = vunpack.c.h.b16 %v792
          %v834 = vunpack.c.l.b16 %v793
          %v835 = vunpack.c.h.b16 %v793
          %v836 = vunpack.c.l.b16 %v794
          %v837 = vunpack.c.h.b16 %v794
          %v838 = vunpack.c.l.b16 %v795
          %v839 = vunpack.c.h.b16 %v795
          %v840 = vunpack.c.l.b16 %v796
          %v841 = vunpack.c.h.b16 %v796
          %v842 = vunpack.c.l.b16 %v797
          %v843 = vunpack.c.h.b16 %v797
          %v844 = vunpack.c.l.b16 %v798
          %v845 = vunpack.c.h.b16 %v798
          %v846 = vunpack.c.l.b16 %v799
          %v847 = vunpack.c.h.b16 %v799
          %v848 = vpack.c.b16 %v818, %v816
          %v849 = vpack.c.b16 %v819, %v817
          %v850 = vpack.c.b16 %v822, %v820
          %v851 = vpack.c.b16 %v823, %v821
          %v852 = vpack.c.b16 %v826, %v824
          %v853 = vpack.c.b16 %v827, %v825
          %v854 = vpack.c.b16 %v830, %v828
          %v855 = vpack.c.b16 %v831, %v829
          %v856 = vpack.c.b16 %v834, %v832
          %v857 = vpack.c.b16 %v835, %v833
          %v858 = vpack.c.b16 %v838, %v836
          %v859 = vpack.c.b16 %v839, %v837
          %v860 = vpack.c.b16 %v842, %v840
          %v861 = vpack.c.b16 %v843, %v841
          %v862 = vpack.c.b16 %v846, %v844
          %v863 = vpack.c.b16 %v847, %v845
          %880 = vmatprep.subr.bf16.mxu0 %v849
          %881 = vmatpush1.bf16.msra.mxu0 %v848
          %882 = vmatprep.subr.bf16.mxu0 %v851
          %883 = vmatpush1.bf16.msra.mxu0 %v850
          %884 = vmatprep.subr.bf16.mxu0 %v853
          %885 = vmatpush1.bf16.msra.mxu0 %v852
          %886 = vmatprep.subr.bf16.mxu0 %v855
          %887 = vmatpush1.bf16.msra.mxu0 %v854
          %888 = vmatprep.subr.bf16.mxu0 %v857
          %889 = vmatpush1.bf16.msra.mxu0 %v856
          %890 = vmatprep.subr.bf16.mxu0 %v859
          %891 = vmatpush1.bf16.msra.mxu0 %v858
          %892 = vmatprep.subr.bf16.mxu0 %v861
          %893 = vmatpush1.bf16.msra.mxu0 %v860
          %894 = vmatprep.subr.bf16.mxu0 %v863
          %895 = vmatpush1.bf16.msra.mxu0 %v862
          %896 = vmatprep.subr.bf16.mxu0 0
          %897 = vmatpush1.bf16.msra.mxu0 0
          %898 = vmatprep.subr.bf16.mxu0 0
          %899 = vmatpush1.bf16.msra.mxu0 0
          %900 = vmatprep.subr.bf16.mxu0 0
          %901 = vmatpush1.bf16.msra.mxu0 0
          %902 = vmatprep.subr.bf16.mxu0 0
          %903 = vmatpush1.bf16.msra.mxu0 0
          %904 = vmatprep.subr.bf16.mxu0 0
          %905 = vmatpush1.bf16.msra.mxu0 0
          %906 = vmatprep.subr.bf16.mxu0 0
          %907 = vmatpush1.bf16.msra.mxu0 0
          %908 = vmatprep.subr.bf16.mxu0 0
          %909 = vmatpush1.bf16.msra.mxu0 0
          %910 = vmatprep.subr.bf16.mxu0 0
          %911 = vmatpush1.bf16.msra.mxu0 0
          %912 = vmatprep.mubr.bf16.mxu0 0
          %913 = vmatmul.mubr.bf16.gmra.mrb[0].mxu0 %v783
          %v914 = vpop.f32.mrb[0].mxu0
          %v915 = vadd.f32 0.0, %v914
          %v916 = vpop.f32.mrb[0].mxu0
          %v917 = vadd.f32 0.0, %v916
          %v918 = vpop.f32.mrb[0].mxu0
          %v919 = vadd.f32 0.0, %v918
          %v920 = vpop.f32.mrb[0].mxu0
          %v921 = vadd.f32 0.0, %v920
          %922 = vdwg.mxu0
          %923 = vst [vmem:[#allocation4] sm:$0xff] %v915
          %924 = vst [vmem:[#allocation4 + $0x8] sm:$0xff] %v917
          %925 = vst [vmem:[#allocation4 + $0x10] sm:$0xff] %v919
          %926 = vst [vmem:[#allocation4 + $0x18] sm:$0xff] %v921
          %v927 = vld [vmem:[%s655] sm:$0xff]
          %v928 = vld [vmem:[%s655 + $0x8] sm:$0xff]
          %v929 = vld [vmem:[%s655 + $0x10] sm:$0xff]
          %v930 = vld [vmem:[%s655 + $0x18] sm:$0xff]
          %v931 = vld [vmem:[%s655 + $0x20] sm:$0xff]
          %v932 = vld [vmem:[%s655 + $0x28] sm:$0xff]
          %v933 = vld [vmem:[%s655 + $0x30] sm:$0xff]
          %v934 = vld [vmem:[%s655 + $0x38] sm:$0xff]
          %v935 = vld [vmem:[%s655 + $0x40] sm:$0xff]
          %v936 = vld [vmem:[%s655 + $0x48] sm:$0xff]
          %v937 = vld [vmem:[%s655 + $0x50] sm:$0xff]
          %v938 = vld [vmem:[%s655 + $0x58] sm:$0xff]
          %v939 = vld [vmem:[%s655 + $0x60] sm:$0xff]
          %v940 = vld [vmem:[%s655 + $0x68] sm:$0xff]
          %v941 = vld [vmem:[%s655 + $0x70] sm:$0xff]
          %v942 = vld [vmem:[%s655 + $0x78] sm:$0xff]
          %v959 = vunpack.c.l.b16 %v927
          %v960 = vunpack.c.h.b16 %v927
          %v961 = vunpack.c.l.b16 %v928
          %v962 = vunpack.c.h.b16 %v928
          %v963 = vunpack.c.l.b16 %v929
          %v964 = vunpack.c.h.b16 %v929
          %v965 = vunpack.c.l.b16 %v930
          %v966 = vunpack.c.h.b16 %v930
          %v967 = vunpack.c.l.b16 %v931
          %v968 = vunpack.c.h.b16 %v931
          %v969 = vunpack.c.l.b16 %v932
          %v970 = vunpack.c.h.b16 %v932
          %v971 = vunpack.c.l.b16 %v933
          %v972 = vunpack.c.h.b16 %v933
          %v973 = vunpack.c.l.b16 %v934
          %v974 = vunpack.c.h.b16 %v934
          %v975 = vunpack.c.l.b16 %v935
          %v976 = vunpack.c.h.b16 %v935
          %v977 = vunpack.c.l.b16 %v936
          %v978 = vunpack.c.h.b16 %v936
          %v979 = vunpack.c.l.b16 %v937
          %v980 = vunpack.c.h.b16 %v937
          %v981 = vunpack.c.l.b16 %v938
          %v982 = vunpack.c.h.b16 %v938
          %v983 = vunpack.c.l.b16 %v939
          %v984 = vunpack.c.h.b16 %v939
          %v985 = vunpack.c.l.b16 %v940
          %v986 = vunpack.c.h.b16 %v940
          %v987 = vunpack.c.l.b16 %v941
          %v988 = vunpack.c.h.b16 %v941
          %v989 = vunpack.c.l.b16 %v942
          %v990 = vunpack.c.h.b16 %v942
          %v991 = vpack.c.b16 %v961, %v959
          %v992 = vpack.c.b16 %v962, %v960
          %v993 = vpack.c.b16 %v965, %v963
          %v994 = vpack.c.b16 %v966, %v964
          %v995 = vpack.c.b16 %v969, %v967
          %v996 = vpack.c.b16 %v970, %v968
          %v997 = vpack.c.b16 %v973, %v971
          %v998 = vpack.c.b16 %v974, %v972
          %v999 = vpack.c.b16 %v977, %v975
          %v1000 = vpack.c.b16 %v978, %v976
          %v1001 = vpack.c.b16 %v981, %v979
          %v1002 = vpack.c.b16 %v982, %v980
          %v1003 = vpack.c.b16 %v985, %v983
          %v1004 = vpack.c.b16 %v986, %v984
          %v1005 = vpack.c.b16 %v989, %v987
          %v1006 = vpack.c.b16 %v990, %v988
          %1023 = vmatprep.subr.bf16.mxu0 %v992
          %1024 = vmatpush1.bf16.msra.mxu0 %v991
          %1025 = vmatprep.subr.bf16.mxu0 %v994
          %1026 = vmatpush1.bf16.msra.mxu0 %v993
          %1027 = vmatprep.subr.bf16.mxu0 %v996
          %1028 = vmatpush1.bf16.msra.mxu0 %v995
          %1029 = vmatprep.subr.bf16.mxu0 %v998
          %1030 = vmatpush1.bf16.msra.mxu0 %v997
          %1031 = vmatprep.subr.bf16.mxu0 %v1000
          %1032 = vmatpush1.bf16.msra.mxu0 %v999
          %1033 = vmatprep.subr.bf16.mxu0 %v1002
          %1034 = vmatpush1.bf16.msra.mxu0 %v1001
          %1035 = vmatprep.subr.bf16.mxu0 %v1004
          %1036 = vmatpush1.bf16.msra.mxu0 %v1003
          %1037 = vmatprep.subr.bf16.mxu0 %v1006
          %1038 = vmatpush1.bf16.msra.mxu0 %v1005
          %1039 = vmatprep.subr.bf16.mxu0 0
          %1040 = vmatpush1.bf16.msra.mxu0 0
          %1041 = vmatprep.subr.bf16.mxu0 0
          %1042 = vmatpush1.bf16.msra.mxu0 0
          %1043 = vmatprep.subr.bf16.mxu0 0
          %1044 = vmatpush1.bf16.msra.mxu0 0
          %1045 = vmatprep.subr.bf16.mxu0 0
          %1046 = vmatpush1.bf16.msra.mxu0 0
          %1047 = vmatprep.subr.bf16.mxu0 0
          %1048 = vmatpush1.bf16.msra.mxu0 0
          %1049 = vmatprep.subr.bf16.mxu0 0
          %1050 = vmatpush1.bf16.msra.mxu0 0
          %1051 = vmatprep.subr.bf16.mxu0 0
          %1052 = vmatpush1.bf16.msra.mxu0 0
          %1053 = vmatprep.subr.bf16.mxu0 0
          %1054 = vmatpush1.bf16.msra.mxu0 0
          %1055 = vmatprep.mubr.bf16.mxu0 0
          %1056 = vmatmul.mubr.bf16.gmra.mrb[0].mxu0 %v783
          %v1057 = vpop.f32.mrb[0].mxu0
          %v1058 = vadd.f32 0.0, %v1057
          %v1059 = vpop.f32.mrb[0].mxu0
          %v1060 = vadd.f32 0.0, %v1059
          %v1061 = vpop.f32.mrb[0].mxu0
          %v1062 = vadd.f32 0.0, %v1061
          %v1063 = vpop.f32.mrb[0].mxu0
          %v1064 = vadd.f32 0.0, %v1063
          %1065 = vdwg.mxu0
          %1066 = vst [vmem:[#allocation5] sm:$0xff] %v1058
          %1067 = vst [vmem:[#allocation5 + $0x8] sm:$0xff] %v1060
          %1068 = vst [vmem:[#allocation5 + $0x10] sm:$0xff] %v1062
          %1069 = vst [vmem:[#allocation5 + $0x18] sm:$0xff] %v1064
        $region96: #{cgcnn_forward.1} parent=87 // pred_fallthru
          _
        %v1070 = vld [vmem:[%s639] sm:$0x3]
        %v1071 = vlaneseq
        %v1072 = vshrl.u32 %v1071, 7
        %v1073 = vadd.s32 %v1072, 8
        %v1074 = vlaneseq
        %v1075 = vshrl.u32 %v1074, 7
        %v1076 = vsub.s32 0, %v1075
        %v1077 = vrot.slane %v1070, %v1076
        %vm1078 = vcmp.eq.s32.totalorder %v1072, %v1077
        %vm1079 = vcmp.eq.s32.totalorder %v1073, %v1077
        %v1080 = vlaneseq
        %v1081 = vshrl.u32 %v1080, 7
        %v1082 = vsub.s32 1, %v1081
        %v1083 = vrot.slane %v1070, %v1082
        %vm1084 = vcmp.eq.s32.totalorder %v1072, %v1083
        %vm1085 = vcmp.eq.s32.totalorder %v1073, %v1083
        %v1086 = vsel %vm1078, 1, 0
        %v1087 = vsel %vm1079, 1, 0
        %v1088 = vcvt.s32.f32 %v1086
        %v1089 = vcvt.s32.f32 %v1087
        %v1090 = vld [vmem:[#allocation4] sm:$0xff]
        %v1091 = vld [vmem:[#allocation4 + $0x8] sm:$0xff]
        %v1092 = vld [vmem:[#allocation4 + $0x10] sm:$0xff]
        %v1093 = vld [vmem:[#allocation4 + $0x18] sm:$0xff]
        %v1094 = vsel %vm1084, 1, 0
        %v1095 = vsel %vm1085, 1, 0
        %v1096 = vcvt.s32.f32 %v1094
        %v1097 = vcvt.s32.f32 %v1095
        %v1098 = vld [vmem:[#allocation5] sm:$0xff]
        %v1099 = vld [vmem:[#allocation5 + $0x8] sm:$0xff]
        %v1100 = vld [vmem:[#allocation5 + $0x10] sm:$0xff]
        %v1101 = vld [vmem:[#allocation5 + $0x18] sm:$0xff]
        %1102 = vxpose.xlu0.b32.start [1/16] %v1096, 128
        %1103 = vxpose.xlu0.b32.cont [2/16] %v1097, 128
        %1104 = vxpose.xlu0.b32.cont [3/16] 0.0, 128
        %1105 = vxpose.xlu0.b32.cont [4/16] 0.0, 128
        %1106 = vxpose.xlu0.b32.cont [5/16] 0.0, 128
        %1107 = vxpose.xlu0.b32.cont [6/16] 0.0, 128
        %1108 = vxpose.xlu0.b32.cont [7/16] 0.0, 128
        %1109 = vxpose.xlu0.b32.cont [8/16] 0.0, 128
        %1110 = vxpose.xlu0.b32.cont [9/16] 0.0, 128
        %1111 = vxpose.xlu0.b32.cont [10/16] 0.0, 128
        %1112 = vxpose.xlu0.b32.cont [11/16] 0.0, 128
        %1113 = vxpose.xlu0.b32.cont [12/16] 0.0, 128
        %1114 = vxpose.xlu0.b32.cont [13/16] 0.0, 128
        %1115 = vxpose.xlu0.b32.cont [14/16] 0.0, 128
        %1116 = vxpose.xlu0.b32.cont [15/16] 0.0, 128
        %1117 = vxpose.xlu0.b32.end [16/16] 0.0, 128
        %v1118 = vpop.trf.xlu0
        %v1119 = vpop.trf.xlu0
        %v1120 = vpop.trf.xlu0
        %v1121 = vpop.trf.xlu0
        %v1122 = vpop.trf.xlu0
        %v1123 = vpop.trf.xlu0
        %v1124 = vpop.trf.xlu0
        %v1125 = vpop.trf.xlu0
        %v1126 = vpop.trf.xlu0
        %v1127 = vpop.trf.xlu0
        %v1128 = vpop.trf.xlu0
        %v1129 = vpop.trf.xlu0
        %v1130 = vpop.trf.xlu0
        %v1131 = vpop.trf.xlu0
        %v1132 = vpop.trf.xlu0
        %v1133 = vpop.trf.xlu0
        %vm1134 = vcmask 130048
        %v1136 = vsel %vm1134, %v1118, 0
        %v1139 = vsel %vm1134, %v1119, 0
        %v1142 = vsel %vm1134, %v1120, 0
        %v1145 = vsel %vm1134, %v1121, 0
        %v1148 = vsel %vm1134, %v1122, 0
        %v1151 = vsel %vm1134, %v1123, 0
        %v1154 = vsel %vm1134, %v1124, 0
        %v1157 = vsel %vm1134, %v1125, 0
        %v1160 = vsel %vm1134, %v1126, 0
        %v1163 = vsel %vm1134, %v1127, 0
        %v1166 = vsel %vm1134, %v1128, 0
        %v1169 = vsel %vm1134, %v1129, 0
        %v1172 = vsel %vm1134, %v1130, 0
        %v1175 = vsel %vm1134, %v1131, 0
        %v1178 = vsel %vm1134, %v1132, 0
        %v1181 = vsel %vm1134, %v1133, 0
        %1183 = vmatprep.subr.mxu0 %v1099
        %1184 = vmatpush1.msra.mxu0 %v1098
        %1185 = vmatprep.subr.mxu0 %v1101
        %1186 = vmatpush1.msra.mxu0 %v1100
        %1187 = vmatprep.subr.mxu0 0.0
        %1188 = vmatpush1.msra.mxu0 0.0
        %1189 = vmatprep.subr.mxu0 0.0
        %1190 = vmatpush1.msra.mxu0 0.0
        %1191 = vmatprep.subr.mxu0 0.0
        %1192 = vmatpush1.msra.mxu0 0.0
        %1193 = vmatprep.subr.mxu0 0.0
        %1194 = vmatpush1.msra.mxu0 0.0
        %1195 = vmatprep.subr.mxu0 0.0
        %1196 = vmatpush1.msra.mxu0 0.0
        %1197 = vmatprep.subr.mxu0 0.0
        %1198 = vmatpush1.msra.mxu0 0.0
        %1199 = vmatprep.subr.mxu0 0.0
        %1200 = vmatpush1.msra.mxu0 0.0
        %1201 = vmatprep.subr.mxu0 0.0
        %1202 = vmatpush1.msra.mxu0 0.0
        %1203 = vmatprep.subr.mxu0 0.0
        %1204 = vmatpush1.msra.mxu0 0.0
        %1205 = vmatprep.subr.mxu0 0.0
        %1206 = vmatpush1.msra.mxu0 0.0
        %1207 = vmatprep.subr.mxu0 0.0
        %1208 = vmatpush1.msra.mxu0 0.0
        %1209 = vmatprep.subr.mxu0 0.0
        %1210 = vmatpush1.msra.mxu0 0.0
        %1211 = vmatprep.subr.mxu0 0.0
        %1212 = vmatpush1.msra.mxu0 0.0
        %1213 = vmatprep.subr.mxu0 0.0
        %1214 = vmatpush1.msra.mxu0 0.0
        %1215 = vmatprep.subr.mxu0 0.0
        %1216 = vmatpush1.msra.mxu0 0.0
        %1217 = vmatprep.subr.mxu0 0.0
        %1218 = vmatpush1.msra.mxu0 0.0
        %1219 = vmatprep.subr.mxu0 0.0
        %1220 = vmatpush1.msra.mxu0 0.0
        %1221 = vmatprep.subr.mxu0 0.0
        %1222 = vmatpush1.msra.mxu0 0.0
        %1223 = vmatprep.subr.mxu0 0.0
        %1224 = vmatpush1.msra.mxu0 0.0
        %1225 = vmatprep.subr.mxu0 0.0
        %1226 = vmatpush1.msra.mxu0 0.0
        %1227 = vmatprep.subr.mxu0 0.0
        %1228 = vmatpush1.msra.mxu0 0.0
        %1229 = vmatprep.subr.mxu0 0.0
        %1230 = vmatpush1.msra.mxu0 0.0
        %1231 = vmatprep.subr.mxu0 0.0
        %1232 = vmatpush1.msra.mxu0 0.0
        %1233 = vmatprep.subr.mxu0 0.0
        %1234 = vmatpush1.msra.mxu0 0.0
        %1235 = vmatprep.subr.mxu0 0.0
        %1236 = vmatpush1.msra.mxu0 0.0
        %1237 = vmatprep.subr.mxu0 0.0
        %1238 = vmatpush1.msra.mxu0 0.0
        %1239 = vmatprep.subr.mxu0 0.0
        %1240 = vmatpush1.msra.mxu0 0.0
        %1241 = vmatprep.subr.mxu0 0.0
        %1242 = vmatpush1.msra.mxu0 0.0
        %1243 = vmatprep.subr.mxu0 0.0
        %1244 = vmatpush1.msra.mxu0 0.0
        %1245 = vmatprep.subr.mxu0 0.0
        %1246 = vmatpush1.msra.mxu0 0.0
        %1247 = vmatprep.mubr.f32.mxu0 0.0
        %1248 = vmatmul.mubr.f32.gmra.mrb[0].mxu0 %v1136
        %v1249 = vpop.f32.mrb[0].mxu0
        %v1250 = vadd.f32 0.0, %v1249
        %v1251 = vpop.f32.mrb[0].mxu0
        %v1252 = vadd.f32 0.0, %v1251
        %1253 = vmatprep.mubr.f32.mxu0 0.0
        %1254 = vmatmul.mubr.f32.gmra.mrb[0].mxu0 %v1139
        %v1255 = vpop.f32.mrb[0].mxu0
        %v1256 = vadd.f32 0.0, %v1255
        %v1257 = vpop.f32.mrb[0].mxu0
        %v1258 = vadd.f32 0.0, %v1257
        %1259 = vmatprep.mubr.f32.mxu0 0.0
        %1260 = vmatmul.mubr.f32.gmra.mrb[0].mxu0 %v1142
        %v1261 = vpop.f32.mrb[0].mxu0
        %v1262 = vadd.f32 0.0, %v1261
        %v1263 = vpop.f32.mrb[0].mxu0
        %v1264 = vadd.f32 0.0, %v1263
        %1265 = vmatprep.mubr.f32.mxu0 0.0
        %1266 = vmatmul.mubr.f32.gmra.mrb[0].mxu0 %v1145
        %v1267 = vpop.f32.mrb[0].mxu0
        %v1268 = vadd.f32 0.0, %v1267
        %v1269 = vpop.f32.mrb[0].mxu0
        %v1270 = vadd.f32 0.0, %v1269
        %1271 = vmatprep.mubr.f32.mxu0 0.0
        %1272 = vmatmul.mubr.f32.gmra.mrb[0].mxu0 %v1148
        %v1273 = vpop.f32.mrb[0].mxu0
        %v1274 = vadd.f32 0.0, %v1273
        %v1275 = vpop.f32.mrb[0].mxu0
        %v1276 = vadd.f32 0.0, %v1275
        %1277 = vmatprep.mubr.f32.mxu0 0.0
        %1278 = vmatmul.mubr.f32.gmra.mrb[0].mxu0 %v1151
        %v1279 = vpop.f32.mrb[0].mxu0
        %v1280 = vadd.f32 0.0, %v1279
        %v1281 = vpop.f32.mrb[0].mxu0
        %v1282 = vadd.f32 0.0, %v1281
        %1283 = vmatprep.mubr.f32.mxu0 0.0
        %1284 = vmatmul.mubr.f32.gmra.mrb[0].mxu0 %v1154
        %v1285 = vpop.f32.mrb[0].mxu0
        %v1286 = vadd.f32 0.0, %v1285
        %v1287 = vpop.f32.mrb[0].mxu0
        %v1288 = vadd.f32 0.0, %v1287
        %1289 = vmatprep.mubr.f32.mxu0 0.0
        %1290 = vmatmul.mubr.f32.gmra.mrb[0].mxu0 %v1157
        %v1291 = vpop.f32.mrb[0].mxu0
        %v1292 = vadd.f32 0.0, %v1291
        %v1293 = vpop.f32.mrb[0].mxu0
        %v1294 = vadd.f32 0.0, %v1293
        %1295 = vmatprep.mubr.f32.mxu0 0.0
        %1296 = vmatmul.mubr.f32.gmra.mrb[0].mxu0 %v1160
        %v1297 = vpop.f32.mrb[0].mxu0
        %v1298 = vadd.f32 0.0, %v1297
        %v1299 = vpop.f32.mrb[0].mxu0
        %v1300 = vadd.f32 0.0, %v1299
        %1301 = vmatprep.mubr.f32.mxu0 0.0
        %1302 = vmatmul.mubr.f32.gmra.mrb[0].mxu0 %v1163
        %v1303 = vpop.f32.mrb[0].mxu0
        %v1304 = vadd.f32 0.0, %v1303
        %v1305 = vpop.f32.mrb[0].mxu0
        %v1306 = vadd.f32 0.0, %v1305
        %1307 = vmatprep.mubr.f32.mxu0 0.0
        %1308 = vmatmul.mubr.f32.gmra.mrb[0].mxu0 %v1166
        %v1309 = vpop.f32.mrb[0].mxu0
        %v1310 = vadd.f32 0.0, %v1309
        %v1311 = vpop.f32.mrb[0].mxu0
        %v1312 = vadd.f32 0.0, %v1311
        %1313 = vmatprep.mubr.f32.mxu0 0.0
        %1314 = vmatmul.mubr.f32.gmra.mrb[0].mxu0 %v1169
        %v1315 = vpop.f32.mrb[0].mxu0
        %v1316 = vadd.f32 0.0, %v1315
        %v1317 = vpop.f32.mrb[0].mxu0
        %v1318 = vadd.f32 0.0, %v1317
        %1319 = vmatprep.mubr.f32.mxu0 0.0
        %1320 = vmatmul.mubr.f32.gmra.mrb[0].mxu0 %v1172
        %v1321 = vpop.f32.mrb[0].mxu0
        %v1322 = vadd.f32 0.0, %v1321
        %v1323 = vpop.f32.mrb[0].mxu0
        %v1324 = vadd.f32 0.0, %v1323
        %1325 = vmatprep.mubr.f32.mxu0 0.0
        %1326 = vmatmul.mubr.f32.gmra.mrb[0].mxu0 %v1175
        %v1327 = vpop.f32.mrb[0].mxu0
        %v1328 = vadd.f32 0.0, %v1327
        %v1329 = vpop.f32.mrb[0].mxu0
        %v1330 = vadd.f32 0.0, %v1329
        %1331 = vmatprep.mubr.f32.mxu0 0.0
        %1332 = vmatmul.mubr.f32.gmra.mrb[0].mxu0 %v1178
        %v1333 = vpop.f32.mrb[0].mxu0
        %v1334 = vadd.f32 0.0, %v1333
        %v1335 = vpop.f32.mrb[0].mxu0
        %v1336 = vadd.f32 0.0, %v1335
        %1337 = vmatprep.mubr.f32.mxu0 0.0
        %1338 = vmatmul.mubr.f32.gmra.mrb[0].mxu0 %v1181
        %v1339 = vpop.f32.mrb[0].mxu0
        %v1340 = vadd.f32 0.0, %v1339
        %v1341 = vpop.f32.mrb[0].mxu0
        %v1342 = vadd.f32 0.0, %v1341
        %1343 = vdwg.mxu0
        %1344 = vxpose.xlu0.b32.start [1/16] %v1088, 128
        %1345 = vxpose.xlu0.b32.cont [2/16] %v1089, 128
        %1346 = vxpose.xlu0.b32.cont [3/16] 0.0, 128
        %1347 = vxpose.xlu0.b32.cont [4/16] 0.0, 128
        %1348 = vxpose.xlu0.b32.cont [5/16] 0.0, 128
        %1349 = vxpose.xlu0.b32.cont [6/16] 0.0, 128
        %1350 = vxpose.xlu0.b32.cont [7/16] 0.0, 128
        %1351 = vxpose.xlu0.b32.cont [8/16] 0.0, 128
        %1352 = vxpose.xlu0.b32.cont [9/16] 0.0, 128
        %1353 = vxpose.xlu0.b32.cont [10/16] 0.0, 128
        %1354 = vxpose.xlu0.b32.cont [11/16] 0.0, 128
        %1355 = vxpose.xlu0.b32.cont [12/16] 0.0, 128
        %1356 = vxpose.xlu0.b32.cont [13/16] 0.0, 128
        %1357 = vxpose.xlu0.b32.cont [14/16] 0.0, 128
        %1358 = vxpose.xlu0.b32.cont [15/16] 0.0, 128
        %1359 = vxpose.xlu0.b32.end [16/16] 0.0, 128
        %v1360 = vpop.trf.xlu0
        %v1361 = vpop.trf.xlu0
        %v1362 = vpop.trf.xlu0
        %v1363 = vpop.trf.xlu0
        %v1364 = vpop.trf.xlu0
        %v1365 = vpop.trf.xlu0
        %v1366 = vpop.trf.xlu0
        %v1367 = vpop.trf.xlu0
        %v1368 = vpop.trf.xlu0
        %v1369 = vpop.trf.xlu0
        %v1370 = vpop.trf.xlu0
        %v1371 = vpop.trf.xlu0
        %v1372 = vpop.trf.xlu0
        %v1373 = vpop.trf.xlu0
        %v1374 = vpop.trf.xlu0
        %v1375 = vpop.trf.xlu0
        %v1377 = vsel %vm1134, %v1360, 0
        %v1380 = vsel %vm1134, %v1361, 0
        %v1383 = vsel %vm1134, %v1362, 0
        %v1386 = vsel %vm1134, %v1363, 0
        %v1389 = vsel %vm1134, %v1364, 0
        %v1392 = vsel %vm1134, %v1365, 0
        %v1395 = vsel %vm1134, %v1366, 0
        %v1398 = vsel %vm1134, %v1367, 0
        %v1401 = vsel %vm1134, %v1368, 0
        %v1404 = vsel %vm1134, %v1369, 0
        %v1407 = vsel %vm1134, %v1370, 0
        %v1410 = vsel %vm1134, %v1371, 0
        %v1413 = vsel %vm1134, %v1372, 0
        %v1416 = vsel %vm1134, %v1373, 0
        %v1419 = vsel %vm1134, %v1374, 0
        %v1422 = vsel %vm1134, %v1375, 0
        %1424 = vmatprep.subr.mxu0 %v1091
        %1425 = vmatpush1.msra.mxu0 %v1090
        %1426 = vmatprep.subr.mxu0 %v1093
        %1427 = vmatpush1.msra.mxu0 %v1092
        %1428 = vmatprep.subr.mxu0 0.0
        %1429 = vmatpush1.msra.mxu0 0.0
        %1430 = vmatprep.subr.mxu0 0.0
        %1431 = vmatpush1.msra.mxu0 0.0
        %1432 = vmatprep.subr.mxu0 0.0
        %1433 = vmatpush1.msra.mxu0 0.0
        %1434 = vmatprep.subr.mxu0 0.0
        %1435 = vmatpush1.msra.mxu0 0.0
        %1436 = vmatprep.subr.mxu0 0.0
        %1437 = vmatpush1.msra.mxu0 0.0
        %1438 = vmatprep.subr.mxu0 0.0
        %1439 = vmatpush1.msra.mxu0 0.0
        %1440 = vmatprep.subr.mxu0 0.0
        %1441 = vmatpush1.msra.mxu0 0.0
        %1442 = vmatprep.subr.mxu0 0.0
        %1443 = vmatpush1.msra.mxu0 0.0
        %1444 = vmatprep.subr.mxu0 0.0
        %1445 = vmatpush1.msra.mxu0 0.0
        %1446 = vmatprep.subr.mxu0 0.0
        %1447 = vmatpush1.msra.mxu0 0.0
        %1448 = vmatprep.subr.mxu0 0.0
        %1449 = vmatpush1.msra.mxu0 0.0
        %1450 = vmatprep.subr.mxu0 0.0
        %1451 = vmatpush1.msra.mxu0 0.0
        %1452 = vmatprep.subr.mxu0 0.0
        %1453 = vmatpush1.msra.mxu0 0.0
        %1454 = vmatprep.subr.mxu0 0.0
        %1455 = vmatpush1.msra.mxu0 0.0
        %1456 = vmatprep.subr.mxu0 0.0
        %1457 = vmatpush1.msra.mxu0 0.0
        %1458 = vmatprep.subr.mxu0 0.0
        %1459 = vmatpush1.msra.mxu0 0.0
        %1460 = vmatprep.subr.mxu0 0.0
        %1461 = vmatpush1.msra.mxu0 0.0
        %1462 = vmatprep.subr.mxu0 0.0
        %1463 = vmatpush1.msra.mxu0 0.0
        %1464 = vmatprep.subr.mxu0 0.0
        %1465 = vmatpush1.msra.mxu0 0.0
        %1466 = vmatprep.subr.mxu0 0.0
        %1467 = vmatpush1.msra.mxu0 0.0
        %1468 = vmatprep.subr.mxu0 0.0
        %1469 = vmatpush1.msra.mxu0 0.0
        %1470 = vmatprep.subr.mxu0 0.0
        %1471 = vmatpush1.msra.mxu0 0.0
        %1472 = vmatprep.subr.mxu0 0.0
        %1473 = vmatpush1.msra.mxu0 0.0
        %1474 = vmatprep.subr.mxu0 0.0
        %1475 = vmatpush1.msra.mxu0 0.0
        %1476 = vmatprep.subr.mxu0 0.0
        %1477 = vmatpush1.msra.mxu0 0.0
        %1478 = vmatprep.subr.mxu0 0.0
        %1479 = vmatpush1.msra.mxu0 0.0
        %1480 = vmatprep.subr.mxu0 0.0
        %1481 = vmatpush1.msra.mxu0 0.0
        %1482 = vmatprep.subr.mxu0 0.0
        %1483 = vmatpush1.msra.mxu0 0.0
        %1484 = vmatprep.subr.mxu0 0.0
        %1485 = vmatpush1.msra.mxu0 0.0
        %1486 = vmatprep.subr.mxu0 0.0
        %1487 = vmatpush1.msra.mxu0 0.0
        %1488 = vmatprep.mubr.f32.mxu0 0.0
        %1489 = vmatmul.mubr.f32.gmra.mrb[0].mxu0 %v1377
        %v1490 = vpop.f32.mrb[0].mxu0
        %v1491 = vadd.f32 %v1250, %v1490
        %v1492 = vpop.f32.mrb[0].mxu0
        %v1493 = vadd.f32 %v1252, %v1492
        %1494 = vmatprep.mubr.f32.mxu0 0.0
        %1495 = vmatmul.mubr.f32.gmra.mrb[0].mxu0 %v1380
        %v1496 = vpop.f32.mrb[0].mxu0
        %v1497 = vadd.f32 %v1256, %v1496
        %v1498 = vpop.f32.mrb[0].mxu0
        %v1499 = vadd.f32 %v1258, %v1498
        %1500 = vmatprep.mubr.f32.mxu0 0.0
        %1501 = vmatmul.mubr.f32.gmra.mrb[0].mxu0 %v1383
        %v1502 = vpop.f32.mrb[0].mxu0
        %v1503 = vadd.f32 %v1262, %v1502
        %v1504 = vpop.f32.mrb[0].mxu0
        %v1505 = vadd.f32 %v1264, %v1504
        %1506 = vmatprep.mubr.f32.mxu0 0.0
        %1507 = vmatmul.mubr.f32.gmra.mrb[0].mxu0 %v1386
        %v1508 = vpop.f32.mrb[0].mxu0
        %v1509 = vadd.f32 %v1268, %v1508
        %v1510 = vpop.f32.mrb[0].mxu0
        %v1511 = vadd.f32 %v1270, %v1510
        %1512 = vmatprep.mubr.f32.mxu0 0.0
        %1513 = vmatmul.mubr.f32.gmra.mrb[0].mxu0 %v1389
        %v1514 = vpop.f32.mrb[0].mxu0
        %v1515 = vadd.f32 %v1274, %v1514
        %v1516 = vpop.f32.mrb[0].mxu0
        %v1517 = vadd.f32 %v1276, %v1516
        %1518 = vmatprep.mubr.f32.mxu0 0.0
        %1519 = vmatmul.mubr.f32.gmra.mrb[0].mxu0 %v1392
        %v1520 = vpop.f32.mrb[0].mxu0
        %v1521 = vadd.f32 %v1280, %v1520
        %v1522 = vpop.f32.mrb[0].mxu0
        %v1523 = vadd.f32 %v1282, %v1522
        %1524 = vmatprep.mubr.f32.mxu0 0.0
        %1525 = vmatmul.mubr.f32.gmra.mrb[0].mxu0 %v1395
        %v1526 = vpop.f32.mrb[0].mxu0
        %v1527 = vadd.f32 %v1286, %v1526
        %v1528 = vpop.f32.mrb[0].mxu0
        %v1529 = vadd.f32 %v1288, %v1528
        %1530 = vmatprep.mubr.f32.mxu0 0.0
        %1531 = vmatmul.mubr.f32.gmra.mrb[0].mxu0 %v1398
        %v1532 = vpop.f32.mrb[0].mxu0
        %v1533 = vadd.f32 %v1292, %v1532
        %v1534 = vpop.f32.mrb[0].mxu0
        %v1535 = vadd.f32 %v1294, %v1534
        %1536 = vmatprep.mubr.f32.mxu0 0.0
        %1537 = vmatmul.mubr.f32.gmra.mrb[0].mxu0 %v1401
        %v1538 = vpop.f32.mrb[0].mxu0
        %v1539 = vadd.f32 %v1298, %v1538
        %v1540 = vpop.f32.mrb[0].mxu0
        %v1541 = vadd.f32 %v1300, %v1540
        %1542 = vmatprep.mubr.f32.mxu0 0.0
        %1543 = vmatmul.mubr.f32.gmra.mrb[0].mxu0 %v1404
        %v1544 = vpop.f32.mrb[0].mxu0
        %v1545 = vadd.f32 %v1304, %v1544
        %v1546 = vpop.f32.mrb[0].mxu0
        %v1547 = vadd.f32 %v1306, %v1546
        %1548 = vmatprep.mubr.f32.mxu0 0.0
        %1549 = vmatmul.mubr.f32.gmra.mrb[0].mxu0 %v1407
        %v1550 = vpop.f32.mrb[0].mxu0
        %v1551 = vadd.f32 %v1310, %v1550
        %v1552 = vpop.f32.mrb[0].mxu0
        %v1553 = vadd.f32 %v1312, %v1552
        %1554 = vmatprep.mubr.f32.mxu0 0.0
        %1555 = vmatmul.mubr.f32.gmra.mrb[0].mxu0 %v1410
        %v1556 = vpop.f32.mrb[0].mxu0
        %v1557 = vadd.f32 %v1316, %v1556
        %v1558 = vpop.f32.mrb[0].mxu0
        %v1559 = vadd.f32 %v1318, %v1558
        %1560 = vmatprep.mubr.f32.mxu0 0.0
        %1561 = vmatmul.mubr.f32.gmra.mrb[0].mxu0 %v1413
        %v1562 = vpop.f32.mrb[0].mxu0
        %v1563 = vadd.f32 %v1322, %v1562
        %v1564 = vpop.f32.mrb[0].mxu0
        %v1565 = vadd.f32 %v1324, %v1564
        %1566 = vmatprep.mubr.f32.mxu0 0.0
        %1567 = vmatmul.mubr.f32.gmra.mrb[0].mxu0 %v1416
        %v1568 = vpop.f32.mrb[0].mxu0
        %v1569 = vadd.f32 %v1328, %v1568
        %v1570 = vpop.f32.mrb[0].mxu0
        %v1571 = vadd.f32 %v1330, %v1570
        %1572 = vmatprep.mubr.f32.mxu0 0.0
        %1573 = vmatmul.mubr.f32.gmra.mrb[0].mxu0 %v1419
        %v1574 = vpop.f32.mrb[0].mxu0
        %v1575 = vadd.f32 %v1334, %v1574
        %v1576 = vpop.f32.mrb[0].mxu0
        %v1577 = vadd.f32 %v1336, %v1576
        %1578 = vmatprep.mubr.f32.mxu0 0.0
        %1579 = vmatmul.mubr.f32.gmra.mrb[0].mxu0 %v1422
        %v1580 = vpop.f32.mrb[0].mxu0
        %v1581 = vadd.f32 %v1340, %v1580
        %v1582 = vpop.f32.mrb[0].mxu0
        %v1583 = vadd.f32 %v1342, %v1582
        %1584 = vdwg.mxu0
        %v1585 = vld [vmem:[%s644] sm:$0xff]
        %v1586 = vld [vmem:[%s644 + $0x8] sm:$0xff]
        %v1587 = vld [vmem:[%s644 + $0x10] sm:$0xff]
        %v1588 = vld [vmem:[%s644 + $0x18] sm:$0xff]
        %v1589 = vld [vmem:[%s644 + $0x20] sm:$0xff]
        %v1590 = vld [vmem:[%s644 + $0x28] sm:$0xff]
        %v1591 = vld [vmem:[%s644 + $0x30] sm:$0xff]
        %v1592 = vld [vmem:[%s644 + $0x38] sm:$0xff]
        %v1593 = vld [vmem:[%s644 + $0x40] sm:$0xff]
        %v1594 = vld [vmem:[%s644 + $0x48] sm:$0xff]
        %v1595 = vld [vmem:[%s644 + $0x50] sm:$0xff]
        %v1596 = vld [vmem:[%s644 + $0x58] sm:$0xff]
        %v1597 = vld [vmem:[%s644 + $0x60] sm:$0xff]
        %v1598 = vld [vmem:[%s644 + $0x68] sm:$0xff]
        %v1599 = vld [vmem:[%s644 + $0x70] sm:$0xff]
        %v1600 = vld [vmem:[%s644 + $0x78] sm:$0xff]
        %v1601 = vpack.c.bf16 %v1586, %v1585
        %v1602 = vpack.c.bf16 %v1588, %v1587
        %v1603 = vpack.c.bf16 %v1590, %v1589
        %v1604 = vpack.c.bf16 %v1592, %v1591
        %v1605 = vpack.c.bf16 %v1594, %v1593
        %v1606 = vpack.c.bf16 %v1596, %v1595
        %v1607 = vpack.c.bf16 %v1598, %v1597
        %v1608 = vpack.c.bf16 %v1600, %v1599
        %v1609 = vld [vmem:[%s660] sm:$0xff]
        %v1611 = vunpack.c.l.b16 %v1609
        %v1612 = vunpack.c.h.b16 %v1609
        %v1613 = vpack.c.b16 %v1611, %v1611
        %v1614 = vpack.c.b16 %v1612, %v1612
        %vm1615 = vcmask 64512
        %v1617 = vsel %vm1615, %v1601, 0
        %v1620 = vsel %vm1615, %v1602, 0
        %v1623 = vsel %vm1615, %v1603, 0
        %v1626 = vsel %vm1615, %v1604, 0
        %v1629 = vsel %vm1615, %v1605, 0
        %v1632 = vsel %vm1615, %v1606, 0
        %v1635 = vsel %vm1615, %v1607, 0
        %v1638 = vsel %vm1615, %v1608, 0
        %vm1640 = vcmask 1043456
        %v1642 = vsel %vm1640, %v1613, 0
        %v1645 = vsel %vm1640, %v1614, 0
        %1647 = vmatprep.subr.bf16.mxu0 %v1645
        %1648 = vmatpush1.bf16.msra.mxu0 %v1642
        %1649 = vmatprep.subr.bf16.mxu0 0
        %1650 = vmatpush1.bf16.msra.mxu0 0
        %1651 = vmatprep.subr.bf16.mxu0 0
        %1652 = vmatpush1.bf16.msra.mxu0 0
        %1653 = vmatprep.subr.bf16.mxu0 0
        %1654 = vmatpush1.bf16.msra.mxu0 0
        %1655 = vmatprep.subr.bf16.mxu0 0
        %1656 = vmatpush1.bf16.msra.mxu0 0
        %1657 = vmatprep.subr.bf16.mxu0 0
        %1658 = vmatpush1.bf16.msra.mxu0 0
        %1659 = vmatprep.subr.bf16.mxu0 0
        %1660 = vmatpush1.bf16.msra.mxu0 0
        %1661 = vmatprep.subr.bf16.mxu0 0
        %1662 = vmatpush1.bf16.msra.mxu0 0
        %1663 = vmatprep.subr.bf16.mxu0 0
        %1664 = vmatpush1.bf16.msra.mxu0 0
        %1665 = vmatprep.subr.bf16.mxu0 0
        %1666 = vmatpush1.bf16.msra.mxu0 0
        %1667 = vmatprep.subr.bf16.mxu0 0
        %1668 = vmatpush1.bf16.msra.mxu0 0
        %1669 = vmatprep.subr.bf16.mxu0 0
        %1670 = vmatpush1.bf16.msra.mxu0 0
        %1671 = vmatprep.subr.bf16.mxu0 0
        %1672 = vmatpush1.bf16.msra.mxu0 0
        %1673 = vmatprep.subr.bf16.mxu0 0
        %1674 = vmatpush1.bf16.msra.mxu0 0
        %1675 = vmatprep.subr.bf16.mxu0 0
        %1676 = vmatpush1.bf16.msra.mxu0 0
        %1677 = vmatprep.subr.bf16.mxu0 0
        %1678 = vmatpush1.bf16.msra.mxu0 0
        %1679 = vmatprep.mubr.bf16.mxu0 0
        %1680 = vmatmul.mubr.bf16.gmra.mrb[0].mxu0 %v1617
        %v1681 = vpop.f32.mrb[0].mxu0
        %v1682 = vadd.f32 0.0, %v1681
        %v1683 = vpop.f32.mrb[0].mxu0
        %v1684 = vadd.f32 0.0, %v1683
        %v1685 = vpop.f32.mrb[0].mxu0
        %v1686 = vadd.f32 0.0, %v1685
        %v1687 = vpop.f32.mrb[0].mxu0
        %v1688 = vadd.f32 0.0, %v1687
        %1689 = vmatprep.mubr.bf16.mxu0 0
        %1690 = vmatmul.mubr.bf16.gmra.mrb[0].mxu0 %v1620
        %v1691 = vpop.f32.mrb[0].mxu0
        %v1692 = vadd.f32 0.0, %v1691
        %v1693 = vpop.f32.mrb[0].mxu0
        %v1694 = vadd.f32 0.0, %v1693
        %v1695 = vpop.f32.mrb[0].mxu0
        %v1696 = vadd.f32 0.0, %v1695
        %v1697 = vpop.f32.mrb[0].mxu0
        %v1698 = vadd.f32 0.0, %v1697
        %1699 = vmatprep.mubr.bf16.mxu0 0
        %1700 = vmatmul.mubr.bf16.gmra.mrb[0].mxu0 %v1623
        %v1701 = vpop.f32.mrb[0].mxu0
        %v1702 = vadd.f32 0.0, %v1701
        %v1703 = vpop.f32.mrb[0].mxu0
        %v1704 = vadd.f32 0.0, %v1703
        %v1705 = vpop.f32.mrb[0].mxu0
        %v1706 = vadd.f32 0.0, %v1705
        %v1707 = vpop.f32.mrb[0].mxu0
        %v1708 = vadd.f32 0.0, %v1707
        %1709 = vmatprep.mubr.bf16.mxu0 0
        %1710 = vmatmul.mubr.bf16.gmra.mrb[0].mxu0 %v1626
        %v1711 = vpop.f32.mrb[0].mxu0
        %v1712 = vadd.f32 0.0, %v1711
        %v1713 = vpop.f32.mrb[0].mxu0
        %v1714 = vadd.f32 0.0, %v1713
        %v1715 = vpop.f32.mrb[0].mxu0
        %v1716 = vadd.f32 0.0, %v1715
        %v1717 = vpop.f32.mrb[0].mxu0
        %v1718 = vadd.f32 0.0, %v1717
        %1719 = vmatprep.mubr.bf16.mxu0 0
        %1720 = vmatmul.mubr.bf16.gmra.mrb[0].mxu0 %v1629
        %v1721 = vpop.f32.mrb[0].mxu0
        %v1722 = vadd.f32 0.0, %v1721
        %v1723 = vpop.f32.mrb[0].mxu0
        %v1724 = vadd.f32 0.0, %v1723
        %v1725 = vpop.f32.mrb[0].mxu0
        %v1726 = vadd.f32 0.0, %v1725
        %v1727 = vpop.f32.mrb[0].mxu0
        %v1728 = vadd.f32 0.0, %v1727
        %1729 = vmatprep.mubr.bf16.mxu0 0
        %1730 = vmatmul.mubr.bf16.gmra.mrb[0].mxu0 %v1632
        %v1731 = vpop.f32.mrb[0].mxu0
        %v1732 = vadd.f32 0.0, %v1731
        %v1733 = vpop.f32.mrb[0].mxu0
        %v1734 = vadd.f32 0.0, %v1733
        %v1735 = vpop.f32.mrb[0].mxu0
        %v1736 = vadd.f32 0.0, %v1735
        %v1737 = vpop.f32.mrb[0].mxu0
        %v1738 = vadd.f32 0.0, %v1737
        %1739 = vmatprep.mubr.bf16.mxu0 0
        %1740 = vmatmul.mubr.bf16.gmra.mrb[0].mxu0 %v1635
        %v1741 = vpop.f32.mrb[0].mxu0
        %v1742 = vadd.f32 0.0, %v1741
        %v1743 = vpop.f32.mrb[0].mxu0
        %v1744 = vadd.f32 0.0, %v1743
        %v1745 = vpop.f32.mrb[0].mxu0
        %v1746 = vadd.f32 0.0, %v1745
        %v1747 = vpop.f32.mrb[0].mxu0
        %v1748 = vadd.f32 0.0, %v1747
        %1749 = vmatprep.mubr.bf16.mxu0 0
        %1750 = vmatmul.mubr.bf16.gmra.mrb[0].mxu0 %v1638
        %v1751 = vpop.f32.mrb[0].mxu0
        %v1752 = vadd.f32 0.0, %v1751
        %v1753 = vpop.f32.mrb[0].mxu0
        %v1754 = vadd.f32 0.0, %v1753
        %v1755 = vpop.f32.mrb[0].mxu0
        %v1756 = vadd.f32 0.0, %v1755
        %v1757 = vpop.f32.mrb[0].mxu0
        %v1758 = vadd.f32 0.0, %v1757
        %1759 = vdwg.mxu0
        %v1760 = vadd.f32 %v1491, %v1682
        %v1761 = vadd.f32 %v1493, %v1684
        %v1762 = vadd.f32 %v1497, %v1686
        %v1763 = vadd.f32 %v1499, %v1688
        %v1764 = vadd.f32 %v1503, %v1692
        %v1765 = vadd.f32 %v1505, %v1694
        %v1766 = vadd.f32 %v1509, %v1696
        %v1767 = vadd.f32 %v1511, %v1698
        %v1768 = vadd.f32 %v1515, %v1702
        %v1769 = vadd.f32 %v1517, %v1704
        %v1770 = vadd.f32 %v1521, %v1706
        %v1771 = vadd.f32 %v1523, %v1708
        %v1772 = vadd.f32 %v1527, %v1712
        %v1773 = vadd.f32 %v1529, %v1714
        %v1774 = vadd.f32 %v1533, %v1716
        %v1775 = vadd.f32 %v1535, %v1718
        %v1776 = vadd.f32 %v1539, %v1722
        %v1777 = vadd.f32 %v1541, %v1724
        %v1778 = vadd.f32 %v1545, %v1726
        %v1779 = vadd.f32 %v1547, %v1728
        %v1780 = vadd.f32 %v1551, %v1732
        %v1781 = vadd.f32 %v1553, %v1734
        %v1782 = vadd.f32 %v1557, %v1736
        %v1783 = vadd.f32 %v1559, %v1738
        %v1784 = vadd.f32 %v1563, %v1742
        %v1785 = vadd.f32 %v1565, %v1744
        %v1786 = vadd.f32 %v1569, %v1746
        %v1787 = vadd.f32 %v1571, %v1748
        %v1788 = vadd.f32 %v1575, %v1752
        %v1789 = vadd.f32 %v1577, %v1754
        %v1790 = vadd.f32 %v1581, %v1756
        %v1791 = vadd.f32 %v1583, %v1758
        %v1792 = vld [vmem:[%s664] sm:$0x3]
        %v1794 = vlaneseq
        %v1795 = vshrl.u32 %v1794, 7
        %v1796 = vsub.s32 0, %v1795
        %v1797 = vrot.slane %v1792, %v1796
        %v1798 = vlaneseq
        %v1799 = vshrl.u32 %v1798, 7
        %v1800 = vsub.s32 1, %v1799
        %v1801 = vrot.slane %v1792, %v1800
        %v1804 = vadd.f32 %v1760, %v1797
        %v1805 = vadd.f32 %v1761, %v1801
        %v1806 = vadd.f32 %v1762, %v1797
        %v1807 = vadd.f32 %v1763, %v1801
        %v1808 = vadd.f32 %v1764, %v1797
        %v1809 = vadd.f32 %v1765, %v1801
        %v1810 = vadd.f32 %v1766, %v1797
        %v1811 = vadd.f32 %v1767, %v1801
        %v1812 = vadd.f32 %v1768, %v1797
        %v1813 = vadd.f32 %v1769, %v1801
        %v1814 = vadd.f32 %v1770, %v1797
        %v1815 = vadd.f32 %v1771, %v1801
        %v1816 = vadd.f32 %v1772, %v1797
        %v1817 = vadd.f32 %v1773, %v1801
        %v1818 = vadd.f32 %v1774, %v1797
        %v1819 = vadd.f32 %v1775, %v1801
        %v1820 = vadd.f32 %v1776, %v1797
        %v1821 = vadd.f32 %v1777, %v1801
        %v1822 = vadd.f32 %v1778, %v1797
        %v1823 = vadd.f32 %v1779, %v1801
        %v1824 = vadd.f32 %v1780, %v1797
        %v1825 = vadd.f32 %v1781, %v1801
        %v1826 = vadd.f32 %v1782, %v1797
        %v1827 = vadd.f32 %v1783, %v1801
        %v1828 = vadd.f32 %v1784, %v1797
        %v1829 = vadd.f32 %v1785, %v1801
        %v1830 = vadd.f32 %v1786, %v1797
        %v1831 = vadd.f32 %v1787, %v1801
        %v1832 = vadd.f32 %v1788, %v1797
        %v1833 = vadd.f32 %v1789, %v1801
        %v1834 = vadd.f32 %v1790, %v1797
        %v1835 = vadd.f32 %v1791, %v1801
        %v1836 = vxor.u32 %v1804, 2147483648
        %v1837 = vxor.u32 %v1806, 2147483648
        %v1838 = vxor.u32 %v1808, 2147483648
        %v1839 = vxor.u32 %v1810, 2147483648
        %v1840 = vxor.u32 %v1812, 2147483648
        %v1841 = vxor.u32 %v1814, 2147483648
        %v1842 = vxor.u32 %v1816, 2147483648
        %v1843 = vxor.u32 %v1818, 2147483648
        %v1844 = vxor.u32 %v1820, 2147483648
        %v1845 = vxor.u32 %v1822, 2147483648
        %v1846 = vxor.u32 %v1824, 2147483648
        %v1847 = vxor.u32 %v1826, 2147483648
        %v1848 = vxor.u32 %v1828, 2147483648
        %v1849 = vxor.u32 %v1830, 2147483648
        %v1850 = vxor.u32 %v1832, 2147483648
        %v1851 = vxor.u32 %v1834, 2147483648
        %v1852 = vmul.f32 %v1836, 1.442695
        %v1853 = vpow.pop %v1852
        %v1854 = vmul.f32 %v1837, 1.442695
        %v1855 = vpow.pop %v1854
        %v1856 = vmul.f32 %v1838, 1.442695
        %v1857 = vpow.pop %v1856
        %v1858 = vmul.f32 %v1839, 1.442695
        %v1859 = vpow.pop %v1858
        %v1860 = vmul.f32 %v1840, 1.442695
        %v1861 = vpow.pop %v1860
        %v1862 = vmul.f32 %v1841, 1.442695
        %v1863 = vpow.pop %v1862
        %v1864 = vmul.f32 %v1842, 1.442695
        %v1865 = vpow.pop %v1864
        %v1866 = vmul.f32 %v1843, 1.442695
        %v1867 = vpow.pop %v1866
        %v1868 = vmul.f32 %v1844, 1.442695
        %v1869 = vpow.pop %v1868
        %v1870 = vmul.f32 %v1845, 1.442695
        %v1871 = vpow.pop %v1870
        %v1872 = vmul.f32 %v1846, 1.442695
        %v1873 = vpow.pop %v1872
        %v1874 = vmul.f32 %v1847, 1.442695
        %v1875 = vpow.pop %v1874
        %v1876 = vmul.f32 %v1848, 1.442695
        %v1877 = vpow.pop %v1876
        %v1878 = vmul.f32 %v1849, 1.442695
        %v1879 = vpow.pop %v1878
        %v1880 = vmul.f32 %v1850, 1.442695
        %v1881 = vpow.pop %v1880
        %v1882 = vmul.f32 %v1851, 1.442695
        %v1883 = vpow.pop %v1882
        %v1884 = vadd.f32 %v1853, 1.0
        %v1885 = vadd.f32 %v1855, 1.0
        %v1886 = vadd.f32 %v1857, 1.0
        %v1887 = vadd.f32 %v1859, 1.0
        %v1888 = vadd.f32 %v1861, 1.0
        %v1889 = vadd.f32 %v1863, 1.0
        %v1890 = vadd.f32 %v1865, 1.0
        %v1891 = vadd.f32 %v1867, 1.0
        %v1892 = vadd.f32 %v1869, 1.0
        %v1893 = vadd.f32 %v1871, 1.0
        %v1894 = vadd.f32 %v1873, 1.0
        %v1895 = vadd.f32 %v1875, 1.0
        %v1896 = vadd.f32 %v1877, 1.0
        %v1897 = vadd.f32 %v1879, 1.0
        %v1898 = vadd.f32 %v1881, 1.0
        %v1899 = vadd.f32 %v1883, 1.0
        %v1900 = vrcp.pop %v1884
        %v1901 = vmul.f32 1.0, %v1900
        %v1902 = vrcp.pop %v1885
        %v1903 = vmul.f32 1.0, %v1902
        %v1904 = vrcp.pop %v1886
        %v1905 = vmul.f32 1.0, %v1904
        %v1906 = vrcp.pop %v1887
        %v1907 = vmul.f32 1.0, %v1906
        %v1908 = vrcp.pop %v1888
        %v1909 = vmul.f32 1.0, %v1908
        %v1910 = vrcp.pop %v1889
        %v1911 = vmul.f32 1.0, %v1910
        %v1912 = vrcp.pop %v1890
        %v1913 = vmul.f32 1.0, %v1912
        %v1914 = vrcp.pop %v1891
        %v1915 = vmul.f32 1.0, %v1914
        %v1916 = vrcp.pop %v1892
        %v1917 = vmul.f32 1.0, %v1916
        %v1918 = vrcp.pop %v1893
        %v1919 = vmul.f32 1.0, %v1918
        %v1920 = vrcp.pop %v1894
        %v1921 = vmul.f32 1.0, %v1920
        %v1922 = vrcp.pop %v1895
        %v1923 = vmul.f32 1.0, %v1922
        %v1924 = vrcp.pop %v1896
        %v1925 = vmul.f32 1.0, %v1924
        %v1926 = vrcp.pop %v1897
        %v1927 = vmul.f32 1.0, %v1926
        %v1928 = vrcp.pop %v1898
        %v1929 = vmul.f32 1.0, %v1928
        %v1930 = vrcp.pop %v1899
        %v1931 = vmul.f32 1.0, %v1930
        %vm1932 = vcmp.gt.f32.partialorder %v1805, 20.0
        %vm1933 = vcmp.gt.f32.partialorder %v1807, 20.0
        %vm1934 = vcmp.gt.f32.partialorder %v1809, 20.0
        %vm1935 = vcmp.gt.f32.partialorder %v1811, 20.0
        %vm1936 = vcmp.gt.f32.partialorder %v1813, 20.0
        %vm1937 = vcmp.gt.f32.partialorder %v1815, 20.0
        %vm1938 = vcmp.gt.f32.partialorder %v1817, 20.0
        %vm1939 = vcmp.gt.f32.partialorder %v1819, 20.0
        %vm1940 = vcmp.gt.f32.partialorder %v1821, 20.0
        %vm1941 = vcmp.gt.f32.partialorder %v1823, 20.0
        %vm1942 = vcmp.gt.f32.partialorder %v1825, 20.0
        %vm1943 = vcmp.gt.f32.partialorder %v1827, 20.0
        %vm1944 = vcmp.gt.f32.partialorder %v1829, 20.0
        %vm1945 = vcmp.gt.f32.partialorder %v1831, 20.0
        %vm1946 = vcmp.gt.f32.partialorder %v1833, 20.0
        %vm1947 = vcmp.gt.f32.partialorder %v1835, 20.0
        %v1948 = vmin.f32 %v1805, 20.0
        %v1949 = vmin.f32 %v1807, 20.0
        %v1950 = vmin.f32 %v1809, 20.0
        %v1951 = vmin.f32 %v1811, 20.0
        %v1952 = vmin.f32 %v1813, 20.0
        %v1953 = vmin.f32 %v1815, 20.0
        %v1954 = vmin.f32 %v1817, 20.0
        %v1955 = vmin.f32 %v1819, 20.0
        %v1956 = vmin.f32 %v1821, 20.0
        %v1957 = vmin.f32 %v1823, 20.0
        %v1958 = vmin.f32 %v1825, 20.0
        %v1959 = vmin.f32 %v1827, 20.0
        %v1960 = vmin.f32 %v1829, 20.0
        %v1961 = vmin.f32 %v1831, 20.0
        %v1962 = vmin.f32 %v1833, 20.0
        %v1963 = vmin.f32 %v1835, 20.0
        %v1964 = vmul.f32 %v1948, 1.442695
        %v1965 = vpow.pop %v1964
        %v1966 = vmul.f32 %v1949, 1.442695
        %v1967 = vpow.pop %v1966
        %v1968 = vmul.f32 %v1950, 1.442695
        %v1969 = vpow.pop %v1968
        %v1970 = vmul.f32 %v1951, 1.442695
        %v1971 = vpow.pop %v1970
        %v1972 = vmul.f32 %v1952, 1.442695
        %v1973 = vpow.pop %v1972
        %v1974 = vmul.f32 %v1953, 1.442695
        %v1975 = vpow.pop %v1974
        %v1976 = vmul.f32 %v1954, 1.442695
        %v1977 = vpow.pop %v1976
        %v1978 = vmul.f32 %v1955, 1.442695
        %v1979 = vpow.pop %v1978
        %v1980 = vmul.f32 %v1956, 1.442695
        %v1981 = vpow.pop %v1980
        %v1982 = vmul.f32 %v1957, 1.442695
        %v1983 = vpow.pop %v1982
        %v1984 = vmul.f32 %v1958, 1.442695
        %v1985 = vpow.pop %v1984
        %v1986 = vmul.f32 %v1959, 1.442695
        %v1987 = vpow.pop %v1986
        %v1988 = vmul.f32 %v1960, 1.442695
        %v1989 = vpow.pop %v1988
        %v1990 = vmul.f32 %v1961, 1.442695
        %v1991 = vpow.pop %v1990
        %v1992 = vmul.f32 %v1962, 1.442695
        %v1993 = vpow.pop %v1992
        %v1994 = vmul.f32 %v1963, 1.442695
        %v1995 = vpow.pop %v1994
        %v1996 = vadd.f32 %v1965, 1.0
        %v1997 = vlog2.pop %v1996
        %v1998 = vmul.f32 %v1997, 0.6931472
        %v1999 = vmul.f32 -0.5, %v1965
        %v2000 = vadd.f32 %v1999, 1.0
        %v2001 = vmul.f32 %v2000, %v1965
        %v2002 = vand.u32 2147483647, %v1965
        %vm2003 = vcmp.lt.f32.partialorder %v2002, 0.0004427343
        %v2004 = vsel %vm2003, %v2001, %v1998
        %v2005 = vadd.f32 %v1967, 1.0
        %v2006 = vlog2.pop %v2005
        %v2007 = vmul.f32 %v2006, 0.6931472
        %v2008 = vmul.f32 -0.5, %v1967
        %v2009 = vadd.f32 %v2008, 1.0
        %v2010 = vmul.f32 %v2009, %v1967
        %v2011 = vand.u32 2147483647, %v1967
        %vm2012 = vcmp.lt.f32.partialorder %v2011, 0.0004427343
        %v2013 = vsel %vm2012, %v2010, %v2007
        %v2014 = vadd.f32 %v1969, 1.0
        %v2015 = vlog2.pop %v2014
        %v2016 = vmul.f32 %v2015, 0.6931472
        %v2017 = vmul.f32 -0.5, %v1969
        %v2018 = vadd.f32 %v2017, 1.0
        %v2019 = vmul.f32 %v2018, %v1969
        %v2020 = vand.u32 2147483647, %v1969
        %vm2021 = vcmp.lt.f32.partialorder %v2020, 0.0004427343
        %v2022 = vsel %vm2021, %v2019, %v2016
        %v2023 = vadd.f32 %v1971, 1.0
        %v2024 = vlog2.pop %v2023
        %v2025 = vmul.f32 %v2024, 0.6931472
        %v2026 = vmul.f32 -0.5, %v1971
        %v2027 = vadd.f32 %v2026, 1.0
        %v2028 = vmul.f32 %v2027, %v1971
        %v2029 = vand.u32 2147483647, %v1971
        %vm2030 = vcmp.lt.f32.partialorder %v2029, 0.0004427343
        %v2031 = vsel %vm2030, %v2028, %v2025
        %v2032 = vadd.f32 %v1973, 1.0
        %v2033 = vlog2.pop %v2032
        %v2034 = vmul.f32 %v2033, 0.6931472
        %v2035 = vmul.f32 -0.5, %v1973
        %v2036 = vadd.f32 %v2035, 1.0
        %v2037 = vmul.f32 %v2036, %v1973
        %v2038 = vand.u32 2147483647, %v1973
        %vm2039 = vcmp.lt.f32.partialorder %v2038, 0.0004427343
        %v2040 = vsel %vm2039, %v2037, %v2034
        %v2041 = vadd.f32 %v1975, 1.0
        %v2042 = vlog2.pop %v2041
        %v2043 = vmul.f32 %v2042, 0.6931472
        %v2044 = vmul.f32 -0.5, %v1975
        %v2045 = vadd.f32 %v2044, 1.0
        %v2046 = vmul.f32 %v2045, %v1975
        %v2047 = vand.u32 2147483647, %v1975
        %vm2048 = vcmp.lt.f32.partialorder %v2047, 0.0004427343
        %v2049 = vsel %vm2048, %v2046, %v2043
        %v2050 = vadd.f32 %v1977, 1.0
        %v2051 = vlog2.pop %v2050
        %v2052 = vmul.f32 %v2051, 0.6931472
        %v2053 = vmul.f32 -0.5, %v1977
        %v2054 = vadd.f32 %v2053, 1.0
        %v2055 = vmul.f32 %v2054, %v1977
        %v2056 = vand.u32 2147483647, %v1977
        %vm2057 = vcmp.lt.f32.partialorder %v2056, 0.0004427343
        %v2058 = vsel %vm2057, %v2055, %v2052
        %v2059 = vadd.f32 %v1979, 1.0
        %v2060 = vlog2.pop %v2059
        %v2061 = vmul.f32 %v2060, 0.6931472
        %v2062 = vmul.f32 -0.5, %v1979
        %v2063 = vadd.f32 %v2062, 1.0
        %v2064 = vmul.f32 %v2063, %v1979
        %v2065 = vand.u32 2147483647, %v1979
        %vm2066 = vcmp.lt.f32.partialorder %v2065, 0.0004427343
        %v2067 = vsel %vm2066, %v2064, %v2061
        %v2068 = vadd.f32 %v1981, 1.0
        %v2069 = vlog2.pop %v2068
        %v2070 = vmul.f32 %v2069, 0.6931472
        %v2071 = vmul.f32 -0.5, %v1981
        %v2072 = vadd.f32 %v2071, 1.0
        %v2073 = vmul.f32 %v2072, %v1981
        %v2074 = vand.u32 2147483647, %v1981
        %vm2075 = vcmp.lt.f32.partialorder %v2074, 0.0004427343
        %v2076 = vsel %vm2075, %v2073, %v2070
        %v2077 = vadd.f32 %v1983, 1.0
        %v2078 = vlog2.pop %v2077
        %v2079 = vmul.f32 %v2078, 0.6931472
        %v2080 = vmul.f32 -0.5, %v1983
        %v2081 = vadd.f32 %v2080, 1.0
        %v2082 = vmul.f32 %v2081, %v1983
        %v2083 = vand.u32 2147483647, %v1983
        %vm2084 = vcmp.lt.f32.partialorder %v2083, 0.0004427343
        %v2085 = vsel %vm2084, %v2082, %v2079
        %v2086 = vadd.f32 %v1985, 1.0
        %v2087 = vlog2.pop %v2086
        %v2088 = vmul.f32 %v2087, 0.6931472
        %v2089 = vmul.f32 -0.5, %v1985
        %v2090 = vadd.f32 %v2089, 1.0
        %v2091 = vmul.f32 %v2090, %v1985
        %v2092 = vand.u32 2147483647, %v1985
        %vm2093 = vcmp.lt.f32.partialorder %v2092, 0.0004427343
        %v2094 = vsel %vm2093, %v2091, %v2088
        %v2095 = vadd.f32 %v1987, 1.0
        %v2096 = vlog2.pop %v2095
        %v2097 = vmul.f32 %v2096, 0.6931472
        %v2098 = vmul.f32 -0.5, %v1987
        %v2099 = vadd.f32 %v2098, 1.0
        %v2100 = vmul.f32 %v2099, %v1987
        %v2101 = vand.u32 2147483647, %v1987
        %vm2102 = vcmp.lt.f32.partialorder %v2101, 0.0004427343
        %v2103 = vsel %vm2102, %v2100, %v2097
        %v2104 = vadd.f32 %v1989, 1.0
        %v2105 = vlog2.pop %v2104
        %v2106 = vmul.f32 %v2105, 0.6931472
        %v2107 = vmul.f32 -0.5, %v1989
        %v2108 = vadd.f32 %v2107, 1.0
        %v2109 = vmul.f32 %v2108, %v1989
        %v2110 = vand.u32 2147483647, %v1989
        %vm2111 = vcmp.lt.f32.partialorder %v2110, 0.0004427343
        %v2112 = vsel %vm2111, %v2109, %v2106
        %v2113 = vadd.f32 %v1991, 1.0
        %v2114 = vlog2.pop %v2113
        %v2115 = vmul.f32 %v2114, 0.6931472
        %v2116 = vmul.f32 -0.5, %v1991
        %v2117 = vadd.f32 %v2116, 1.0
        %v2118 = vmul.f32 %v2117, %v1991
        %v2119 = vand.u32 2147483647, %v1991
        %vm2120 = vcmp.lt.f32.partialorder %v2119, 0.0004427343
        %v2121 = vsel %vm2120, %v2118, %v2115
        %v2122 = vadd.f32 %v1993, 1.0
        %v2123 = vlog2.pop %v2122
        %v2124 = vmul.f32 %v2123, 0.6931472
        %v2125 = vmul.f32 -0.5, %v1993
        %v2126 = vadd.f32 %v2125, 1.0
        %v2127 = vmul.f32 %v2126, %v1993
        %v2128 = vand.u32 2147483647, %v1993
        %vm2129 = vcmp.lt.f32.partialorder %v2128, 0.0004427343
        %v2130 = vsel %vm2129, %v2127, %v2124
        %v2131 = vadd.f32 %v1995, 1.0
        %v2132 = vlog2.pop %v2131
        %v2133 = vmul.f32 %v2132, 0.6931472
        %v2134 = vmul.f32 -0.5, %v1995
        %v2135 = vadd.f32 %v2134, 1.0
        %v2136 = vmul.f32 %v2135, %v1995
        %v2137 = vand.u32 2147483647, %v1995
        %vm2138 = vcmp.lt.f32.partialorder %v2137, 0.0004427343
        %v2139 = vsel %vm2138, %v2136, %v2133
        %v2140 = vsel %vm1932, %v1805, %v2004
        %v2141 = vsel %vm1933, %v1807, %v2013
        %v2142 = vsel %vm1934, %v1809, %v2022
        %v2143 = vsel %vm1935, %v1811, %v2031
        %v2144 = vsel %vm1936, %v1813, %v2040
        %v2145 = vsel %vm1937, %v1815, %v2049
        %v2146 = vsel %vm1938, %v1817, %v2058
        %v2147 = vsel %vm1939, %v1819, %v2067
        %v2148 = vsel %vm1940, %v1821, %v2076
        %v2149 = vsel %vm1941, %v1823, %v2085
        %v2150 = vsel %vm1942, %v1825, %v2094
        %v2151 = vsel %vm1943, %v1827, %v2103
        %v2152 = vsel %vm1944, %v1829, %v2112
        %v2153 = vsel %vm1945, %v1831, %v2121
        %v2154 = vsel %vm1946, %v1833, %v2130
        %v2155 = vsel %vm1947, %v1835, %v2139
        %v2156 = vmul.f32 %v1901, %v2140
        %v2157 = vmul.f32 %v1903, %v2141
        %v2158 = vmul.f32 %v1905, %v2142
        %v2159 = vmul.f32 %v1907, %v2143
        %v2160 = vmul.f32 %v1909, %v2144
        %v2161 = vmul.f32 %v1911, %v2145
        %v2162 = vmul.f32 %v1913, %v2146
        %v2163 = vmul.f32 %v1915, %v2147
        %v2164 = vmul.f32 %v1917, %v2148
        %v2165 = vmul.f32 %v1919, %v2149
        %v2166 = vmul.f32 %v1921, %v2150
        %v2167 = vmul.f32 %v1923, %v2151
        %v2168 = vmul.f32 %v1925, %v2152
        %v2169 = vmul.f32 %v1927, %v2153
        %v2170 = vmul.f32 %v1929, %v2154
        %v2171 = vmul.f32 %v1931, %v2155
        %v2172 = vld [vmem:[#allocation3] sm:$0xff]
        %v2173 = vld [vmem:[#allocation3 + $0x8] sm:$0xff]
        %v2174 = vpack.c.bf16 %v1097, %v1096
        %v2175 = vpack.c.bf16 %v2157, %v2156
        %v2176 = vpack.c.bf16 %v2159, %v2158
        %v2177 = vpack.c.bf16 %v2161, %v2160
        %v2178 = vpack.c.bf16 %v2163, %v2162
        %v2179 = vpack.c.bf16 %v2165, %v2164
        %v2180 = vpack.c.bf16 %v2167, %v2166
        %v2181 = vpack.c.bf16 %v2169, %v2168
        %v2182 = vpack.c.bf16 %v2171, %v2170
        %2183 = vmatprep.subr.bf16.mxu0 0
        %2184 = vmatpush1.bf16.msra.mxu0 %v2175
        %2185 = vmatprep.subr.bf16.mxu0 0
        %2186 = vmatpush1.bf16.msra.mxu0 %v2176
        %2187 = vmatprep.subr.bf16.mxu0 0
        %2188 = vmatpush1.bf16.msra.mxu0 %v2177
        %2189 = vmatprep.subr.bf16.mxu0 0
        %2190 = vmatpush1.bf16.msra.mxu0 %v2178
        %2191 = vmatprep.subr.bf16.mxu0 0
        %2192 = vmatpush1.bf16.msra.mxu0 %v2179
        %2193 = vmatprep.subr.bf16.mxu0 0
        %2194 = vmatpush1.bf16.msra.mxu0 %v2180
        %2195 = vmatprep.subr.bf16.mxu0 0
        %2196 = vmatpush1.bf16.msra.mxu0 %v2181
        %2197 = vmatprep.subr.bf16.mxu0 0
        %2198 = vmatpush1.bf16.msra.mxu0 %v2182
        %2199 = vmatprep.subr.bf16.mxu0 0
        %2200 = vmatpush1.bf16.msra.mxu0 0
        %2201 = vmatprep.subr.bf16.mxu0 0
        %2202 = vmatpush1.bf16.msra.mxu0 0
        %2203 = vmatprep.subr.bf16.mxu0 0
        %2204 = vmatpush1.bf16.msra.mxu0 0
        %2205 = vmatprep.subr.bf16.mxu0 0
        %2206 = vmatpush1.bf16.msra.mxu0 0
        %2207 = vmatprep.subr.bf16.mxu0 0
        %2208 = vmatpush1.bf16.msra.mxu0 0
        %2209 = vmatprep.subr.bf16.mxu0 0
        %2210 = vmatpush1.bf16.msra.mxu0 0
        %2211 = vmatprep.subr.bf16.mxu0 0
        %2212 = vmatpush1.bf16.msra.mxu0 0
        %2213 = vmatprep.subr.bf16.mxu0 0
        %2214 = vmatpush1.bf16.msra.mxu0 0
        %2215 = vmatprep.mubr.bf16.mxu0 0
        %2216 = vmatmul.mubr.bf16.gmra.mrb[0].mxu0 %v2174
        %v2217 = vpop.f32.mrb[0].mxu0
        %v2218 = vadd.f32 0.0, %v2217
        %v2219 = vpop.f32.mrb[0].mxu0
        %v2220 = vpop.f32.mrb[0].mxu0
        %v2221 = vadd.f32 0.0, %v2220
        %v2222 = vpop.f32.mrb[0].mxu0
        %2223 = vdwg.mxu0
        %v2224 = vadd.f32 %v2172, %v2218
        %v2225 = vadd.f32 %v2173, %v2221
        %2226 = vst [vmem:[#allocation3] sm:$0xff] %v2224
        %2227 = vst [vmem:[#allocation3 + $0x8] sm:$0xff] %v2225
        // Predicated region
        $region97: #{cgcnn_forward.1} parent=87 // pred_check
          %p2228 = pneg %p673
        $region98: #{cgcnn_forward.1} parent=87 // pred_check_branch
          %2230 = sbr.rel (%p2228) target = $region100
        $region99: #{cgcnn_forward.1} parent=87 // pred_region
          %v2231 = vld [vmem:[#allocation3] sm:$0xff]
          %v2232 = vld [vmem:[#allocation3 + $0x8] sm:$0xff]
          %v2233 = vld [vmem:[%s667] sm:$0x1]
          %v2235 = vlaneseq
          %v2236 = vshrl.u32 %v2235, 7
          %v2237 = vsub.s32 0, %v2236
          %v2238 = vrot.slane %v2233, %v2237
          %v2240 = vmul.f32 %v2231, %v2238
          %v2241 = vmul.f32 %v2232, %v2238
          %v2242 = vld [vmem:[%s670] sm:$0x1]
          %v2244 = vlaneseq
          %v2245 = vshrl.u32 %v2244, 7
          %v2246 = vsub.s32 0, %v2245
          %v2247 = vrot.slane %v2242, %v2246
          %v2249 = vadd.f32 %v2240, %v2247
          %v2250 = vadd.f32 %v2241, %v2247
          %v2251 = vld [vmem:[#allocation2] sm:$0xff]
          %v2252 = vld [vmem:[#allocation2 + $0x8] sm:$0xff]
          %v2253 = vadd.f32 %v2249, %v2251
          %v2254 = vadd.f32 %v2250, %v2252
          %vm2255 = vcmp.gt.f32.partialorder %v2253, 20.0
          %vm2256 = vcmp.gt.f32.partialorder %v2254, 20.0
          %v2257 = vmin.f32 %v2253, 20.0
          %v2258 = vmin.f32 %v2254, 20.0
          %v2259 = vmul.f32 %v2257, 1.442695
          %v2260 = vpow.pop %v2259
          %v2261 = vmul.f32 %v2258, 1.442695
          %v2262 = vpow.pop %v2261
          %v2263 = vadd.f32 %v2260, 1.0
          %v2264 = vlog2.pop %v2263
          %v2265 = vmul.f32 %v2264, 0.6931472
          %v2266 = vmul.f32 -0.5, %v2260
          %v2267 = vadd.f32 %v2266, 1.0
          %v2268 = vmul.f32 %v2267, %v2260
          %v2269 = vand.u32 2147483647, %v2260
          %vm2270 = vcmp.lt.f32.partialorder %v2269, 0.0004427343
          %v2271 = vsel %vm2270, %v2268, %v2265
          %v2272 = vadd.f32 %v2262, 1.0
          %v2273 = vlog2.pop %v2272
          %v2274 = vmul.f32 %v2273, 0.6931472
          %v2275 = vmul.f32 -0.5, %v2262
          %v2276 = vadd.f32 %v2275, 1.0
          %v2277 = vmul.f32 %v2276, %v2262
          %v2278 = vand.u32 2147483647, %v2262
          %vm2279 = vcmp.lt.f32.partialorder %v2278, 0.0004427343
          %v2280 = vsel %vm2279, %v2277, %v2274
          %v2281 = vsel %vm2255, %v2253, %v2271
          %v2282 = vsel %vm2256, %v2254, %v2280
          %vm2283 = vcmp.lt.s32.totalorder %v1072, 16
          %vm2284 = vcmp.lt.s32.totalorder %v1073, 16
          %v2285 = vlaneseq
          %v2286 = vand.u32 %v2285, 127
          %vm2287 = vcmp.lt.s32.totalorder %v2286, 32
          %v2288 = vsel %vm2283, 1, 0
          %v2289 = vsel %vm2284, 1, 0
          %vm2290 = vcmp.eq.s32.totalorder %v2288, 1
          %vm2291 = vcmp.eq.s32.totalorder %v2289, 1
          %v2292 = vsel %vm2287, 1, 0
          %vm2293 = vcmp.eq.s32.totalorder %v2292, 1
          %vm2294 = vmand %vm2290, %vm2293
          %vm2295 = vmand %vm2291, %vm2293
          %v2296 = vsel %vm2294, 1, 0
          %v2297 = vsel %vm2295, 1, 0
          %v2298 = vcvt.s32.f32 %v2296
          %v2299 = vcvt.s32.f32 %v2297
          %v2300 = vmul.f32 %v2281, %v2298
          %v2301 = vmul.f32 %v2282, %v2299
          %2302 = vst [vmem:[#allocation2] sm:$0xff] %v2300
          %2303 = vst [vmem:[#allocation2 + $0x8] sm:$0xff] %v2301
        $region100: #{cgcnn_forward.1} parent=87 // pred_fallthru
          _
        %p2304 = scmp.eq.s32.totalorder %s33, 1
        %p2305 = pnand %p2304, %p673
        %p2306 = pneg %p2305
        // Predicated region
        $region101: #{cgcnn_forward.1} parent=87 // pred_check
          _
        $region102: #{cgcnn_forward.1} parent=87 // pred_check_branch
          %2308 = sbr.rel (%p2305) target = $region104
        $region103: #{cgcnn_forward.1} parent=87 // pred_region
          %v2309 = vld [vmem:[#allocation2] sm:$0xff]
          %v2310 = vld [vmem:[#allocation2 + $0x8] sm:$0xff]
          %v2311 = vadd.f32 %v2309, %v2310
          %v2312 = vrot.slane %v2311, 4
          %v2313 = vadd.f32 %v2311, %v2312
          %v2314 = vrot.slane %v2313, 2
          %v2315 = vadd.f32 %v2313, %v2314
          %v2316 = vrot.slane %v2315, 1
          %v2317 = vadd.f32 %v2315, %v2316
          %v2318 = vmul.f32 %v2317, 0.0625
          %v2319 = vpack.c.bf16 %v2318, %v2318
          %v2320 = vld [vmem:[%s11] sm:$0xf]
          %v2321 = vld [vmem:[%s11 + $0x4] sm:$0xf]
          %v2322 = vld [vmem:[%s11 + $0x8] sm:$0xf]
          %v2323 = vld [vmem:[%s11 + $0xc] sm:$0xf]
          %v2324 = vld [vmem:[%s11 + $0x10] sm:$0xf]
          %v2325 = vld [vmem:[%s11 + $0x14] sm:$0xf]
          %v2326 = vld [vmem:[%s11 + $0x18] sm:$0xf]
          %v2327 = vld [vmem:[%s11 + $0x1c] sm:$0xf]
          %v2328 = vld [vmem:[%s11 + $0x20] sm:$0xf]
          %v2329 = vld [vmem:[%s11 + $0x24] sm:$0xf]
          %v2330 = vld [vmem:[%s11 + $0x28] sm:$0xf]
          %v2331 = vld [vmem:[%s11 + $0x2c] sm:$0xf]
          %v2332 = vld [vmem:[%s11 + $0x30] sm:$0xf]
          %v2333 = vld [vmem:[%s11 + $0x34] sm:$0xf]
          %v2334 = vld [vmem:[%s11 + $0x38] sm:$0xf]
          %v2335 = vld [vmem:[%s11 + $0x3c] sm:$0xf]
          %v2336 = vld [vmem:[%s12] sm:$0x1]
          %v2353 = vunpack.c.l.b16 %v2320
          %v2354 = vunpack.c.l.b16 %v2321
          %v2355 = vunpack.c.l.b16 %v2322
          %v2356 = vunpack.c.l.b16 %v2323
          %v2357 = vunpack.c.l.b16 %v2324
          %v2358 = vunpack.c.l.b16 %v2325
          %v2359 = vunpack.c.l.b16 %v2326
          %v2360 = vunpack.c.l.b16 %v2327
          %v2361 = vunpack.c.l.b16 %v2328
          %v2362 = vunpack.c.l.b16 %v2329
          %v2363 = vunpack.c.l.b16 %v2330
          %v2364 = vunpack.c.l.b16 %v2331
          %v2365 = vunpack.c.l.b16 %v2332
          %v2366 = vunpack.c.l.b16 %v2333
          %v2367 = vunpack.c.l.b16 %v2334
          %v2368 = vunpack.c.l.b16 %v2335
          %v2369 = vpack.c.b16 %v2354, %v2353
          %v2370 = vpack.c.b16 %v2356, %v2355
          %v2371 = vpack.c.b16 %v2358, %v2357
          %v2372 = vpack.c.b16 %v2360, %v2359
          %v2373 = vpack.c.b16 %v2362, %v2361
          %v2374 = vpack.c.b16 %v2364, %v2363
          %v2375 = vpack.c.b16 %v2366, %v2365
          %v2376 = vpack.c.b16 %v2368, %v2367
          %2385 = vmatprep.subr.bf16.mxu0 0
          %2386 = vmatpush1.bf16.msra.mxu0 %v2369
          %2387 = vmatprep.subr.bf16.mxu0 0
          %2388 = vmatpush1.bf16.msra.mxu0 %v2370
          %2389 = vmatprep.subr.bf16.mxu0 0
          %2390 = vmatpush1.bf16.msra.mxu0 %v2371
          %2391 = vmatprep.subr.bf16.mxu0 0
          %2392 = vmatpush1.bf16.msra.mxu0 %v2372
          %2393 = vmatprep.subr.bf16.mxu0 0
          %2394 = vmatpush1.bf16.msra.mxu0 %v2373
          %2395 = vmatprep.subr.bf16.mxu0 0
          %2396 = vmatpush1.bf16.msra.mxu0 %v2374
          %2397 = vmatprep.subr.bf16.mxu0 0
          %2398 = vmatpush1.bf16.msra.mxu0 %v2375
          %2399 = vmatprep.subr.bf16.mxu0 0
          %2400 = vmatpush1.bf16.msra.mxu0 %v2376
          %2401 = vmatprep.subr.bf16.mxu0 0
          %2402 = vmatpush1.bf16.msra.mxu0 0
          %2403 = vmatprep.subr.bf16.mxu0 0
          %2404 = vmatpush1.bf16.msra.mxu0 0
          %2405 = vmatprep.subr.bf16.mxu0 0
          %2406 = vmatpush1.bf16.msra.mxu0 0
          %2407 = vmatprep.subr.bf16.mxu0 0
          %2408 = vmatpush1.bf16.msra.mxu0 0
          %2409 = vmatprep.subr.bf16.mxu0 0
          %2410 = vmatpush1.bf16.msra.mxu0 0
          %2411 = vmatprep.subr.bf16.mxu0 0
          %2412 = vmatpush1.bf16.msra.mxu0 0
          %2413 = vmatprep.subr.bf16.mxu0 0
          %2414 = vmatpush1.bf16.msra.mxu0 0
          %2415 = vmatprep.subr.bf16.mxu0 0
          %2416 = vmatpush1.bf16.msra.mxu0 0
          %2417 = vmatprep.mubr.bf16.mxu0 0
          %2418 = vmatmul.mubr.bf16.gmra.mrb[0].mxu0 %v2319
          %v2419 = vpop.f32.mrb[0].mxu0
          %v2420 = vadd.f32 %v2336, %v2419
          %v2421 = vpop.f32.mrb[0].mxu0
          %v2422 = vpop.f32.mrb[0].mxu0
          %v2423 = vpop.f32.mrb[0].mxu0
          %2424 = vdwg.mxu0
          %v2425 = vxor.u32 %v2420, 2147483648
          %v2426 = vmul.f32 %v2425, 1.442695
          %v2427 = vpow.pop %v2426
          %v2428 = vadd.f32 %v2427, 1.0
          %v2429 = vrcp.pop %v2428
          %v2430 = vmul.f32 1.0, %v2429
          %v2431 = vmul.f32 %v2420, %v2430
          %v2432 = vpack.c.bf16 %v2431, %v2431
          %v2433 = vld [vmem:[%s13] sm:$0xf]
          %v2434 = vld [vmem:[%s13 + $0x4] sm:$0xf]
          %v2435 = vld [vmem:[%s13 + $0x8] sm:$0xf]
          %v2436 = vld [vmem:[%s13 + $0xc] sm:$0xf]
          %v2437 = vld [vmem:[%s13 + $0x10] sm:$0xf]
          %v2438 = vld [vmem:[%s13 + $0x14] sm:$0xf]
          %v2439 = vld [vmem:[%s13 + $0x18] sm:$0xf]
          %v2440 = vld [vmem:[%s13 + $0x1c] sm:$0xf]
          %v2441 = vld [vmem:[%s13 + $0x20] sm:$0xf]
          %v2442 = vld [vmem:[%s13 + $0x24] sm:$0xf]
          %v2443 = vld [vmem:[%s13 + $0x28] sm:$0xf]
          %v2444 = vld [vmem:[%s13 + $0x2c] sm:$0xf]
          %v2445 = vld [vmem:[%s13 + $0x30] sm:$0xf]
          %v2446 = vld [vmem:[%s13 + $0x34] sm:$0xf]
          %v2447 = vld [vmem:[%s13 + $0x38] sm:$0xf]
          %v2448 = vld [vmem:[%s13 + $0x3c] sm:$0xf]
          %v2449 = vld [vmem:[%s14] sm:$0x1]
          %v2466 = vunpack.c.l.b16 %v2433
          %v2467 = vunpack.c.l.b16 %v2434
          %v2468 = vunpack.c.l.b16 %v2435
          %v2469 = vunpack.c.l.b16 %v2436
          %v2470 = vunpack.c.l.b16 %v2437
          %v2471 = vunpack.c.l.b16 %v2438
          %v2472 = vunpack.c.l.b16 %v2439
          %v2473 = vunpack.c.l.b16 %v2440
          %v2474 = vunpack.c.l.b16 %v2441
          %v2475 = vunpack.c.l.b16 %v2442
          %v2476 = vunpack.c.l.b16 %v2443
          %v2477 = vunpack.c.l.b16 %v2444
          %v2478 = vunpack.c.l.b16 %v2445
          %v2479 = vunpack.c.l.b16 %v2446
          %v2480 = vunpack.c.l.b16 %v2447
          %v2481 = vunpack.c.l.b16 %v2448
          %v2482 = vpack.c.b16 %v2467, %v2466
          %v2483 = vpack.c.b16 %v2469, %v2468
          %v2484 = vpack.c.b16 %v2471, %v2470
          %v2485 = vpack.c.b16 %v2473, %v2472
          %v2486 = vpack.c.b16 %v2475, %v2474
          %v2487 = vpack.c.b16 %v2477, %v2476
          %v2488 = vpack.c.b16 %v2479, %v2478
          %v2489 = vpack.c.b16 %v2481, %v2480
          %2498 = vmatprep.subr.bf16.mxu0 0
          %2499 = vmatpush1.bf16.msra.mxu0 %v2482
          %2500 = vmatprep.subr.bf16.mxu0 0
          %2501 = vmatpush1.bf16.msra.mxu0 %v2483
          %2502 = vmatprep.subr.bf16.mxu0 0
          %2503 = vmatpush1.bf16.msra.mxu0 %v2484
          %2504 = vmatprep.subr.bf16.mxu0 0
          %2505 = vmatpush1.bf16.msra.mxu0 %v2485
          %2506 = vmatprep.subr.bf16.mxu0 0
          %2507 = vmatpush1.bf16.msra.mxu0 %v2486
          %2508 = vmatprep.subr.bf16.mxu0 0
          %2509 = vmatpush1.bf16.msra.mxu0 %v2487
          %2510 = vmatprep.subr.bf16.mxu0 0
          %2511 = vmatpush1.bf16.msra.mxu0 %v2488
          %2512 = vmatprep.subr.bf16.mxu0 0
          %2513 = vmatpush1.bf16.msra.mxu0 %v2489
          %2514 = vmatprep.subr.bf16.mxu0 0
          %2515 = vmatpush1.bf16.msra.mxu0 0
          %2516 = vmatprep.subr.bf16.mxu0 0
          %2517 = vmatpush1.bf16.msra.mxu0 0
          %2518 = vmatprep.subr.bf16.mxu0 0
          %2519 = vmatpush1.bf16.msra.mxu0 0
          %2520 = vmatprep.subr.bf16.mxu0 0
          %2521 = vmatpush1.bf16.msra.mxu0 0
          %2522 = vmatprep.subr.bf16.mxu0 0
          %2523 = vmatpush1.bf16.msra.mxu0 0
          %2524 = vmatprep.subr.bf16.mxu0 0
          %2525 = vmatpush1.bf16.msra.mxu0 0
          %2526 = vmatprep.subr.bf16.mxu0 0
          %2527 = vmatpush1.bf16.msra.mxu0 0
          %2528 = vmatprep.subr.bf16.mxu0 0
          %2529 = vmatpush1.bf16.msra.mxu0 0
          %2530 = vmatprep.mubr.bf16.mxu0 0
          %2531 = vmatmul.mubr.bf16.gmra.mrb[0].mxu0 %v2432
          %v2532 = vpop.f32.mrb[0].mxu0
          %v2533 = vadd.f32 %v2449, %v2532
          %v2534 = vpop.f32.mrb[0].mxu0
          %v2535 = vpop.f32.mrb[0].mxu0
          %v2536 = vpop.f32.mrb[0].mxu0
          %2537 = vdwg.mxu0
          %v2538 = vxor.u32 %v2533, 2147483648
          %v2539 = vmul.f32 %v2538, 1.442695
          %v2540 = vpow.pop %v2539
          %v2541 = vadd.f32 %v2540, 1.0
          %v2542 = vrcp.pop %v2541
          %v2543 = vmul.f32 1.0, %v2542
          %v2544 = vmul.f32 %v2533, %v2543
          %v2545 = vpack.c.bf16 %v2544, %v2544
          %v2546 = vld [vmem:[%s15] sm:$0xf]
          %v2547 = vld [vmem:[%s15 + $0x4] sm:$0xf]
          %v2548 = vld [vmem:[%s15 + $0x8] sm:$0xf]
          %v2549 = vld [vmem:[%s15 + $0xc] sm:$0xf]
          %v2550 = vld [vmem:[%s15 + $0x10] sm:$0xf]
          %v2551 = vld [vmem:[%s15 + $0x14] sm:$0xf]
          %v2552 = vld [vmem:[%s15 + $0x18] sm:$0xf]
          %v2553 = vld [vmem:[%s15 + $0x1c] sm:$0xf]
          %v2554 = vld [vmem:[%s15 + $0x20] sm:$0xf]
          %v2555 = vld [vmem:[%s15 + $0x24] sm:$0xf]
          %v2556 = vld [vmem:[%s15 + $0x28] sm:$0xf]
          %v2557 = vld [vmem:[%s15 + $0x2c] sm:$0xf]
          %v2558 = vld [vmem:[%s15 + $0x30] sm:$0xf]
          %v2559 = vld [vmem:[%s15 + $0x34] sm:$0xf]
          %v2560 = vld [vmem:[%s15 + $0x38] sm:$0xf]
          %v2561 = vld [vmem:[%s15 + $0x3c] sm:$0xf]
          %v2562 = vld [vmem:[%s16] sm:$0x1]
          %v2579 = vunpack.c.l.b16 %v2546
          %v2580 = vunpack.c.l.b16 %v2547
          %v2581 = vunpack.c.l.b16 %v2548
          %v2582 = vunpack.c.l.b16 %v2549
          %v2583 = vunpack.c.l.b16 %v2550
          %v2584 = vunpack.c.l.b16 %v2551
          %v2585 = vunpack.c.l.b16 %v2552
          %v2586 = vunpack.c.l.b16 %v2553
          %v2587 = vunpack.c.l.b16 %v2554
          %v2588 = vunpack.c.l.b16 %v2555
          %v2589 = vunpack.c.l.b16 %v2556
          %v2590 = vunpack.c.l.b16 %v2557
          %v2591 = vunpack.c.l.b16 %v2558
          %v2592 = vunpack.c.l.b16 %v2559
          %v2593 = vunpack.c.l.b16 %v2560
          %v2594 = vunpack.c.l.b16 %v2561
          %v2595 = vpack.c.b16 %v2580, %v2579
          %v2596 = vpack.c.b16 %v2582, %v2581
          %v2597 = vpack.c.b16 %v2584, %v2583
          %v2598 = vpack.c.b16 %v2586, %v2585
          %v2599 = vpack.c.b16 %v2588, %v2587
          %v2600 = vpack.c.b16 %v2590, %v2589
          %v2601 = vpack.c.b16 %v2592, %v2591
          %v2602 = vpack.c.b16 %v2594, %v2593
          %2611 = vmatprep.subr.bf16.mxu0 0
          %2612 = vmatpush1.bf16.msra.mxu0 %v2595
          %2613 = vmatprep.subr.bf16.mxu0 0
          %2614 = vmatpush1.bf16.msra.mxu0 %v2596
          %2615 = vmatprep.subr.bf16.mxu0 0
          %2616 = vmatpush1.bf16.msra.mxu0 %v2597
          %2617 = vmatprep.subr.bf16.mxu0 0
          %2618 = vmatpush1.bf16.msra.mxu0 %v2598
          %2619 = vmatprep.subr.bf16.mxu0 0
          %2620 = vmatpush1.bf16.msra.mxu0 %v2599
          %2621 = vmatprep.subr.bf16.mxu0 0
          %2622 = vmatpush1.bf16.msra.mxu0 %v2600
          %2623 = vmatprep.subr.bf16.mxu0 0
          %2624 = vmatpush1.bf16.msra.mxu0 %v2601
          %2625 = vmatprep.subr.bf16.mxu0 0
          %2626 = vmatpush1.bf16.msra.mxu0 %v2602
          %2627 = vmatprep.subr.bf16.mxu0 0
          %2628 = vmatpush1.bf16.msra.mxu0 0
          %2629 = vmatprep.subr.bf16.mxu0 0
          %2630 = vmatpush1.bf16.msra.mxu0 0
          %2631 = vmatprep.subr.bf16.mxu0 0
          %2632 = vmatpush1.bf16.msra.mxu0 0
          %2633 = vmatprep.subr.bf16.mxu0 0
          %2634 = vmatpush1.bf16.msra.mxu0 0
          %2635 = vmatprep.subr.bf16.mxu0 0
          %2636 = vmatpush1.bf16.msra.mxu0 0
          %2637 = vmatprep.subr.bf16.mxu0 0
          %2638 = vmatpush1.bf16.msra.mxu0 0
          %2639 = vmatprep.subr.bf16.mxu0 0
          %2640 = vmatpush1.bf16.msra.mxu0 0
          %2641 = vmatprep.subr.bf16.mxu0 0
          %2642 = vmatpush1.bf16.msra.mxu0 0
          %2643 = vmatprep.mubr.bf16.mxu0 0
          %2644 = vmatmul.mubr.bf16.gmra.mrb[0].mxu0 %v2545
          %v2645 = vpop.f32.mrb[0].mxu0
          %v2646 = vadd.f32 %v2562, %v2645
          %v2647 = vpop.f32.mrb[0].mxu0
          %v2648 = vpop.f32.mrb[0].mxu0
          %v2649 = vpop.f32.mrb[0].mxu0
          %2650 = vdwg.mxu0
          %2651 = vst [vmem:[#allocation6] sm:$0x1] %v2646
        $region104: #{cgcnn_forward.1} parent=87 // pred_fallthru
          _
        // Predicated region
        $region105: #{cgcnn_forward.1} parent=87 // pred_check
          %p2652 = pneg %p451
        $region106: #{cgcnn_forward.1} parent=87 // pred_check_branch
          %2654 = sbr.rel (%p2652) target = $region108
        $region107: #{cgcnn_forward.1} parent=87 // pred_region
          %s2656 = ssub.s32 16, 16
          %2657 = vsyncadd [#allocation7], %s2656
          %s2659 = sshll.u32 [#allocation6], 4
          %s2660 = int_to_ptr.vmem [resolvable:$true] %s2659
          %2662 = dma.vmem_to_hbm [thread:$0]  %s2660, 16, %s17, [#allocation7]
        $region108: #{cgcnn_forward.1} parent=87 // pred_fallthru
          _
        // Predicated region
        $region109: #{cgcnn_forward.1} parent=87 // pred_check
          %p2663 = pneg %p451
        $region110: #{cgcnn_forward.1} parent=87 // pred_check_branch
          %2665 = sbr.rel (%p2663) target = $region112
        $region111: #{cgcnn_forward.1} parent=87 // pred_region
          %2666 = dma.done [#allocation7], 16
        $region112: #{cgcnn_forward.1} parent=87 // pred_fallthru
          _
      $region88: #{cgcnn_forward.1} parent=5 // pred_fallthru
        _
      %p2667 = scmp.le.s32.totalorder 2, %s24
      // Predicated region
      $region113: #{cgcnn_forward.1} parent=5 // pred_check
        %p2668 = pneg %p2667
      $region114: #{cgcnn_forward.1} parent=5 // pred_check_branch
        %2670 = sbr.rel (%p2668) target = $region116
      $region115: #{cgcnn_forward.1} parent=5 // pred_region
        %s2671 = ssub.s32 %s24, 2
      $region116: #{cgcnn_forward.1} parent=5 // pred_fallthru
        _
    $region6: #{cgcnn_forward.1} parent=1 // loop_footer
      %s28 = sadd.s32 1, %s24
    $region7: #{cgcnn_forward.1} parent=1 // loop_footer_branch
      %23 = sbr.rel target = $region3
    $region8: #{cgcnn_forward.1} parent=1 // loop_exit
      _
    %2672 = vsyncpa [#allocation7], 1
    %s2673 = scalar_lea.sflag [#allocation7], 1
    %2674 = vsyncpa %s2673, 1

</llo_original>
